<compile_context>
chip_gen: v7x
topology: tpu7x:2x2x1
jax: 0.10.0
libtpu: 0.0.40
codegen_flags: <defaults>
</compile_context>

<pallas_src>
import jax
import jax.numpy as jnp
from jax import lax
from jax.experimental import pallas as pl
from jax.experimental.pallas import tpu as pltpu

EPS = 1e-5  # PyTorch InstanceNorm2d default


def _round_up(a, b):
    return (a + b - 1) // b * b


def _physical_vmem_bytes():
    """Per-core VMEM capacity; conservative 64 MiB (v7x) fallback."""
    try:
        info = pltpu.get_tpu_info()
        cap = getattr(info, "vmem_capacity_bytes", None)
        if cap:
            return int(cap)
    except Exception:
        pass
    return 64 * 1024 * 1024


def _vmem_estimate(H, W, C, compute_dtype, *, use_im2col, lane_dense,
                   buffered_weights):
    """Rough per-core VMEM footprint in bytes (incl. lane/sublane padding)."""
    cdt = jnp.dtype(compute_dtype).itemsize
    lanes = _round_up(C, 128)
    wp = _round_up(W, 8)
    hwp = _round_up(H * W, 8)
    in_block = 2 * H * wp * lanes * 4                        # f32, double-buffered
    if lane_dense:
        out_block = 2 * _round_up(H * W * C // 128, 8) * 128 * 4
    else:
        out_block = 2 * H * wp * lanes * 4
    wbufs = 1 if buffered_weights else 2
    weights = 2 * wbufs * _round_up(9 * C, 8) * lanes * cdt
    xpad = (H + 2) * _round_up(W + 2, 8) * lanes * cdt
    col = hwp * _round_up(9 * C, 128) * cdt if use_im2col else 0
    return in_block + out_block + weights + xpad + col


def _make_resblock_kernel(H, W, C, compute_dtype, *, use_im2col, lane_dense):
    HW = H * W

    def conv_in(w_ref, xpad_ref, col_ref, relu):
        """zero-pad(1) -> 3x3 conv (bias elided: cancels under IN) ->
        InstanceNorm2d(affine=False) -> optional ReLU.
        Caller has already written the interior of xpad_ref; returns (HW, C) f32."""
        if use_im2col:
            # One MXU matmul per conv: build the (HW, 9C) im2col buffer in VMEM.
            # Column block t = dy*3+dx matches w.reshape(9C, C) of HWIO weights.
            for dy in range(3):
                for dx in range(3):
                    t = dy * 3 + dx
                    col_ref[:, t * C:(t + 1) * C] = (
                        xpad_ref[dy:dy + H, dx:dx + W, :].reshape(HW, C))
            acc = jnp.dot(col_ref[...], w_ref[...],
                          preferred_element_type=jnp.float32)
        else:
            # VMEM-lean path (v7x fit): 9 accumulating matmuls, no im2col scratch.
            acc = jnp.zeros((HW, C), jnp.float32)
            for dy in range(3):
                for dx in range(3):
                    t = dy * 3 + dx
                    tap = xpad_ref[dy:dy + H, dx:dx + W, :].reshape(HW, C)
                    acc = acc + jnp.dot(tap, w_ref[t * C:(t + 1) * C, :],
                                        preferred_element_type=jnp.float32)

        # InstanceNorm2d(affine=False): per-channel stats over the spatial axis.
        # One-pass variance in f32 (slightly looser than two-pass for huge
        # activations); rsqrt goes to the EUP slot.
        mean = jnp.mean(acc, axis=0, keepdims=True)                  # (1, C)
        mean_sq = jnp.mean(acc * acc, axis=0, keepdims=True)         # (1, C)
        var = jnp.maximum(mean_sq - mean * mean, 0.0)
        y = (acc - mean) * lax.rsqrt(var + EPS)
        if relu:
            y = jnp.maximum(y, 0.0)
        return y

    def kernel(x_ref, w1_ref, w2_ref, o_ref, xpad_ref, *maybe_col):
        col_ref = maybe_col[0] if use_im2col else None

        # Zero only the 1-pixel halo (interior is fully overwritten below).
        # Done per grid step: scratch is uninitialised and a pid==0 one-time init
        # is unsafe under the "parallel" batch axis on multi-TensorCore parts.
        zrow = jnp.zeros((1, W + 2, C), compute_dtype)
        zcol = jnp.zeros((H + 2, 1, C), compute_dtype)
        xpad_ref[0:1, :, :] = zrow
        xpad_ref[H + 1:H + 2, :, :] = zrow
        xpad_ref[:, 0:1, :] = zcol
        xpad_ref[:, W + 1:W + 2, :] = zcol

        # Block 1 (+ReLU): interior written straight from the input ref; the f32
        # input value is not kept live across both convs (re-read for residual).
        xpad_ref[1:H + 1, 1:W + 1, :] = x_ref[0].astype(compute_dtype)
        h = conv_in(w1_ref, xpad_ref, col_ref, relu=True)            # (HW, C) f32

        # Block 2 (no activation) reuses the same padded scratch.
        xpad_ref[1:H + 1, 1:W + 1, :] = h.reshape(H, W, C).astype(compute_dtype)
        y = conv_in(w2_ref, xpad_ref, col_ref, relu=False)           # (HW, C) f32

        out = y + x_ref[0].reshape(HW, C)                            # residual, f32
        if lane_dense:
            # Lane-dense repack: with C < 128 a (1,H,W,C) store uses only C of 128
            # lanes; a (HW*C/128, 128) view makes every output store unmasked.
            o_ref[...] = out.reshape(1, HW * C // 128, 128).astype(o_ref.dtype)
        else:
            o_ref[...] = out.reshape(1, H, W, C).astype(o_ref.dtype)

    return kernel


def res_block(x, params, *, compute_dtype=jnp.bfloat16):
    """ResBlock forward.

    x      : (N, H, W, C) float32 — NHWC view of PyTorch's NCHW input.
    params : {'w1','w2': (3,3,C,C) HWIO conv weights, 'b1','b2': (C,) biases}.
             Biases are accepted but unused: with InstanceNorm2d(affine=False)
             right after each conv, a per-channel constant bias cancels exactly.
    compute_dtype : dtype of the matmul operands and VMEM scratches
             (bf16 default = v6e/v7x MXU rate; f32 = bit-faithful to PyTorch).
             Accumulation, InstanceNorm and the residual add are always f32.
    """
    N, H, W, C = x.shape
    HW = H * W
    w1 = params["w1"].reshape(9 * C, C).astype(compute_dtype)    # HWIO -> (9C, C)
    w2 = params["w2"].reshape(9 * C, C).astype(compute_dtype)

    phys = _physical_vmem_bytes()
    # Lane-dense output repack only applies (and is only well-tiled as a
    # (HW*C/128, 128) view) when C is not already a multiple of 128.
    want_lane_dense = (C % 128 != 0) and ((H * W * C) % 1024 == 0)
    # im2col (one big matmul) unless its (HW, 9C) scratch blows the VMEM budget
    # (64 MiB/TC on v7x); then use 9 accumulating matmuls instead.
    use_im2col = _vmem_estimate(
        H, W, C, compute_dtype, use_im2col=True,
        lane_dense=want_lane_dense, buffered_weights=True) <= int(0.85 * phys)

    def build(lane_dense, buffered_weights):
        kernel = _make_resblock_kernel(H, W, C, compute_dtype,
                                       use_im2col=use_im2col,
                                       lane_dense=lane_dense)
        est = _vmem_estimate(H, W, C, compute_dtype, use_im2col=use_im2col,
                             lane_dense=lane_dense,
                             buffered_weights=buffered_weights)
        # Always set the scoped-VMEM limit explicitly (v5e default is 16 MiB);
        # cap at ~90% of physical per-core VMEM (64 MiB on v7x, 128 MiB v5e/v6e).
        vmem_limit = min(int(0.9 * phys), max(int(est * 1.5), 32 * 1024 * 1024))

        wkw = dict(pipeline_mode=pl.Buffered(1)) if buffered_weights else {}
        w_spec = pl.BlockSpec((9 * C, C), lambda n: (0, 0), **wkw)
        in_specs = [pl.BlockSpec((1, H, W, C), lambda n: (n, 0, 0, 0)),
                    w_spec, w_spec]
        if lane_dense:
            out_shape = jax.ShapeDtypeStruct((N, HW * C // 128, 128), jnp.float32)
            out_spec = pl.BlockSpec((1, HW * C // 128, 128), lambda n: (n, 0, 0))
        else:
            out_shape = jax.ShapeDtypeStruct((N, H, W, C), jnp.float32)
            out_spec = pl.BlockSpec((1, H, W, C), lambda n: (n, 0, 0, 0))
        scratch = [pltpu.VMEM((H + 2, W + 2, C), compute_dtype)]   # padded input
        if use_im2col:
            scratch.append(pltpu.VMEM((HW, 9 * C), compute_dtype))  # im2col buffer
        return pl.pallas_call(
            kernel,
            out_shape=out_shape,
            grid=(N,),                      # batch axis -> both TCs on v7x (N > 1)
            in_specs=in_specs,
            out_specs=out_spec,
            scratch_shapes=scratch,
            compiler_params=pltpu.CompilerParams(
                dimension_semantics=("parallel",),
                vmem_limit_bytes=int(vmem_limit)),
        )

    # Preferred config first; progressively fall back to the conservative layout
    # (already verified to run clean) if an optional feature fails to lower.
    configs = []
    for cfg in ((want_lane_dense, True), (want_lane_dense, False), (False, False)):
        if cfg not in configs:
            configs.append(cfg)
    last_err = None
    for lane_dense, buffered_weights in configs:
        try:
            out = build(lane_dense, buffered_weights)(x, w1, w2)
            return out.reshape(N, H, W, C)
        except Exception as e:      # noqa: BLE001 — fall back to next config
            last_err = e
    raise last_err


# ----------------- pure-JAX reference (with bias) for verification -----------------
def _ref_conv_block(x, w, b, relu):
    y = lax.conv_general_dilated(
        x, w, window_strides=(1, 1), padding="SAME",
        dimension_numbers=("NHWC", "HWIO", "NHWC"))
    y = y + b[None, None, None, :]
    mean = jnp.mean(y, axis=(1, 2), keepdims=True)
    var = jnp.mean((y - mean) ** 2, axis=(1, 2), keepdims=True)
    y = (y - mean) / jnp.sqrt(var + EPS)
    if relu:
        y = jnp.maximum(y, 0.0)
    return y


def _ref_res_block(x, params):
    h = _ref_conv_block(x, params["w1"], params["b1"], relu=True)
    o = _ref_conv_block(h, params["w2"], params["b2"], relu=False)
    return o + x


if __name__ == "__main__":
    # ResBlock(dim=4) on an (N=2, C=4, H=16, W=16) input (stored as NHWC here).
    N, H, W, C = 2, 16, 16, 4
    key = jax.random.PRNGKey(0)
    kx, kw1, kb1, kw2, kb2 = jax.random.split(key, 5)

    x = jax.random.normal(kx, (N, H, W, C), dtype=jnp.float32)
    fan_in = C * 3 * 3
    scale = 1.0 / jnp.sqrt(jnp.float32(fan_in))
    params = {
        "w1": jax.random.uniform(kw1, (3, 3, C, C), jnp.float32, -scale, scale),
        "b1": jax.random.uniform(kb1, (C,), jnp.float32, -scale, scale),
        "w2": jax.random.uniform(kw2, (3, 3, C, C), jnp.float32, -scale, scale),
        "b2": jax.random.uniform(kb2, (C,), jnp.float32, -scale, scale),
    }

    ref = jax.block_until_ready(_ref_res_block(x, params))

    # f32 matmul path: tight tolerance vs. the biased f32 reference (also confirms
    # the conv-bias elision under InstanceNorm is exact).
    out_f32 = jax.block_until_ready(res_block(x, params, compute_dtype=jnp.float32))
    assert out_f32.shape == (N, H, W, C)
    err_f32 = float(jnp.max(jnp.abs(out_f32 - ref)))
    assert jnp.allclose(out_f32, ref, atol=1e-4, rtol=1e-4), err_f32

    # Default path: bf16 matmul operands / scratches with f32 accumulation
    # (v6e / v7x MXU rate); looser tolerance.
    out_bf16 = jax.block_until_ready(res_block(x, params))
    assert out_bf16.shape == (N, H, W, C)
    err_bf16 = float(jnp.max(jnp.abs(out_bf16 - ref)))
    assert jnp.allclose(out_bf16, ref, atol=1e-1, rtol=1e-1), err_bf16

    print("KERNEL_OK")
</pallas_src>

<mosaic_0001>
module attributes {stable_mosaic.version = 11 : i64} {
  func.func @kernel(%arg0: i32, %arg1: memref<1x16x16x4xf32, #tpu.memory_space<vmem>>, %arg2: memref<36x4xf32, #tpu.memory_space<vmem>>, %arg3: memref<36x4xf32, #tpu.memory_space<vmem>>, %arg4: memref<1x8x128xf32, #tpu.memory_space<vmem>>, %arg5: memref<18x18x4xf32, #tpu.memory_space<vmem>>, %arg6: memref<256x36xf32, #tpu.memory_space<vmem>>) attributes {dimension_semantics = [#tpu.dimension_semantics<parallel>], iteration_bounds = array<i64: 2>, scalar_prefetch = 0 : i64, scratch_operands = 2 : i64, tpu.core_type = #tpu.core_type<tc>, window_params = [{transform_indices = @transform_0, window_bounds = array<i64: 1, 16, 16, 4>}, {pipeline_mode = #tpu.pipeline_mode<synchronous>, transform_indices = @transform_1, window_bounds = array<i64: 36, 4>}, {pipeline_mode = #tpu.pipeline_mode<synchronous>, transform_indices = @transform_2, window_bounds = array<i64: 36, 4>}, {transform_indices = @transform_3, window_bounds = array<i64: 1, 8, 128>}]} {
    %cst = arith.constant 0.000000e+00 : f32
    %0 = vector.broadcast %cst : f32 to vector<1x18x4xf32>
    %cst_0 = arith.constant 0.000000e+00 : f32
    %1 = vector.broadcast %cst_0 : f32 to vector<18x1x4xf32>
    %c0 = arith.constant 0 : index
    %c0_1 = arith.constant 0 : index
    %c0_2 = arith.constant 0 : index
    %2 = vector.load %arg5[%c0, %c0_1, %c0_2] : memref<18x18x4xf32, #tpu.memory_space<vmem>>, vector<1x18x4xf32>
    tpu.vector_store %arg5[%c0, %c0_1, %c0_2], %0 {strides = array<i32>} : memref<18x18x4xf32, #tpu.memory_space<vmem>>, vector<1x18x4xf32>,
    %c17 = arith.constant 17 : index
    %c0_3 = arith.constant 0 : index
    %c0_4 = arith.constant 0 : index
    %3 = vector.load %arg5[%c17, %c0_3, %c0_4] : memref<18x18x4xf32, #tpu.memory_space<vmem>>, vector<1x18x4xf32>
    tpu.vector_store %arg5[%c17, %c0_3, %c0_4], %0 {strides = array<i32>} : memref<18x18x4xf32, #tpu.memory_space<vmem>>, vector<1x18x4xf32>,
    %c0_5 = arith.constant 0 : index
    %c0_6 = arith.constant 0 : index
    %c0_7 = arith.constant 0 : index
    %4 = vector.load %arg5[%c0_5, %c0_6, %c0_7] : memref<18x18x4xf32, #tpu.memory_space<vmem>>, vector<18x1x4xf32>
    tpu.vector_store %arg5[%c0_5, %c0_6, %c0_7], %1 {strides = array<i32>} : memref<18x18x4xf32, #tpu.memory_space<vmem>>, vector<18x1x4xf32>,
    %c0_8 = arith.constant 0 : index
    %c17_9 = arith.constant 17 : index
    %c0_10 = arith.constant 0 : index
    %5 = vector.load %arg5[%c0_8, %c17_9, %c0_10] : memref<18x18x4xf32, #tpu.memory_space<vmem>>, vector<18x1x4xf32>
    tpu.vector_store %arg5[%c0_8, %c17_9, %c0_10], %1 {strides = array<i32>} : memref<18x18x4xf32, #tpu.memory_space<vmem>>, vector<18x1x4xf32>,
    %c0_11 = arith.constant 0 : index
    %c0_12 = arith.constant 0 : index
    %c0_13 = arith.constant 0 : index
    %c0_14 = arith.constant 0 : index
    %6 = vector.load %arg1[%c0_11, %c0_12, %c0_13, %c0_14] : memref<1x16x16x4xf32, #tpu.memory_space<vmem>>, vector<1x16x16x4xf32>
    %7 = vector.shape_cast %6 : vector<1x16x16x4xf32> to vector<16x16x4xf32>
    %c1 = arith.constant 1 : index
    %c1_15 = arith.constant 1 : index
    %c0_16 = arith.constant 0 : index
    %8 = vector.load %arg5[%c1, %c1_15, %c0_16] : memref<18x18x4xf32, #tpu.memory_space<vmem>>, vector<16x16x4xf32>
    tpu.vector_store %arg5[%c1, %c1_15, %c0_16], %7 {strides = array<i32>} : memref<18x18x4xf32, #tpu.memory_space<vmem>>, vector<16x16x4xf32>,
    %c0_17 = arith.constant 0 : index
    %c0_18 = arith.constant 0 : index
    %c0_19 = arith.constant 0 : index
    %9 = vector.load %arg5[%c0_17, %c0_18, %c0_19] : memref<18x18x4xf32, #tpu.memory_space<vmem>>, vector<16x16x4xf32>
    %10 = vector.shape_cast %9 : vector<16x16x4xf32> to vector<256x4xf32>
    %c0_20 = arith.constant 0 : index
    %c0_21 = arith.constant 0 : index
    %11 = vector.load %arg6[%c0_20, %c0_21] : memref<256x36xf32, #tpu.memory_space<vmem>>, vector<256x4xf32>
    tpu.vector_store %arg6[%c0_20, %c0_21], %10 {strides = array<i32>} : memref<256x36xf32, #tpu.memory_space<vmem>>, vector<256x4xf32>,
    %c0_22 = arith.constant 0 : index
    %c1_23 = arith.constant 1 : index
    %c0_24 = arith.constant 0 : index
    %12 = vector.load %arg5[%c0_22, %c1_23, %c0_24] : memref<18x18x4xf32, #tpu.memory_space<vmem>>, vector<16x16x4xf32>
    %13 = vector.shape_cast %12 : vector<16x16x4xf32> to vector<256x4xf32>
    %c0_25 = arith.constant 0 : index
    %c4 = arith.constant 4 : index
    %14 = vector.load %arg6[%c0_25, %c4] : memref<256x36xf32, #tpu.memory_space<vmem>>, vector<256x4xf32>
    tpu.vector_store %arg6[%c0_25, %c4], %13 {strides = array<i32>} : memref<256x36xf32, #tpu.memory_space<vmem>>, vector<256x4xf32>,
    %c0_26 = arith.constant 0 : index
    %c2 = arith.constant 2 : index
    %c0_27 = arith.constant 0 : index
    %15 = vector.load %arg5[%c0_26, %c2, %c0_27] : memref<18x18x4xf32, #tpu.memory_space<vmem>>, vector<16x16x4xf32>
    %16 = vector.shape_cast %15 : vector<16x16x4xf32> to vector<256x4xf32>
    %c0_28 = arith.constant 0 : index
    %c8 = arith.constant 8 : index
    %17 = vector.load %arg6[%c0_28, %c8] : memref<256x36xf32, #tpu.memory_space<vmem>>, vector<256x4xf32>
    tpu.vector_store %arg6[%c0_28, %c8], %16 {strides = array<i32>} : memref<256x36xf32, #tpu.memory_space<vmem>>, vector<256x4xf32>,
    %c1_29 = arith.constant 1 : index
    %c0_30 = arith.constant 0 : index
    %c0_31 = arith.constant 0 : index
    %18 = vector.load %arg5[%c1_29, %c0_30, %c0_31] : memref<18x18x4xf32, #tpu.memory_space<vmem>>, vector<16x16x4xf32>
    %19 = vector.shape_cast %18 : vector<16x16x4xf32> to vector<256x4xf32>
    %c0_32 = arith.constant 0 : index
    %c12 = arith.constant 12 : index
    %20 = vector.load %arg6[%c0_32, %c12] : memref<256x36xf32, #tpu.memory_space<vmem>>, vector<256x4xf32>
    tpu.vector_store %arg6[%c0_32, %c12], %19 {strides = array<i32>} : memref<256x36xf32, #tpu.memory_space<vmem>>, vector<256x4xf32>,
    %c1_33 = arith.constant 1 : index
    %c1_34 = arith.constant 1 : index
    %c0_35 = arith.constant 0 : index
    %21 = vector.load %arg5[%c1_33, %c1_34, %c0_35] : memref<18x18x4xf32, #tpu.memory_space<vmem>>, vector<16x16x4xf32>
    %22 = vector.shape_cast %21 : vector<16x16x4xf32> to vector<256x4xf32>
    %c0_36 = arith.constant 0 : index
    %c16 = arith.constant 16 : index
    %23 = vector.load %arg6[%c0_36, %c16] : memref<256x36xf32, #tpu.memory_space<vmem>>, vector<256x4xf32>
    tpu.vector_store %arg6[%c0_36, %c16], %22 {strides = array<i32>} : memref<256x36xf32, #tpu.memory_space<vmem>>, vector<256x4xf32>,
    %c1_37 = arith.constant 1 : index
    %c2_38 = arith.constant 2 : index
    %c0_39 = arith.constant 0 : index
    %24 = vector.load %arg5[%c1_37, %c2_38, %c0_39] : memref<18x18x4xf32, #tpu.memory_space<vmem>>, vector<16x16x4xf32>
    %25 = vector.shape_cast %24 : vector<16x16x4xf32> to vector<256x4xf32>
    %c0_40 = arith.constant 0 : index
    %c20 = arith.constant 20 : index
    %26 = vector.load %arg6[%c0_40, %c20] : memref<256x36xf32, #tpu.memory_space<vmem>>, vector<256x4xf32>
    tpu.vector_store %arg6[%c0_40, %c20], %25 {strides = array<i32>} : memref<256x36xf32, #tpu.memory_space<vmem>>, vector<256x4xf32>,
    %c2_41 = arith.constant 2 : index
    %c0_42 = arith.constant 0 : index
    %c0_43 = arith.constant 0 : index
    %27 = vector.load %arg5[%c2_41, %c0_42, %c0_43] : memref<18x18x4xf32, #tpu.memory_space<vmem>>, vector<16x16x4xf32>
    %28 = vector.shape_cast %27 : vector<16x16x4xf32> to vector<256x4xf32>
    %c0_44 = arith.constant 0 : index
    %c24 = arith.constant 24 : index
    %29 = vector.load %arg6[%c0_44, %c24] : memref<256x36xf32, #tpu.memory_space<vmem>>, vector<256x4xf32>
    tpu.vector_store %arg6[%c0_44, %c24], %28 {strides = array<i32>} : memref<256x36xf32, #tpu.memory_space<vmem>>, vector<256x4xf32>,
    %c2_45 = arith.constant 2 : index
    %c1_46 = arith.constant 1 : index
    %c0_47 = arith.constant 0 : index
    %30 = vector.load %arg5[%c2_45, %c1_46, %c0_47] : memref<18x18x4xf32, #tpu.memory_space<vmem>>, vector<16x16x4xf32>
    %31 = vector.shape_cast %30 : vector<16x16x4xf32> to vector<256x4xf32>
    %c0_48 = arith.constant 0 : index
    %c28 = arith.constant 28 : index
    %32 = vector.load %arg6[%c0_48, %c28] : memref<256x36xf32, #tpu.memory_space<vmem>>, vector<256x4xf32>
    tpu.vector_store %arg6[%c0_48, %c28], %31 {strides = array<i32>} : memref<256x36xf32, #tpu.memory_space<vmem>>, vector<256x4xf32>,
    %c2_49 = arith.constant 2 : index
    %c2_50 = arith.constant 2 : index
    %c0_51 = arith.constant 0 : index
    %33 = vector.load %arg5[%c2_49, %c2_50, %c0_51] : memref<18x18x4xf32, #tpu.memory_space<vmem>>, vector<16x16x4xf32>
    %34 = vector.shape_cast %33 : vector<16x16x4xf32> to vector<256x4xf32>
    %c0_52 = arith.constant 0 : index
    %c32 = arith.constant 32 : index
    %35 = vector.load %arg6[%c0_52, %c32] : memref<256x36xf32, #tpu.memory_space<vmem>>, vector<256x4xf32>
    tpu.vector_store %arg6[%c0_52, %c32], %34 {strides = array<i32>} : memref<256x36xf32, #tpu.memory_space<vmem>>, vector<256x4xf32>,
    %c0_53 = arith.constant 0 : index
    %c0_54 = arith.constant 0 : index
    %36 = vector.load %arg6[%c0_53, %c0_54] : memref<256x36xf32, #tpu.memory_space<vmem>>, vector<256x36xf32>
    %c0_55 = arith.constant 0 : index
    %c0_56 = arith.constant 0 : index
    %37 = vector.load %arg2[%c0_55, %c0_56] : memref<36x4xf32, #tpu.memory_space<vmem>>, vector<36x4xf32>
    %cst_57 = arith.constant dense<0.000000e+00> : vector<256x4xf32>
    %38 = tpu.matmul %36, %37, %cst_57 {dimension_numbers = #tpu.dot_dimension_numbers<[1], [0], [0], [1], [0, 0, 1, 1], [], []>} : vector<256x36xf32>, vector<36x4xf32>, vector<256x4xf32> -> vector<256x4xf32>
    %cst_58 = arith.constant dense<0.000000e+00> : vector<4xf32>
    %39 = vector.multi_reduction <add>, %38, %cst_58 [0] : vector<256x4xf32> to vector<4xf32>
    %40 = vector.shape_cast %39 : vector<4xf32> to vector<1x4xf32>
    %cst_59 = arith.constant 2.560000e+02 : f32
    %41 = vector.broadcast %cst_59 : f32 to vector<1x4xf32>
    %42 = arith.divf %40, %41 : vector<1x4xf32>
    %43 = arith.mulf %38, %38 : vector<256x4xf32>
    %cst_60 = arith.constant dense<0.000000e+00> : vector<4xf32>
    %44 = vector.multi_reduction <add>, %43, %cst_60 [0] : vector<256x4xf32> to vector<4xf32>
    %45 = vector.shape_cast %44 : vector<4xf32> to vector<1x4xf32>
    %cst_61 = arith.constant 2.560000e+02 : f32
    %46 = vector.broadcast %cst_61 : f32 to vector<1x4xf32>
    %47 = arith.divf %45, %46 : vector<1x4xf32>
    %48 = arith.mulf %42, %42 : vector<1x4xf32>
    %49 = arith.subf %47, %48 : vector<1x4xf32>
    %cst_62 = arith.constant 0.000000e+00 : f32
    %50 = vector.broadcast %cst_62 : f32 to vector<1x4xf32>
    %51 = arith.maximumf %49, %50 : vector<1x4xf32>
    %52 = vector.broadcast %42 : vector<1x4xf32> to vector<256x4xf32>
    %53 = arith.subf %38, %52 : vector<256x4xf32>
    %cst_63 = arith.constant 9.99999974E-6 : f32
    %54 = vector.broadcast %cst_63 : f32 to vector<1x4xf32>
    %55 = arith.addf %51, %54 : vector<1x4xf32>
    %56 = math.rsqrt %55 : vector<1x4xf32>
    %57 = vector.broadcast %56 : vector<1x4xf32> to vector<256x4xf32>
    %58 = arith.mulf %53, %57 : vector<256x4xf32>
    %cst_64 = arith.constant 0.000000e+00 : f32
    %59 = vector.broadcast %cst_64 : f32 to vector<256x4xf32>
    %60 = arith.maximumf %58, %59 : vector<256x4xf32>
    %61 = vector.shape_cast %60 : vector<256x4xf32> to vector<16x16x4xf32>
    %c1_65 = arith.constant 1 : index
    %c1_66 = arith.constant 1 : index
    %c0_67 = arith.constant 0 : index
    %62 = vector.load %arg5[%c1_65, %c1_66, %c0_67] : memref<18x18x4xf32, #tpu.memory_space<vmem>>, vector<16x16x4xf32>
    tpu.vector_store %arg5[%c1_65, %c1_66, %c0_67], %61 {strides = array<i32>} : memref<18x18x4xf32, #tpu.memory_space<vmem>>, vector<16x16x4xf32>,
    %c0_68 = arith.constant 0 : index
    %c0_69 = arith.constant 0 : index
    %c0_70 = arith.constant 0 : index
    %63 = vector.load %arg5[%c0_68, %c0_69, %c0_70] : memref<18x18x4xf32, #tpu.memory_space<vmem>>, vector<16x16x4xf32>
    %64 = vector.shape_cast %63 : vector<16x16x4xf32> to vector<256x4xf32>
    %c0_71 = arith.constant 0 : index
    %c0_72 = arith.constant 0 : index
    %65 = vector.load %arg6[%c0_71, %c0_72] : memref<256x36xf32, #tpu.memory_space<vmem>>, vector<256x4xf32>
    tpu.vector_store %arg6[%c0_71, %c0_72], %64 {strides = array<i32>} : memref<256x36xf32, #tpu.memory_space<vmem>>, vector<256x4xf32>,
    %c0_73 = arith.constant 0 : index
    %c1_74 = arith.constant 1 : index
    %c0_75 = arith.constant 0 : index
    %66 = vector.load %arg5[%c0_73, %c1_74, %c0_75] : memref<18x18x4xf32, #tpu.memory_space<vmem>>, vector<16x16x4xf32>
    %67 = vector.shape_cast %66 : vector<16x16x4xf32> to vector<256x4xf32>
    %c0_76 = arith.constant 0 : index
    %c4_77 = arith.constant 4 : index
    %68 = vector.load %arg6[%c0_76, %c4_77] : memref<256x36xf32, #tpu.memory_space<vmem>>, vector<256x4xf32>
    tpu.vector_store %arg6[%c0_76, %c4_77], %67 {strides = array<i32>} : memref<256x36xf32, #tpu.memory_space<vmem>>, vector<256x4xf32>,
    %c0_78 = arith.constant 0 : index
    %c2_79 = arith.constant 2 : index
    %c0_80 = arith.constant 0 : index
    %69 = vector.load %arg5[%c0_78, %c2_79, %c0_80] : memref<18x18x4xf32, #tpu.memory_space<vmem>>, vector<16x16x4xf32>
    %70 = vector.shape_cast %69 : vector<16x16x4xf32> to vector<256x4xf32>
    %c0_81 = arith.constant 0 : index
    %c8_82 = arith.constant 8 : index
    %71 = vector.load %arg6[%c0_81, %c8_82] : memref<256x36xf32, #tpu.memory_space<vmem>>, vector<256x4xf32>
    tpu.vector_store %arg6[%c0_81, %c8_82], %70 {strides = array<i32>} : memref<256x36xf32, #tpu.memory_space<vmem>>, vector<256x4xf32>,
    %c1_83 = arith.constant 1 : index
    %c0_84 = arith.constant 0 : index
    %c0_85 = arith.constant 0 : index
    %72 = vector.load %arg5[%c1_83, %c0_84, %c0_85] : memref<18x18x4xf32, #tpu.memory_space<vmem>>, vector<16x16x4xf32>
    %73 = vector.shape_cast %72 : vector<16x16x4xf32> to vector<256x4xf32>
    %c0_86 = arith.constant 0 : index
    %c12_87 = arith.constant 12 : index
    %74 = vector.load %arg6[%c0_86, %c12_87] : memref<256x36xf32, #tpu.memory_space<vmem>>, vector<256x4xf32>
    tpu.vector_store %arg6[%c0_86, %c12_87], %73 {strides = array<i32>} : memref<256x36xf32, #tpu.memory_space<vmem>>, vector<256x4xf32>,
    %c1_88 = arith.constant 1 : index
    %c1_89 = arith.constant 1 : index
    %c0_90 = arith.constant 0 : index
    %75 = vector.load %arg5[%c1_88, %c1_89, %c0_90] : memref<18x18x4xf32, #tpu.memory_space<vmem>>, vector<16x16x4xf32>
    %76 = vector.shape_cast %75 : vector<16x16x4xf32> to vector<256x4xf32>
    %c0_91 = arith.constant 0 : index
    %c16_92 = arith.constant 16 : index
    %77 = vector.load %arg6[%c0_91, %c16_92] : memref<256x36xf32, #tpu.memory_space<vmem>>, vector<256x4xf32>
    tpu.vector_store %arg6[%c0_91, %c16_92], %76 {strides = array<i32>} : memref<256x36xf32, #tpu.memory_space<vmem>>, vector<256x4xf32>,
    %c1_93 = arith.constant 1 : index
    %c2_94 = arith.constant 2 : index
    %c0_95 = arith.constant 0 : index
    %78 = vector.load %arg5[%c1_93, %c2_94, %c0_95] : memref<18x18x4xf32, #tpu.memory_space<vmem>>, vector<16x16x4xf32>
    %79 = vector.shape_cast %78 : vector<16x16x4xf32> to vector<256x4xf32>
    %c0_96 = arith.constant 0 : index
    %c20_97 = arith.constant 20 : index
    %80 = vector.load %arg6[%c0_96, %c20_97] : memref<256x36xf32, #tpu.memory_space<vmem>>, vector<256x4xf32>
    tpu.vector_store %arg6[%c0_96, %c20_97], %79 {strides = array<i32>} : memref<256x36xf32, #tpu.memory_space<vmem>>, vector<256x4xf32>,
    %c2_98 = arith.constant 2 : index
    %c0_99 = arith.constant 0 : index
    %c0_100 = arith.constant 0 : index
    %81 = vector.load %arg5[%c2_98, %c0_99, %c0_100] : memref<18x18x4xf32, #tpu.memory_space<vmem>>, vector<16x16x4xf32>
    %82 = vector.shape_cast %81 : vector<16x16x4xf32> to vector<256x4xf32>
    %c0_101 = arith.constant 0 : index
    %c24_102 = arith.constant 24 : index
    %83 = vector.load %arg6[%c0_101, %c24_102] : memref<256x36xf32, #tpu.memory_space<vmem>>, vector<256x4xf32>
    tpu.vector_store %arg6[%c0_101, %c24_102], %82 {strides = array<i32>} : memref<256x36xf32, #tpu.memory_space<vmem>>, vector<256x4xf32>,
    %c2_103 = arith.constant 2 : index
    %c1_104 = arith.constant 1 : index
    %c0_105 = arith.constant 0 : index
    %84 = vector.load %arg5[%c2_103, %c1_104, %c0_105] : memref<18x18x4xf32, #tpu.memory_space<vmem>>, vector<16x16x4xf32>
    %85 = vector.shape_cast %84 : vector<16x16x4xf32> to vector<256x4xf32>
    %c0_106 = arith.constant 0 : index
    %c28_107 = arith.constant 28 : index
    %86 = vector.load %arg6[%c0_106, %c28_107] : memref<256x36xf32, #tpu.memory_space<vmem>>, vector<256x4xf32>
    tpu.vector_store %arg6[%c0_106, %c28_107], %85 {strides = array<i32>} : memref<256x36xf32, #tpu.memory_space<vmem>>, vector<256x4xf32>,
    %c2_108 = arith.constant 2 : index
    %c2_109 = arith.constant 2 : index
    %c0_110 = arith.constant 0 : index
    %87 = vector.load %arg5[%c2_108, %c2_109, %c0_110] : memref<18x18x4xf32, #tpu.memory_space<vmem>>, vector<16x16x4xf32>
    %88 = vector.shape_cast %87 : vector<16x16x4xf32> to vector<256x4xf32>
    %c0_111 = arith.constant 0 : index
    %c32_112 = arith.constant 32 : index
    %89 = vector.load %arg6[%c0_111, %c32_112] : memref<256x36xf32, #tpu.memory_space<vmem>>, vector<256x4xf32>
    tpu.vector_store %arg6[%c0_111, %c32_112], %88 {strides = array<i32>} : memref<256x36xf32, #tpu.memory_space<vmem>>, vector<256x4xf32>,
    %c0_113 = arith.constant 0 : index
    %c0_114 = arith.constant 0 : index
    %90 = vector.load %arg6[%c0_113, %c0_114] : memref<256x36xf32, #tpu.memory_space<vmem>>, vector<256x36xf32>
    %c0_115 = arith.constant 0 : index
    %c0_116 = arith.constant 0 : index
    %91 = vector.load %arg3[%c0_115, %c0_116] : memref<36x4xf32, #tpu.memory_space<vmem>>, vector<36x4xf32>
    %cst_117 = arith.constant dense<0.000000e+00> : vector<256x4xf32>
    %92 = tpu.matmul %90, %91, %cst_117 {dimension_numbers = #tpu.dot_dimension_numbers<[1], [0], [0], [1], [0, 0, 1, 1], [], []>} : vector<256x36xf32>, vector<36x4xf32>, vector<256x4xf32> -> vector<256x4xf32>
    %cst_118 = arith.constant dense<0.000000e+00> : vector<4xf32>
    %93 = vector.multi_reduction <add>, %92, %cst_118 [0] : vector<256x4xf32> to vector<4xf32>
    %94 = vector.shape_cast %93 : vector<4xf32> to vector<1x4xf32>
    %cst_119 = arith.constant 2.560000e+02 : f32
    %95 = vector.broadcast %cst_119 : f32 to vector<1x4xf32>
    %96 = arith.divf %94, %95 : vector<1x4xf32>
    %97 = arith.mulf %92, %92 : vector<256x4xf32>
    %cst_120 = arith.constant dense<0.000000e+00> : vector<4xf32>
    %98 = vector.multi_reduction <add>, %97, %cst_120 [0] : vector<256x4xf32> to vector<4xf32>
    %99 = vector.shape_cast %98 : vector<4xf32> to vector<1x4xf32>
    %cst_121 = arith.constant 2.560000e+02 : f32
    %100 = vector.broadcast %cst_121 : f32 to vector<1x4xf32>
    %101 = arith.divf %99, %100 : vector<1x4xf32>
    %102 = arith.mulf %96, %96 : vector<1x4xf32>
    %103 = arith.subf %101, %102 : vector<1x4xf32>
    %cst_122 = arith.constant 0.000000e+00 : f32
    %104 = vector.broadcast %cst_122 : f32 to vector<1x4xf32>
    %105 = arith.maximumf %103, %104 : vector<1x4xf32>
    %106 = vector.broadcast %96 : vector<1x4xf32> to vector<256x4xf32>
    %107 = arith.subf %92, %106 : vector<256x4xf32>
    %cst_123 = arith.constant 9.99999974E-6 : f32
    %108 = vector.broadcast %cst_123 : f32 to vector<1x4xf32>
    %109 = arith.addf %105, %108 : vector<1x4xf32>
    %110 = math.rsqrt %109 : vector<1x4xf32>
    %111 = vector.broadcast %110 : vector<1x4xf32> to vector<256x4xf32>
    %112 = arith.mulf %107, %111 : vector<256x4xf32>
    %c0_124 = arith.constant 0 : index
    %c0_125 = arith.constant 0 : index
    %c0_126 = arith.constant 0 : index
    %c0_127 = arith.constant 0 : index
    %113 = vector.load %arg1[%c0_124, %c0_125, %c0_126, %c0_127] : memref<1x16x16x4xf32, #tpu.memory_space<vmem>>, vector<1x16x16x4xf32>
    %114 = vector.shape_cast %113 : vector<1x16x16x4xf32> to vector<16x16x4xf32>
    %115 = vector.shape_cast %114 : vector<16x16x4xf32> to vector<256x4xf32>
    %116 = arith.addf %112, %115 : vector<256x4xf32>
    %117 = vector.shape_cast %116 : vector<256x4xf32> to vector<1x8x128xf32>
    %c0_128 = arith.constant 0 : index
    %c0_129 = arith.constant 0 : index
    %c0_130 = arith.constant 0 : index
    %118 = vector.load %arg4[%c0_128, %c0_129, %c0_130] : memref<1x8x128xf32, #tpu.memory_space<vmem>>, vector<1x8x128xf32>
    tpu.vector_store %arg4[%c0_128, %c0_129, %c0_130], %117 {strides = array<i32>} : memref<1x8x128xf32, #tpu.memory_space<vmem>>, vector<1x8x128xf32>,
    return
  }
  func.func @transform_0(%arg0: i32) -> (i32, i32, i32, i32) {
    %c0_i32 = arith.constant 0 : i32
    %c0_i32_0 = arith.constant 0 : i32
    %c0_i32_1 = arith.constant 0 : i32
    %c0_i32_2 = arith.constant 0 : i32
    return %arg0, %c0_i32, %c0_i32_0, %c0_i32_1 : i32, i32, i32, i32
  }
  func.func @transform_1(%arg0: i32) -> (i32, i32) {
    %c0_i32 = arith.constant 0 : i32
    %c0_i32_0 = arith.constant 0 : i32
    %c0_i32_1 = arith.constant 0 : i32
    return %c0_i32, %c0_i32_0 : i32, i32
  }
  func.func @transform_2(%arg0: i32) -> (i32, i32) {
    %c0_i32 = arith.constant 0 : i32
    %c0_i32_0 = arith.constant 0 : i32
    %c0_i32_1 = arith.constant 0 : i32
    return %c0_i32, %c0_i32_0 : i32, i32
  }
  func.func @transform_3(%arg0: i32) -> (i32, i32, i32) {
    %c0_i32 = arith.constant 0 : i32
    %c0_i32_0 = arith.constant 0 : i32
    %c0_i32_1 = arith.constant 0 : i32
    return %arg0, %c0_i32, %c0_i32_0 : i32, i32, i32
  }
}

module attributes {stable_mosaic.version = 11 : i64} {
  func.func @kernel(%arg0: i32, %arg1: memref<1x16x16x4xf32, #tpu.memory_space<vmem>>, %arg2: memref<36x4xf32, #tpu.memory_space<vmem>>, %arg3: memref<36x4xf32, #tpu.memory_space<vmem>>, %arg4: memref<1x8x128xf32, #tpu.memory_space<vmem>>, %arg5: memref<18x18x4xf32, #tpu.memory_space<vmem>>, %arg6: memref<256x36xf32, #tpu.memory_space<vmem>>) attributes {dimension_semantics = [#tpu.dimension_semantics<parallel>], iteration_bounds = array<i64: 2>, scalar_prefetch = 0 : i64, scratch_operands = 2 : i64, tpu.core_type = #tpu.core_type<tc>, window_params = [{transform_indices = @transform_0, window_bounds = array<i64: 1, 16, 16, 4>}, {pipeline_mode = #tpu.pipeline_mode<synchronous>, transform_indices = @transform_1, window_bounds = array<i64: 36, 4>}, {pipeline_mode = #tpu.pipeline_mode<synchronous>, transform_indices = @transform_2, window_bounds = array<i64: 36, 4>}, {transform_indices = @transform_3, window_bounds = array<i64: 1, 8, 128>}]} {
    %cst = arith.constant 0.000000e+00 : f32
    %0 = vector.broadcast %cst : f32 to vector<1x18x4xf32>
    %cst_0 = arith.constant 0.000000e+00 : f32
    %1 = vector.broadcast %cst_0 : f32 to vector<18x1x4xf32>
    %c0 = arith.constant 0 : index
    %c0_1 = arith.constant 0 : index
    %c0_2 = arith.constant 0 : index
    %2 = vector.load %arg5[%c0, %c0_1, %c0_2] : memref<18x18x4xf32, #tpu.memory_space<vmem>>, vector<1x18x4xf32>
    tpu.vector_store %arg5[%c0, %c0_1, %c0_2], %0 {strides = array<i32>} : memref<18x18x4xf32, #tpu.memory_space<vmem>>, vector<1x18x4xf32>,
    %c17 = arith.constant 17 : index
    %c0_3 = arith.constant 0 : index
    %c0_4 = arith.constant 0 : index
    %3 = vector.load %arg5[%c17, %c0_3, %c0_4] : memref<18x18x4xf32, #tpu.memory_space<vmem>>, vector<1x18x4xf32>
    tpu.vector_store %arg5[%c17, %c0_3, %c0_4], %0 {strides = array<i32>} : memref<18x18x4xf32, #tpu.memory_space<vmem>>, vector<1x18x4xf32>,
    %c0_5 = arith.constant 0 : index
    %c0_6 = arith.constant 0 : index
    %c0_7 = arith.constant 0 : index
    %4 = vector.load %arg5[%c0_5, %c0_6, %c0_7] : memref<18x18x4xf32, #tpu.memory_space<vmem>>, vector<18x1x4xf32>
    tpu.vector_store %arg5[%c0_5, %c0_6, %c0_7], %1 {strides = array<i32>} : memref<18x18x4xf32, #tpu.memory_space<vmem>>, vector<18x1x4xf32>,
    %c0_8 = arith.constant 0 : index
    %c17_9 = arith.constant 17 : index
    %c0_10 = arith.constant 0 : index
    %5 = vector.load %arg5[%c0_8, %c17_9, %c0_10] : memref<18x18x4xf32, #tpu.memory_space<vmem>>, vector<18x1x4xf32>
    tpu.vector_store %arg5[%c0_8, %c17_9, %c0_10], %1 {strides = array<i32>} : memref<18x18x4xf32, #tpu.memory_space<vmem>>, vector<18x1x4xf32>,
    %c0_11 = arith.constant 0 : index
    %c0_12 = arith.constant 0 : index
    %c0_13 = arith.constant 0 : index
    %c0_14 = arith.constant 0 : index
    %6 = vector.load %arg1[%c0_11, %c0_12, %c0_13, %c0_14] : memref<1x16x16x4xf32, #tpu.memory_space<vmem>>, vector<1x16x16x4xf32>
    %7 = vector.shape_cast %6 : vector<1x16x16x4xf32> to vector<16x16x4xf32>
    %c1 = arith.constant 1 : index
    %c1_15 = arith.constant 1 : index
    %c0_16 = arith.constant 0 : index
    %8 = vector.load %arg5[%c1, %c1_15, %c0_16] : memref<18x18x4xf32, #tpu.memory_space<vmem>>, vector<16x16x4xf32>
    tpu.vector_store %arg5[%c1, %c1_15, %c0_16], %7 {strides = array<i32>} : memref<18x18x4xf32, #tpu.memory_space<vmem>>, vector<16x16x4xf32>,
    %c0_17 = arith.constant 0 : index
    %c0_18 = arith.constant 0 : index
    %c0_19 = arith.constant 0 : index
    %9 = vector.load %arg5[%c0_17, %c0_18, %c0_19] : memref<18x18x4xf32, #tpu.memory_space<vmem>>, vector<16x16x4xf32>
    %10 = vector.shape_cast %9 : vector<16x16x4xf32> to vector<256x4xf32>
    %c0_20 = arith.constant 0 : index
    %c0_21 = arith.constant 0 : index
    %11 = vector.load %arg6[%c0_20, %c0_21] : memref<256x36xf32, #tpu.memory_space<vmem>>, vector<256x4xf32>
    tpu.vector_store %arg6[%c0_20, %c0_21], %10 {strides = array<i32>} : memref<256x36xf32, #tpu.memory_space<vmem>>, vector<256x4xf32>,
    %c0_22 = arith.constant 0 : index
    %c1_23 = arith.constant 1 : index
    %c0_24 = arith.constant 0 : index
    %12 = vector.load %arg5[%c0_22, %c1_23, %c0_24] : memref<18x18x4xf32, #tpu.memory_space<vmem>>, vector<16x16x4xf32>
    %13 = vector.shape_cast %12 : vector<16x16x4xf32> to vector<256x4xf32>
    %c0_25 = arith.constant 0 : index
    %c4 = arith.constant 4 : index
    %14 = vector.load %arg6[%c0_25, %c4] : memref<256x36xf32, #tpu.memory_space<vmem>>, vector<256x4xf32>
    tpu.vector_store %arg6[%c0_25, %c4], %13 {strides = array<i32>} : memref<256x36xf32, #tpu.memory_space<vmem>>, vector<256x4xf32>,
    %c0_26 = arith.constant 0 : index
    %c2 = arith.constant 2 : index
    %c0_27 = arith.constant 0 : index
    %15 = vector.load %arg5[%c0_26, %c2, %c0_27] : memref<18x18x4xf32, #tpu.memory_space<vmem>>, vector<16x16x4xf32>
    %16 = vector.shape_cast %15 : vector<16x16x4xf32> to vector<256x4xf32>
    %c0_28 = arith.constant 0 : index
    %c8 = arith.constant 8 : index
    %17 = vector.load %arg6[%c0_28, %c8] : memref<256x36xf32, #tpu.memory_space<vmem>>, vector<256x4xf32>
    tpu.vector_store %arg6[%c0_28, %c8], %16 {strides = array<i32>} : memref<256x36xf32, #tpu.memory_space<vmem>>, vector<256x4xf32>,
    %c1_29 = arith.constant 1 : index
    %c0_30 = arith.constant 0 : index
    %c0_31 = arith.constant 0 : index
    %18 = vector.load %arg5[%c1_29, %c0_30, %c0_31] : memref<18x18x4xf32, #tpu.memory_space<vmem>>, vector<16x16x4xf32>
    %19 = vector.shape_cast %18 : vector<16x16x4xf32> to vector<256x4xf32>
    %c0_32 = arith.constant 0 : index
    %c12 = arith.constant 12 : index
    %20 = vector.load %arg6[%c0_32, %c12] : memref<256x36xf32, #tpu.memory_space<vmem>>, vector<256x4xf32>
    tpu.vector_store %arg6[%c0_32, %c12], %19 {strides = array<i32>} : memref<256x36xf32, #tpu.memory_space<vmem>>, vector<256x4xf32>,
    %c1_33 = arith.constant 1 : index
    %c1_34 = arith.constant 1 : index
    %c0_35 = arith.constant 0 : index
    %21 = vector.load %arg5[%c1_33, %c1_34, %c0_35] : memref<18x18x4xf32, #tpu.memory_space<vmem>>, vector<16x16x4xf32>
    %22 = vector.shape_cast %21 : vector<16x16x4xf32> to vector<256x4xf32>
    %c0_36 = arith.constant 0 : index
    %c16 = arith.constant 16 : index
    %23 = vector.load %arg6[%c0_36, %c16] : memref<256x36xf32, #tpu.memory_space<vmem>>, vector<256x4xf32>
    tpu.vector_store %arg6[%c0_36, %c16], %22 {strides = array<i32>} : memref<256x36xf32, #tpu.memory_space<vmem>>, vector<256x4xf32>,
    %c1_37 = arith.constant 1 : index
    %c2_38 = arith.constant 2 : index
    %c0_39 = arith.constant 0 : index
    %24 = vector.load %arg5[%c1_37, %c2_38, %c0_39] : memref<18x18x4xf32, #tpu.memory_space<vmem>>, vector<16x16x4xf32>
    %25 = vector.shape_cast %24 : vector<16x16x4xf32> to vector<256x4xf32>
    %c0_40 = arith.constant 0 : index
    %c20 = arith.constant 20 : index
    %26 = vector.load %arg6[%c0_40, %c20] : memref<256x36xf32, #tpu.memory_space<vmem>>, vector<256x4xf32>
    tpu.vector_store %arg6[%c0_40, %c20], %25 {strides = array<i32>} : memref<256x36xf32, #tpu.memory_space<vmem>>, vector<256x4xf32>,
    %c2_41 = arith.constant 2 : index
    %c0_42 = arith.constant 0 : index
    %c0_43 = arith.constant 0 : index
    %27 = vector.load %arg5[%c2_41, %c0_42, %c0_43] : memref<18x18x4xf32, #tpu.memory_space<vmem>>, vector<16x16x4xf32>
    %28 = vector.shape_cast %27 : vector<16x16x4xf32> to vector<256x4xf32>
    %c0_44 = arith.constant 0 : index
    %c24 = arith.constant 24 : index
    %29 = vector.load %arg6[%c0_44, %c24] : memref<256x36xf32, #tpu.memory_space<vmem>>, vector<256x4xf32>
    tpu.vector_store %arg6[%c0_44, %c24], %28 {strides = array<i32>} : memref<256x36xf32, #tpu.memory_space<vmem>>, vector<256x4xf32>,
    %c2_45 = arith.constant 2 : index
    %c1_46 = arith.constant 1 : index
    %c0_47 = arith.constant 0 : index
    %30 = vector.load %arg5[%c2_45, %c1_46, %c0_47] : memref<18x18x4xf32, #tpu.memory_space<vmem>>, vector<16x16x4xf32>
    %31 = vector.shape_cast %30 : vector<16x16x4xf32> to vector<256x4xf32>
    %c0_48 = arith.constant 0 : index
    %c28 = arith.constant 28 : index
    %32 = vector.load %arg6[%c0_48, %c28] : memref<256x36xf32, #tpu.memory_space<vmem>>, vector<256x4xf32>
    tpu.vector_store %arg6[%c0_48, %c28], %31 {strides = array<i32>} : memref<256x36xf32, #tpu.memory_space<vmem>>, vector<256x4xf32>,
    %c2_49 = arith.constant 2 : index
    %c2_50 = arith.constant 2 : index
    %c0_51 = arith.constant 0 : index
    %33 = vector.load %arg5[%c2_49, %c2_50, %c0_51] : memref<18x18x4xf32, #tpu.memory_space<vmem>>, vector<16x16x4xf32>
    %34 = vector.shape_cast %33 : vector<16x16x4xf32> to vector<256x4xf32>
    %c0_52 = arith.constant 0 : index
    %c32 = arith.constant 32 : index
    %35 = vector.load %arg6[%c0_52, %c32] : memref<256x36xf32, #tpu.memory_space<vmem>>, vector<256x4xf32>
    tpu.vector_store %arg6[%c0_52, %c32], %34 {strides = array<i32>} : memref<256x36xf32, #tpu.memory_space<vmem>>, vector<256x4xf32>,
    %c0_53 = arith.constant 0 : index
    %c0_54 = arith.constant 0 : index
    %36 = vector.load %arg6[%c0_53, %c0_54] : memref<256x36xf32, #tpu.memory_space<vmem>>, vector<256x36xf32>
    %c0_55 = arith.constant 0 : index
    %c0_56 = arith.constant 0 : index
    %37 = vector.load %arg2[%c0_55, %c0_56] : memref<36x4xf32, #tpu.memory_space<vmem>>, vector<36x4xf32>
    %cst_57 = arith.constant dense<0.000000e+00> : vector<256x4xf32>
    %38 = tpu.matmul %36, %37, %cst_57 {dimension_numbers = #tpu.dot_dimension_numbers<[1], [0], [0], [1], [0, 0, 1, 1], [], []>} : vector<256x36xf32>, vector<36x4xf32>, vector<256x4xf32> -> vector<256x4xf32>
    %cst_58 = arith.constant dense<0.000000e+00> : vector<4xf32>
    %39 = vector.multi_reduction <add>, %38, %cst_58 [0] : vector<256x4xf32> to vector<4xf32>
    %40 = vector.shape_cast %39 : vector<4xf32> to vector<1x4xf32>
    %cst_59 = arith.constant 2.560000e+02 : f32
    %41 = vector.broadcast %cst_59 : f32 to vector<1x4xf32>
    %42 = arith.divf %40, %41 : vector<1x4xf32>
    %43 = arith.mulf %38, %38 : vector<256x4xf32>
    %cst_60 = arith.constant dense<0.000000e+00> : vector<4xf32>
    %44 = vector.multi_reduction <add>, %43, %cst_60 [0] : vector<256x4xf32> to vector<4xf32>
    %45 = vector.shape_cast %44 : vector<4xf32> to vector<1x4xf32>
    %cst_61 = arith.constant 2.560000e+02 : f32
    %46 = vector.broadcast %cst_61 : f32 to vector<1x4xf32>
    %47 = arith.divf %45, %46 : vector<1x4xf32>
    %48 = arith.mulf %42, %42 : vector<1x4xf32>
    %49 = arith.subf %47, %48 : vector<1x4xf32>
    %cst_62 = arith.constant 0.000000e+00 : f32
    %50 = vector.broadcast %cst_62 : f32 to vector<1x4xf32>
    %51 = arith.maximumf %49, %50 : vector<1x4xf32>
    %52 = vector.broadcast %42 : vector<1x4xf32> to vector<256x4xf32>
    %53 = arith.subf %38, %52 : vector<256x4xf32>
    %cst_63 = arith.constant 9.99999974E-6 : f32
    %54 = vector.broadcast %cst_63 : f32 to vector<1x4xf32>
    %55 = arith.addf %51, %54 : vector<1x4xf32>
    %56 = math.rsqrt %55 : vector<1x4xf32>
    %57 = vector.broadcast %56 : vector<1x4xf32> to vector<256x4xf32>
    %58 = arith.mulf %53, %57 : vector<256x4xf32>
    %cst_64 = arith.constant 0.000000e+00 : f32
    %59 = vector.broadcast %cst_64 : f32 to vector<256x4xf32>
    %60 = arith.maximumf %58, %59 : vector<256x4xf32>
    %61 = vector.shape_cast %60 : vector<256x4xf32> to vector<16x16x4xf32>
    %c1_65 = arith.constant 1 : index
    %c1_66 = arith.constant 1 : index
    %c0_67 = arith.constant 0 : index
    %62 = vector.load %arg5[%c1_65, %c1_66, %c0_67] : memref<18x18x4xf32, #tpu.memory_space<vmem>>, vector<16x16x4xf32>
    tpu.vector_store %arg5[%c1_65, %c1_66, %c0_67], %61 {strides = array<i32>} : memref<18x18x4xf32, #tpu.memory_space<vmem>>, vector<16x16x4xf32>,
    %c0_68 = arith.constant 0 : index
    %c0_69 = arith.constant 0 : index
    %c0_70 = arith.constant 0 : index
    %63 = vector.load %arg5[%c0_68, %c0_69, %c0_70] : memref<18x18x4xf32, #tpu.memory_space<vmem>>, vector<16x16x4xf32>
    %64 = vector.shape_cast %63 : vector<16x16x4xf32> to vector<256x4xf32>
    %c0_71 = arith.constant 0 : index
    %c0_72 = arith.constant 0 : index
    %65 = vector.load %arg6[%c0_71, %c0_72] : memref<256x36xf32, #tpu.memory_space<vmem>>, vector<256x4xf32>
    tpu.vector_store %arg6[%c0_71, %c0_72], %64 {strides = array<i32>} : memref<256x36xf32, #tpu.memory_space<vmem>>, vector<256x4xf32>,
    %c0_73 = arith.constant 0 : index
    %c1_74 = arith.constant 1 : index
    %c0_75 = arith.constant 0 : index
    %66 = vector.load %arg5[%c0_73, %c1_74, %c0_75] : memref<18x18x4xf32, #tpu.memory_space<vmem>>, vector<16x16x4xf32>
    %67 = vector.shape_cast %66 : vector<16x16x4xf32> to vector<256x4xf32>
    %c0_76 = arith.constant 0 : index
    %c4_77 = arith.constant 4 : index
    %68 = vector.load %arg6[%c0_76, %c4_77] : memref<256x36xf32, #tpu.memory_space<vmem>>, vector<256x4xf32>
    tpu.vector_store %arg6[%c0_76, %c4_77], %67 {strides = array<i32>} : memref<256x36xf32, #tpu.memory_space<vmem>>, vector<256x4xf32>,
    %c0_78 = arith.constant 0 : index
    %c2_79 = arith.constant 2 : index
    %c0_80 = arith.constant 0 : index
    %69 = vector.load %arg5[%c0_78, %c2_79, %c0_80] : memref<18x18x4xf32, #tpu.memory_space<vmem>>, vector<16x16x4xf32>
    %70 = vector.shape_cast %69 : vector<16x16x4xf32> to vector<256x4xf32>
    %c0_81 = arith.constant 0 : index
    %c8_82 = arith.constant 8 : index
    %71 = vector.load %arg6[%c0_81, %c8_82] : memref<256x36xf32, #tpu.memory_space<vmem>>, vector<256x4xf32>
    tpu.vector_store %arg6[%c0_81, %c8_82], %70 {strides = array<i32>} : memref<256x36xf32, #tpu.memory_space<vmem>>, vector<256x4xf32>,
    %c1_83 = arith.constant 1 : index
    %c0_84 = arith.constant 0 : index
    %c0_85 = arith.constant 0 : index
    %72 = vector.load %arg5[%c1_83, %c0_84, %c0_85] : memref<18x18x4xf32, #tpu.memory_space<vmem>>, vector<16x16x4xf32>
    %73 = vector.shape_cast %72 : vector<16x16x4xf32> to vector<256x4xf32>
    %c0_86 = arith.constant 0 : index
    %c12_87 = arith.constant 12 : index
    %74 = vector.load %arg6[%c0_86, %c12_87] : memref<256x36xf32, #tpu.memory_space<vmem>>, vector<256x4xf32>
    tpu.vector_store %arg6[%c0_86, %c12_87], %73 {strides = array<i32>} : memref<256x36xf32, #tpu.memory_space<vmem>>, vector<256x4xf32>,
    %c1_88 = arith.constant 1 : index
    %c1_89 = arith.constant 1 : index
    %c0_90 = arith.constant 0 : index
    %75 = vector.load %arg5[%c1_88, %c1_89, %c0_90] : memref<18x18x4xf32, #tpu.memory_space<vmem>>, vector<16x16x4xf32>
    %76 = vector.shape_cast %75 : vector<16x16x4xf32> to vector<256x4xf32>
    %c0_91 = arith.constant 0 : index
    %c16_92 = arith.constant 16 : index
    %77 = vector.load %arg6[%c0_91, %c16_92] : memref<256x36xf32, #tpu.memory_space<vmem>>, vector<256x4xf32>
    tpu.vector_store %arg6[%c0_91, %c16_92], %76 {strides = array<i32>} : memref<256x36xf32, #tpu.memory_space<vmem>>, vector<256x4xf32>,
    %c1_93 = arith.constant 1 : index
    %c2_94 = arith.constant 2 : index
    %c0_95 = arith.constant 0 : index
    %78 = vector.load %arg5[%c1_93, %c2_94, %c0_95] : memref<18x18x4xf32, #tpu.memory_space<vmem>>, vector<16x16x4xf32>
    %79 = vector.shape_cast %78 : vector<16x16x4xf32> to vector<256x4xf32>
    %c0_96 = arith.constant 0 : index
    %c20_97 = arith.constant 20 : index
    %80 = vector.load %arg6[%c0_96, %c20_97] : memref<256x36xf32, #tpu.memory_space<vmem>>, vector<256x4xf32>
    tpu.vector_store %arg6[%c0_96, %c20_97], %79 {strides = array<i32>} : memref<256x36xf32, #tpu.memory_space<vmem>>, vector<256x4xf32>,
    %c2_98 = arith.constant 2 : index
    %c0_99 = arith.constant 0 : index
    %c0_100 = arith.constant 0 : index
    %81 = vector.load %arg5[%c2_98, %c0_99, %c0_100] : memref<18x18x4xf32, #tpu.memory_space<vmem>>, vector<16x16x4xf32>
    %82 = vector.shape_cast %81 : vector<16x16x4xf32> to vector<256x4xf32>
    %c0_101 = arith.constant 0 : index
    %c24_102 = arith.constant 24 : index
    %83 = vector.load %arg6[%c0_101, %c24_102] : memref<256x36xf32, #tpu.memory_space<vmem>>, vector<256x4xf32>
    tpu.vector_store %arg6[%c0_101, %c24_102], %82 {strides = array<i32>} : memref<256x36xf32, #tpu.memory_space<vmem>>, vector<256x4xf32>,
    %c2_103 = arith.constant 2 : index
    %c1_104 = arith.constant 1 : index
    %c0_105 = arith.constant 0 : index
    %84 = vector.load %arg5[%c2_103, %c1_104, %c0_105] : memref<18x18x4xf32, #tpu.memory_space<vmem>>, vector<16x16x4xf32>
    %85 = vector.shape_cast %84 : vector<16x16x4xf32> to vector<256x4xf32>
    %c0_106 = arith.constant 0 : index
    %c28_107 = arith.constant 28 : index
    %86 = vector.load %arg6[%c0_106, %c28_107] : memref<256x36xf32, #tpu.memory_space<vmem>>, vector<256x4xf32>
    tpu.vector_store %arg6[%c0_106, %c28_107], %85 {strides = array<i32>} : memref<256x36xf32, #tpu.memory_space<vmem>>, vector<256x4xf32>,
    %c2_108 = arith.constant 2 : index
    %c2_109 = arith.constant 2 : index
    %c0_110 = arith.constant 0 : index
    %87 = vector.load %arg5[%c2_108, %c2_109, %c0_110] : memref<18x18x4xf32, #tpu.memory_space<vmem>>, vector<16x16x4xf32>
    %88 = vector.shape_cast %87 : vector<16x16x4xf32> to vector<256x4xf32>
    %c0_111 = arith.constant 0 : index
    %c32_112 = arith.constant 32 : index
    %89 = vector.load %arg6[%c0_111, %c32_112] : memref<256x36xf32, #tpu.memory_space<vmem>>, vector<256x4xf32>
    tpu.vector_store %arg6[%c0_111, %c32_112], %88 {strides = array<i32>} : memref<256x36xf32, #tpu.memory_space<vmem>>, vector<256x4xf32>,
    %c0_113 = arith.constant 0 : index
    %c0_114 = arith.constant 0 : index
    %90 = vector.load %arg6[%c0_113, %c0_114] : memref<256x36xf32, #tpu.memory_space<vmem>>, vector<256x36xf32>
    %c0_115 = arith.constant 0 : index
    %c0_116 = arith.constant 0 : index
    %91 = vector.load %arg3[%c0_115, %c0_116] : memref<36x4xf32, #tpu.memory_space<vmem>>, vector<36x4xf32>
    %cst_117 = arith.constant dense<0.000000e+00> : vector<256x4xf32>
    %92 = tpu.matmul %90, %91, %cst_117 {dimension_numbers = #tpu.dot_dimension_numbers<[1], [0], [0], [1], [0, 0, 1, 1], [], []>} : vector<256x36xf32>, vector<36x4xf32>, vector<256x4xf32> -> vector<256x4xf32>
    %cst_118 = arith.constant dense<0.000000e+00> : vector<4xf32>
    %93 = vector.multi_reduction <add>, %92, %cst_118 [0] : vector<256x4xf32> to vector<4xf32>
    %94 = vector.shape_cast %93 : vector<4xf32> to vector<1x4xf32>
    %cst_119 = arith.constant 2.560000e+02 : f32
    %95 = vector.broadcast %cst_119 : f32 to vector<1x4xf32>
    %96 = arith.divf %94, %95 : vector<1x4xf32>
    %97 = arith.mulf %92, %92 : vector<256x4xf32>
    %cst_120 = arith.constant dense<0.000000e+00> : vector<4xf32>
    %98 = vector.multi_reduction <add>, %97, %cst_120 [0] : vector<256x4xf32> to vector<4xf32>
    %99 = vector.shape_cast %98 : vector<4xf32> to vector<1x4xf32>
    %cst_121 = arith.constant 2.560000e+02 : f32
    %100 = vector.broadcast %cst_121 : f32 to vector<1x4xf32>
    %101 = arith.divf %99, %100 : vector<1x4xf32>
    %102 = arith.mulf %96, %96 : vector<1x4xf32>
    %103 = arith.subf %101, %102 : vector<1x4xf32>
    %cst_122 = arith.constant 0.000000e+00 : f32
    %104 = vector.broadcast %cst_122 : f32 to vector<1x4xf32>
    %105 = arith.maximumf %103, %104 : vector<1x4xf32>
    %106 = vector.broadcast %96 : vector<1x4xf32> to vector<256x4xf32>
    %107 = arith.subf %92, %106 : vector<256x4xf32>
    %cst_123 = arith.constant 9.99999974E-6 : f32
    %108 = vector.broadcast %cst_123 : f32 to vector<1x4xf32>
    %109 = arith.addf %105, %108 : vector<1x4xf32>
    %110 = math.rsqrt %109 : vector<1x4xf32>
    %111 = vector.broadcast %110 : vector<1x4xf32> to vector<256x4xf32>
    %112 = arith.mulf %107, %111 : vector<256x4xf32>
    %c0_124 = arith.constant 0 : index
    %c0_125 = arith.constant 0 : index
    %c0_126 = arith.constant 0 : index
    %c0_127 = arith.constant 0 : index
    %113 = vector.load %arg1[%c0_124, %c0_125, %c0_126, %c0_127] : memref<1x16x16x4xf32, #tpu.memory_space<vmem>>, vector<1x16x16x4xf32>
    %114 = vector.shape_cast %113 : vector<1x16x16x4xf32> to vector<16x16x4xf32>
    %115 = vector.shape_cast %114 : vector<16x16x4xf32> to vector<256x4xf32>
    %116 = arith.addf %112, %115 : vector<256x4xf32>
    %117 = vector.shape_cast %116 : vector<256x4xf32> to vector<1x8x128xf32>
    %c0_128 = arith.constant 0 : index
    %c0_129 = arith.constant 0 : index
    %c0_130 = arith.constant 0 : index
    %118 = vector.load %arg4[%c0_128, %c0_129, %c0_130] : memref<1x8x128xf32, #tpu.memory_space<vmem>>, vector<1x8x128xf32>
    tpu.vector_store %arg4[%c0_128, %c0_129, %c0_130], %117 {strides = array<i32>} : memref<1x8x128xf32, #tpu.memory_space<vmem>>, vector<1x8x128xf32>,
    return
  }
  func.func @transform_0(%arg0: i32) -> (i32, i32, i32, i32) {
    %c0_i32 = arith.constant 0 : i32
    %c0_i32_0 = arith.constant 0 : i32
    %c0_i32_1 = arith.constant 0 : i32
    %c0_i32_2 = arith.constant 0 : i32
    return %arg0, %c0_i32, %c0_i32_0, %c0_i32_1 : i32, i32, i32, i32
  }
  func.func @transform_1(%arg0: i32) -> (i32, i32) {
    %c0_i32 = arith.constant 0 : i32
    %c0_i32_0 = arith.constant 0 : i32
    %c0_i32_1 = arith.constant 0 : i32
    return %c0_i32, %c0_i32_0 : i32, i32
  }
  func.func @transform_2(%arg0: i32) -> (i32, i32) {
    %c0_i32 = arith.constant 0 : i32
    %c0_i32_0 = arith.constant 0 : i32
    %c0_i32_1 = arith.constant 0 : i32
    return %c0_i32, %c0_i32_0 : i32, i32
  }
  func.func @transform_3(%arg0: i32) -> (i32, i32, i32) {
    %c0_i32 = arith.constant 0 : i32
    %c0_i32_0 = arith.constant 0 : i32
    %c0_i32_1 = arith.constant 0 : i32
    return %arg0, %c0_i32, %c0_i32_0 : i32, i32, i32
  }
}

module attributes {stable_mosaic.version = 11 : i64} {
  func.func @kernel(%arg0: i32, %arg1: memref<1x16x16x4xf32, #tpu.memory_space<vmem>>, %arg2: memref<36x4xf32, #tpu.memory_space<vmem>>, %arg3: memref<36x4xf32, #tpu.memory_space<vmem>>, %arg4: memref<1x16x16x4xf32, #tpu.memory_space<vmem>>, %arg5: memref<18x18x4xf32, #tpu.memory_space<vmem>>, %arg6: memref<256x36xf32, #tpu.memory_space<vmem>>) attributes {dimension_semantics = [#tpu.dimension_semantics<parallel>], iteration_bounds = array<i64: 2>, scalar_prefetch = 0 : i64, scratch_operands = 2 : i64, tpu.core_type = #tpu.core_type<tc>, window_params = [{transform_indices = @transform_0, window_bounds = array<i64: 1, 16, 16, 4>}, {pipeline_mode = #tpu.pipeline_mode<synchronous>, transform_indices = @transform_1, window_bounds = array<i64: 36, 4>}, {pipeline_mode = #tpu.pipeline_mode<synchronous>, transform_indices = @transform_2, window_bounds = array<i64: 36, 4>}, {transform_indices = @transform_3, window_bounds = array<i64: 1, 16, 16, 4>}]} {
    %cst = arith.constant 0.000000e+00 : f32
    %0 = vector.broadcast %cst : f32 to vector<1x18x4xf32>
    %cst_0 = arith.constant 0.000000e+00 : f32
    %1 = vector.broadcast %cst_0 : f32 to vector<18x1x4xf32>
    %c0 = arith.constant 0 : index
    %c0_1 = arith.constant 0 : index
    %c0_2 = arith.constant 0 : index
    %2 = vector.load %arg5[%c0, %c0_1, %c0_2] : memref<18x18x4xf32, #tpu.memory_space<vmem>>, vector<1x18x4xf32>
    tpu.vector_store %arg5[%c0, %c0_1, %c0_2], %0 {strides = array<i32>} : memref<18x18x4xf32, #tpu.memory_space<vmem>>, vector<1x18x4xf32>,
    %c17 = arith.constant 17 : index
    %c0_3 = arith.constant 0 : index
    %c0_4 = arith.constant 0 : index
    %3 = vector.load %arg5[%c17, %c0_3, %c0_4] : memref<18x18x4xf32, #tpu.memory_space<vmem>>, vector<1x18x4xf32>
    tpu.vector_store %arg5[%c17, %c0_3, %c0_4], %0 {strides = array<i32>} : memref<18x18x4xf32, #tpu.memory_space<vmem>>, vector<1x18x4xf32>,
    %c0_5 = arith.constant 0 : index
    %c0_6 = arith.constant 0 : index
    %c0_7 = arith.constant 0 : index
    %4 = vector.load %arg5[%c0_5, %c0_6, %c0_7] : memref<18x18x4xf32, #tpu.memory_space<vmem>>, vector<18x1x4xf32>
    tpu.vector_store %arg5[%c0_5, %c0_6, %c0_7], %1 {strides = array<i32>} : memref<18x18x4xf32, #tpu.memory_space<vmem>>, vector<18x1x4xf32>,
    %c0_8 = arith.constant 0 : index
    %c17_9 = arith.constant 17 : index
    %c0_10 = arith.constant 0 : index
    %5 = vector.load %arg5[%c0_8, %c17_9, %c0_10] : memref<18x18x4xf32, #tpu.memory_space<vmem>>, vector<18x1x4xf32>
    tpu.vector_store %arg5[%c0_8, %c17_9, %c0_10], %1 {strides = array<i32>} : memref<18x18x4xf32, #tpu.memory_space<vmem>>, vector<18x1x4xf32>,
    %c0_11 = arith.constant 0 : index
    %c0_12 = arith.constant 0 : index
    %c0_13 = arith.constant 0 : index
    %c0_14 = arith.constant 0 : index
    %6 = vector.load %arg1[%c0_11, %c0_12, %c0_13, %c0_14] : memref<1x16x16x4xf32, #tpu.memory_space<vmem>>, vector<1x16x16x4xf32>
    %7 = vector.shape_cast %6 : vector<1x16x16x4xf32> to vector<16x16x4xf32>
    %c1 = arith.constant 1 : index
    %c1_15 = arith.constant 1 : index
    %c0_16 = arith.constant 0 : index
    %8 = vector.load %arg5[%c1, %c1_15, %c0_16] : memref<18x18x4xf32, #tpu.memory_space<vmem>>, vector<16x16x4xf32>
    tpu.vector_store %arg5[%c1, %c1_15, %c0_16], %7 {strides = array<i32>} : memref<18x18x4xf32, #tpu.memory_space<vmem>>, vector<16x16x4xf32>,
    %c0_17 = arith.constant 0 : index
    %c0_18 = arith.constant 0 : index
    %c0_19 = arith.constant 0 : index
    %9 = vector.load %arg5[%c0_17, %c0_18, %c0_19] : memref<18x18x4xf32, #tpu.memory_space<vmem>>, vector<16x16x4xf32>
    %10 = vector.shape_cast %9 : vector<16x16x4xf32> to vector<256x4xf32>
    %c0_20 = arith.constant 0 : index
    %c0_21 = arith.constant 0 : index
    %11 = vector.load %arg6[%c0_20, %c0_21] : memref<256x36xf32, #tpu.memory_space<vmem>>, vector<256x4xf32>
    tpu.vector_store %arg6[%c0_20, %c0_21], %10 {strides = array<i32>} : memref<256x36xf32, #tpu.memory_space<vmem>>, vector<256x4xf32>,
    %c0_22 = arith.constant 0 : index
    %c1_23 = arith.constant 1 : index
    %c0_24 = arith.constant 0 : index
    %12 = vector.load %arg5[%c0_22, %c1_23, %c0_24] : memref<18x18x4xf32, #tpu.memory_space<vmem>>, vector<16x16x4xf32>
    %13 = vector.shape_cast %12 : vector<16x16x4xf32> to vector<256x4xf32>
    %c0_25 = arith.constant 0 : index
    %c4 = arith.constant 4 : index
    %14 = vector.load %arg6[%c0_25, %c4] : memref<256x36xf32, #tpu.memory_space<vmem>>, vector<256x4xf32>
    tpu.vector_store %arg6[%c0_25, %c4], %13 {strides = array<i32>} : memref<256x36xf32, #tpu.memory_space<vmem>>, vector<256x4xf32>,
    %c0_26 = arith.constant 0 : index
    %c2 = arith.constant 2 : index
    %c0_27 = arith.constant 0 : index
    %15 = vector.load %arg5[%c0_26, %c2, %c0_27] : memref<18x18x4xf32, #tpu.memory_space<vmem>>, vector<16x16x4xf32>
    %16 = vector.shape_cast %15 : vector<16x16x4xf32> to vector<256x4xf32>
    %c0_28 = arith.constant 0 : index
    %c8 = arith.constant 8 : index
    %17 = vector.load %arg6[%c0_28, %c8] : memref<256x36xf32, #tpu.memory_space<vmem>>, vector<256x4xf32>
    tpu.vector_store %arg6[%c0_28, %c8], %16 {strides = array<i32>} : memref<256x36xf32, #tpu.memory_space<vmem>>, vector<256x4xf32>,
    %c1_29 = arith.constant 1 : index
    %c0_30 = arith.constant 0 : index
    %c0_31 = arith.constant 0 : index
    %18 = vector.load %arg5[%c1_29, %c0_30, %c0_31] : memref<18x18x4xf32, #tpu.memory_space<vmem>>, vector<16x16x4xf32>
    %19 = vector.shape_cast %18 : vector<16x16x4xf32> to vector<256x4xf32>
    %c0_32 = arith.constant 0 : index
    %c12 = arith.constant 12 : index
    %20 = vector.load %arg6[%c0_32, %c12] : memref<256x36xf32, #tpu.memory_space<vmem>>, vector<256x4xf32>
    tpu.vector_store %arg6[%c0_32, %c12], %19 {strides = array<i32>} : memref<256x36xf32, #tpu.memory_space<vmem>>, vector<256x4xf32>,
    %c1_33 = arith.constant 1 : index
    %c1_34 = arith.constant 1 : index
    %c0_35 = arith.constant 0 : index
    %21 = vector.load %arg5[%c1_33, %c1_34, %c0_35] : memref<18x18x4xf32, #tpu.memory_space<vmem>>, vector<16x16x4xf32>
    %22 = vector.shape_cast %21 : vector<16x16x4xf32> to vector<256x4xf32>
    %c0_36 = arith.constant 0 : index
    %c16 = arith.constant 16 : index
    %23 = vector.load %arg6[%c0_36, %c16] : memref<256x36xf32, #tpu.memory_space<vmem>>, vector<256x4xf32>
    tpu.vector_store %arg6[%c0_36, %c16], %22 {strides = array<i32>} : memref<256x36xf32, #tpu.memory_space<vmem>>, vector<256x4xf32>,
    %c1_37 = arith.constant 1 : index
    %c2_38 = arith.constant 2 : index
    %c0_39 = arith.constant 0 : index
    %24 = vector.load %arg5[%c1_37, %c2_38, %c0_39] : memref<18x18x4xf32, #tpu.memory_space<vmem>>, vector<16x16x4xf32>
    %25 = vector.shape_cast %24 : vector<16x16x4xf32> to vector<256x4xf32>
    %c0_40 = arith.constant 0 : index
    %c20 = arith.constant 20 : index
    %26 = vector.load %arg6[%c0_40, %c20] : memref<256x36xf32, #tpu.memory_space<vmem>>, vector<256x4xf32>
    tpu.vector_store %arg6[%c0_40, %c20], %25 {strides = array<i32>} : memref<256x36xf32, #tpu.memory_space<vmem>>, vector<256x4xf32>,
    %c2_41 = arith.constant 2 : index
    %c0_42 = arith.constant 0 : index
    %c0_43 = arith.constant 0 : index
    %27 = vector.load %arg5[%c2_41, %c0_42, %c0_43] : memref<18x18x4xf32, #tpu.memory_space<vmem>>, vector<16x16x4xf32>
    %28 = vector.shape_cast %27 : vector<16x16x4xf32> to vector<256x4xf32>
    %c0_44 = arith.constant 0 : index
    %c24 = arith.constant 24 : index
    %29 = vector.load %arg6[%c0_44, %c24] : memref<256x36xf32, #tpu.memory_space<vmem>>, vector<256x4xf32>
    tpu.vector_store %arg6[%c0_44, %c24], %28 {strides = array<i32>} : memref<256x36xf32, #tpu.memory_space<vmem>>, vector<256x4xf32>,
    %c2_45 = arith.constant 2 : index
    %c1_46 = arith.constant 1 : index
    %c0_47 = arith.constant 0 : index
    %30 = vector.load %arg5[%c2_45, %c1_46, %c0_47] : memref<18x18x4xf32, #tpu.memory_space<vmem>>, vector<16x16x4xf32>
    %31 = vector.shape_cast %30 : vector<16x16x4xf32> to vector<256x4xf32>
    %c0_48 = arith.constant 0 : index
    %c28 = arith.constant 28 : index
    %32 = vector.load %arg6[%c0_48, %c28] : memref<256x36xf32, #tpu.memory_space<vmem>>, vector<256x4xf32>
    tpu.vector_store %arg6[%c0_48, %c28], %31 {strides = array<i32>} : memref<256x36xf32, #tpu.memory_space<vmem>>, vector<256x4xf32>,
    %c2_49 = arith.constant 2 : index
    %c2_50 = arith.constant 2 : index
    %c0_51 = arith.constant 0 : index
    %33 = vector.load %arg5[%c2_49, %c2_50, %c0_51] : memref<18x18x4xf32, #tpu.memory_space<vmem>>, vector<16x16x4xf32>
    %34 = vector.shape_cast %33 : vector<16x16x4xf32> to vector<256x4xf32>
    %c0_52 = arith.constant 0 : index
    %c32 = arith.constant 32 : index
    %35 = vector.load %arg6[%c0_52, %c32] : memref<256x36xf32, #tpu.memory_space<vmem>>, vector<256x4xf32>
    tpu.vector_store %arg6[%c0_52, %c32], %34 {strides = array<i32>} : memref<256x36xf32, #tpu.memory_space<vmem>>, vector<256x4xf32>,
    %c0_53 = arith.constant 0 : index
    %c0_54 = arith.constant 0 : index
    %36 = vector.load %arg6[%c0_53, %c0_54] : memref<256x36xf32, #tpu.memory_space<vmem>>, vector<256x36xf32>
    %c0_55 = arith.constant 0 : index
    %c0_56 = arith.constant 0 : index
    %37 = vector.load %arg2[%c0_55, %c0_56] : memref<36x4xf32, #tpu.memory_space<vmem>>, vector<36x4xf32>
    %cst_57 = arith.constant dense<0.000000e+00> : vector<256x4xf32>
    %38 = tpu.matmul %36, %37, %cst_57 {dimension_numbers = #tpu.dot_dimension_numbers<[1], [0], [0], [1], [0, 0, 1, 1], [], []>} : vector<256x36xf32>, vector<36x4xf32>, vector<256x4xf32> -> vector<256x4xf32>
    %cst_58 = arith.constant dense<0.000000e+00> : vector<4xf32>
    %39 = vector.multi_reduction <add>, %38, %cst_58 [0] : vector<256x4xf32> to vector<4xf32>
    %40 = vector.shape_cast %39 : vector<4xf32> to vector<1x4xf32>
    %cst_59 = arith.constant 2.560000e+02 : f32
    %41 = vector.broadcast %cst_59 : f32 to vector<1x4xf32>
    %42 = arith.divf %40, %41 : vector<1x4xf32>
    %43 = arith.mulf %38, %38 : vector<256x4xf32>
    %cst_60 = arith.constant dense<0.000000e+00> : vector<4xf32>
    %44 = vector.multi_reduction <add>, %43, %cst_60 [0] : vector<256x4xf32> to vector<4xf32>
    %45 = vector.shape_cast %44 : vector<4xf32> to vector<1x4xf32>
    %cst_61 = arith.constant 2.560000e+02 : f32
    %46 = vector.broadcast %cst_61 : f32 to vector<1x4xf32>
    %47 = arith.divf %45, %46 : vector<1x4xf32>
    %48 = arith.mulf %42, %42 : vector<1x4xf32>
    %49 = arith.subf %47, %48 : vector<1x4xf32>
    %cst_62 = arith.constant 0.000000e+00 : f32
    %50 = vector.broadcast %cst_62 : f32 to vector<1x4xf32>
    %51 = arith.maximumf %49, %50 : vector<1x4xf32>
    %52 = vector.broadcast %42 : vector<1x4xf32> to vector<256x4xf32>
    %53 = arith.subf %38, %52 : vector<256x4xf32>
    %cst_63 = arith.constant 9.99999974E-6 : f32
    %54 = vector.broadcast %cst_63 : f32 to vector<1x4xf32>
    %55 = arith.addf %51, %54 : vector<1x4xf32>
    %56 = math.rsqrt %55 : vector<1x4xf32>
    %57 = vector.broadcast %56 : vector<1x4xf32> to vector<256x4xf32>
    %58 = arith.mulf %53, %57 : vector<256x4xf32>
    %cst_64 = arith.constant 0.000000e+00 : f32
    %59 = vector.broadcast %cst_64 : f32 to vector<256x4xf32>
    %60 = arith.maximumf %58, %59 : vector<256x4xf32>
    %61 = vector.shape_cast %60 : vector<256x4xf32> to vector<16x16x4xf32>
    %c1_65 = arith.constant 1 : index
    %c1_66 = arith.constant 1 : index
    %c0_67 = arith.constant 0 : index
    %62 = vector.load %arg5[%c1_65, %c1_66, %c0_67] : memref<18x18x4xf32, #tpu.memory_space<vmem>>, vector<16x16x4xf32>
    tpu.vector_store %arg5[%c1_65, %c1_66, %c0_67], %61 {strides = array<i32>} : memref<18x18x4xf32, #tpu.memory_space<vmem>>, vector<16x16x4xf32>,
    %c0_68 = arith.constant 0 : index
    %c0_69 = arith.constant 0 : index
    %c0_70 = arith.constant 0 : index
    %63 = vector.load %arg5[%c0_68, %c0_69, %c0_70] : memref<18x18x4xf32, #tpu.memory_space<vmem>>, vector<16x16x4xf32>
    %64 = vector.shape_cast %63 : vector<16x16x4xf32> to vector<256x4xf32>
    %c0_71 = arith.constant 0 : index
    %c0_72 = arith.constant 0 : index
    %65 = vector.load %arg6[%c0_71, %c0_72] : memref<256x36xf32, #tpu.memory_space<vmem>>, vector<256x4xf32>
    tpu.vector_store %arg6[%c0_71, %c0_72], %64 {strides = array<i32>} : memref<256x36xf32, #tpu.memory_space<vmem>>, vector<256x4xf32>,
    %c0_73 = arith.constant 0 : index
    %c1_74 = arith.constant 1 : index
    %c0_75 = arith.constant 0 : index
    %66 = vector.load %arg5[%c0_73, %c1_74, %c0_75] : memref<18x18x4xf32, #tpu.memory_space<vmem>>, vector<16x16x4xf32>
    %67 = vector.shape_cast %66 : vector<16x16x4xf32> to vector<256x4xf32>
    %c0_76 = arith.constant 0 : index
    %c4_77 = arith.constant 4 : index
    %68 = vector.load %arg6[%c0_76, %c4_77] : memref<256x36xf32, #tpu.memory_space<vmem>>, vector<256x4xf32>
    tpu.vector_store %arg6[%c0_76, %c4_77], %67 {strides = array<i32>} : memref<256x36xf32, #tpu.memory_space<vmem>>, vector<256x4xf32>,
    %c0_78 = arith.constant 0 : index
    %c2_79 = arith.constant 2 : index
    %c0_80 = arith.constant 0 : index
    %69 = vector.load %arg5[%c0_78, %c2_79, %c0_80] : memref<18x18x4xf32, #tpu.memory_space<vmem>>, vector<16x16x4xf32>
    %70 = vector.shape_cast %69 : vector<16x16x4xf32> to vector<256x4xf32>
    %c0_81 = arith.constant 0 : index
    %c8_82 = arith.constant 8 : index
    %71 = vector.load %arg6[%c0_81, %c8_82] : memref<256x36xf32, #tpu.memory_space<vmem>>, vector<256x4xf32>
    tpu.vector_store %arg6[%c0_81, %c8_82], %70 {strides = array<i32>} : memref<256x36xf32, #tpu.memory_space<vmem>>, vector<256x4xf32>,
    %c1_83 = arith.constant 1 : index
    %c0_84 = arith.constant 0 : index
    %c0_85 = arith.constant 0 : index
    %72 = vector.load %arg5[%c1_83, %c0_84, %c0_85] : memref<18x18x4xf32, #tpu.memory_space<vmem>>, vector<16x16x4xf32>
    %73 = vector.shape_cast %72 : vector<16x16x4xf32> to vector<256x4xf32>
    %c0_86 = arith.constant 0 : index
    %c12_87 = arith.constant 12 : index
    %74 = vector.load %arg6[%c0_86, %c12_87] : memref<256x36xf32, #tpu.memory_space<vmem>>, vector<256x4xf32>
    tpu.vector_store %arg6[%c0_86, %c12_87], %73 {strides = array<i32>} : memref<256x36xf32, #tpu.memory_space<vmem>>, vector<256x4xf32>,
    %c1_88 = arith.constant 1 : index
    %c1_89 = arith.constant 1 : index
    %c0_90 = arith.constant 0 : index
    %75 = vector.load %arg5[%c1_88, %c1_89, %c0_90] : memref<18x18x4xf32, #tpu.memory_space<vmem>>, vector<16x16x4xf32>
    %76 = vector.shape_cast %75 : vector<16x16x4xf32> to vector<256x4xf32>
    %c0_91 = arith.constant 0 : index
    %c16_92 = arith.constant 16 : index
    %77 = vector.load %arg6[%c0_91, %c16_92] : memref<256x36xf32, #tpu.memory_space<vmem>>, vector<256x4xf32>
    tpu.vector_store %arg6[%c0_91, %c16_92], %76 {strides = array<i32>} : memref<256x36xf32, #tpu.memory_space<vmem>>, vector<256x4xf32>,
    %c1_93 = arith.constant 1 : index
    %c2_94 = arith.constant 2 : index
    %c0_95 = arith.constant 0 : index
    %78 = vector.load %arg5[%c1_93, %c2_94, %c0_95] : memref<18x18x4xf32, #tpu.memory_space<vmem>>, vector<16x16x4xf32>
    %79 = vector.shape_cast %78 : vector<16x16x4xf32> to vector<256x4xf32>
    %c0_96 = arith.constant 0 : index
    %c20_97 = arith.constant 20 : index
    %80 = vector.load %arg6[%c0_96, %c20_97] : memref<256x36xf32, #tpu.memory_space<vmem>>, vector<256x4xf32>
    tpu.vector_store %arg6[%c0_96, %c20_97], %79 {strides = array<i32>} : memref<256x36xf32, #tpu.memory_space<vmem>>, vector<256x4xf32>,
    %c2_98 = arith.constant 2 : index
    %c0_99 = arith.constant 0 : index
    %c0_100 = arith.constant 0 : index
    %81 = vector.load %arg5[%c2_98, %c0_99, %c0_100] : memref<18x18x4xf32, #tpu.memory_space<vmem>>, vector<16x16x4xf32>
    %82 = vector.shape_cast %81 : vector<16x16x4xf32> to vector<256x4xf32>
    %c0_101 = arith.constant 0 : index
    %c24_102 = arith.constant 24 : index
    %83 = vector.load %arg6[%c0_101, %c24_102] : memref<256x36xf32, #tpu.memory_space<vmem>>, vector<256x4xf32>
    tpu.vector_store %arg6[%c0_101, %c24_102], %82 {strides = array<i32>} : memref<256x36xf32, #tpu.memory_space<vmem>>, vector<256x4xf32>,
    %c2_103 = arith.constant 2 : index
    %c1_104 = arith.constant 1 : index
    %c0_105 = arith.constant 0 : index
    %84 = vector.load %arg5[%c2_103, %c1_104, %c0_105] : memref<18x18x4xf32, #tpu.memory_space<vmem>>, vector<16x16x4xf32>
    %85 = vector.shape_cast %84 : vector<16x16x4xf32> to vector<256x4xf32>
    %c0_106 = arith.constant 0 : index
    %c28_107 = arith.constant 28 : index
    %86 = vector.load %arg6[%c0_106, %c28_107] : memref<256x36xf32, #tpu.memory_space<vmem>>, vector<256x4xf32>
    tpu.vector_store %arg6[%c0_106, %c28_107], %85 {strides = array<i32>} : memref<256x36xf32, #tpu.memory_space<vmem>>, vector<256x4xf32>,
    %c2_108 = arith.constant 2 : index
    %c2_109 = arith.constant 2 : index
    %c0_110 = arith.constant 0 : index
    %87 = vector.load %arg5[%c2_108, %c2_109, %c0_110] : memref<18x18x4xf32, #tpu.memory_space<vmem>>, vector<16x16x4xf32>
    %88 = vector.shape_cast %87 : vector<16x16x4xf32> to vector<256x4xf32>
    %c0_111 = arith.constant 0 : index
    %c32_112 = arith.constant 32 : index
    %89 = vector.load %arg6[%c0_111, %c32_112] : memref<256x36xf32, #tpu.memory_space<vmem>>, vector<256x4xf32>
    tpu.vector_store %arg6[%c0_111, %c32_112], %88 {strides = array<i32>} : memref<256x36xf32, #tpu.memory_space<vmem>>, vector<256x4xf32>,
    %c0_113 = arith.constant 0 : index
    %c0_114 = arith.constant 0 : index
    %90 = vector.load %arg6[%c0_113, %c0_114] : memref<256x36xf32, #tpu.memory_space<vmem>>, vector<256x36xf32>
    %c0_115 = arith.constant 0 : index
    %c0_116 = arith.constant 0 : index
    %91 = vector.load %arg3[%c0_115, %c0_116] : memref<36x4xf32, #tpu.memory_space<vmem>>, vector<36x4xf32>
    %cst_117 = arith.constant dense<0.000000e+00> : vector<256x4xf32>
    %92 = tpu.matmul %90, %91, %cst_117 {dimension_numbers = #tpu.dot_dimension_numbers<[1], [0], [0], [1], [0, 0, 1, 1], [], []>} : vector<256x36xf32>, vector<36x4xf32>, vector<256x4xf32> -> vector<256x4xf32>
    %cst_118 = arith.constant dense<0.000000e+00> : vector<4xf32>
    %93 = vector.multi_reduction <add>, %92, %cst_118 [0] : vector<256x4xf32> to vector<4xf32>
    %94 = vector.shape_cast %93 : vector<4xf32> to vector<1x4xf32>
    %cst_119 = arith.constant 2.560000e+02 : f32
    %95 = vector.broadcast %cst_119 : f32 to vector<1x4xf32>
    %96 = arith.divf %94, %95 : vector<1x4xf32>
    %97 = arith.mulf %92, %92 : vector<256x4xf32>
    %cst_120 = arith.constant dense<0.000000e+00> : vector<4xf32>
    %98 = vector.multi_reduction <add>, %97, %cst_120 [0] : vector<256x4xf32> to vector<4xf32>
    %99 = vector.shape_cast %98 : vector<4xf32> to vector<1x4xf32>
    %cst_121 = arith.constant 2.560000e+02 : f32
    %100 = vector.broadcast %cst_121 : f32 to vector<1x4xf32>
    %101 = arith.divf %99, %100 : vector<1x4xf32>
    %102 = arith.mulf %96, %96 : vector<1x4xf32>
    %103 = arith.subf %101, %102 : vector<1x4xf32>
    %cst_122 = arith.constant 0.000000e+00 : f32
    %104 = vector.broadcast %cst_122 : f32 to vector<1x4xf32>
    %105 = arith.maximumf %103, %104 : vector<1x4xf32>
    %106 = vector.broadcast %96 : vector<1x4xf32> to vector<256x4xf32>
    %107 = arith.subf %92, %106 : vector<256x4xf32>
    %cst_123 = arith.constant 9.99999974E-6 : f32
    %108 = vector.broadcast %cst_123 : f32 to vector<1x4xf32>
    %109 = arith.addf %105, %108 : vector<1x4xf32>
    %110 = math.rsqrt %109 : vector<1x4xf32>
    %111 = vector.broadcast %110 : vector<1x4xf32> to vector<256x4xf32>
    %112 = arith.mulf %107, %111 : vector<256x4xf32>
    %c0_124 = arith.constant 0 : index
    %c0_125 = arith.constant 0 : index
    %c0_126 = arith.constant 0 : index
    %c0_127 = arith.constant 0 : index
    %113 = vector.load %arg1[%c0_124, %c0_125, %c0_126, %c0_127] : memref<1x16x16x4xf32, #tpu.memory_space<vmem>>, vector<1x16x16x4xf32>
    %114 = vector.shape_cast %113 : vector<1x16x16x4xf32> to vector<16x16x4xf32>
    %115 = vector.shape_cast %114 : vector<16x16x4xf32> to vector<256x4xf32>
    %116 = arith.addf %112, %115 : vector<256x4xf32>
    %117 = vector.shape_cast %116 : vector<256x4xf32> to vector<1x16x16x4xf32>
    %c0_128 = arith.constant 0 : index
    %c0_129 = arith.constant 0 : index
    %c0_130 = arith.constant 0 : index
    %c0_131 = arith.constant 0 : index
    %118 = vector.load %arg4[%c0_128, %c0_129, %c0_130, %c0_131] : memref<1x16x16x4xf32, #tpu.memory_space<vmem>>, vector<1x16x16x4xf32>
    tpu.vector_store %arg4[%c0_128, %c0_129, %c0_130, %c0_131], %117 {strides = array<i32>} : memref<1x16x16x4xf32, #tpu.memory_space<vmem>>, vector<1x16x16x4xf32>,
    return
  }
  func.func @transform_0(%arg0: i32) -> (i32, i32, i32, i32) {
    %c0_i32 = arith.constant 0 : i32
    %c0_i32_0 = arith.constant 0 : i32
    %c0_i32_1 = arith.constant 0 : i32
    %c0_i32_2 = arith.constant 0 : i32
    return %arg0, %c0_i32, %c0_i32_0, %c0_i32_1 : i32, i32, i32, i32
  }
  func.func @transform_1(%arg0: i32) -> (i32, i32) {
    %c0_i32 = arith.constant 0 : i32
    %c0_i32_0 = arith.constant 0 : i32
    %c0_i32_1 = arith.constant 0 : i32
    return %c0_i32, %c0_i32_0 : i32, i32
  }
  func.func @transform_2(%arg0: i32) -> (i32, i32) {
    %c0_i32 = arith.constant 0 : i32
    %c0_i32_0 = arith.constant 0 : i32
    %c0_i32_1 = arith.constant 0 : i32
    return %c0_i32, %c0_i32_0 : i32, i32
  }
  func.func @transform_3(%arg0: i32) -> (i32, i32, i32, i32) {
    %c0_i32 = arith.constant 0 : i32
    %c0_i32_0 = arith.constant 0 : i32
    %c0_i32_1 = arith.constant 0 : i32
    %c0_i32_2 = arith.constant 0 : i32
    return %arg0, %c0_i32, %c0_i32_0, %c0_i32_1 : i32, i32, i32, i32
  }
}

</mosaic_0001>

<llo_original>
// kernel: tpu_custom_call.1
$region0: #{tpu_custom_call.1}
  #allocation0 [shape = 'u32[]', space=smem, size = 0x4, offset = 0x4, fixed_abs, tag = 'smem constant byte address 0x4 - core index']
  #allocation1 [shape = 'u32[144,128]{1,0:T(1,128)}', space=vmem, size = 0x12000, scoped, tag = 'internal scratch']
  #allocation2 [shape = 'f32[18,18,4]{2,1,0:T(8,128)}', space=vmem, size = 0x36000, scoped, tag = 'scratch operand']
  #allocation3 [shape = 'f32[256,36]{1,0:T(8,128)}', space=vmem, size = 0x20000, scoped, tag = 'scratch operand']
  %s0 = inlined_call_operand.vmem [shape: f32[2,16,16,4], index: 0, kind: input, shape index: {}]
  %s1 = inlined_call_operand.vmem [shape: f32[36,4], index: 1, kind: input, shape index: {}]
  %s2 = inlined_call_operand.vmem [shape: f32[36,4], index: 2, kind: input, shape index: {}]
  %s3 = inlined_call_operand.vmem [shape: f32[2,16,16,4], index: 3, kind: output, shape index: {}]
  %s4 = sld [smem:[#allocation0]]
  $region45: #{tpu_custom_call.1} parent=0
    _
  %s6 = ssub.s32 1, %s4
  %s7 = scalar_select 0, %s6, %s4
  loop: start=0, step=1, limit=4
  $region2: #{tpu_custom_call.1} parent=0 // loop_pre_header
    _
  $region3: #{tpu_custom_call.1} parent=0 // loop_header
    %s9 = sphi 0, %s13
    %p10 = scmp.ge.s32.totalorder %s9, 4
    %s19 = sphi 0, %s21
    %s22 = sphi 0, %s19
    %s23 = sphi 0, %s22
    %s39 = sphi 0, %s23
    %s43 = sphi 0, %s43
    %s45 = sphi 0, %s43
    %s46 = sphi 0, %s45
    %s60 = sphi 0, %s46
    %s64 = sphi 0, %s64
    %s66 = sphi 0, %s64
    %s67 = sphi 0, %s66
    %s81 = sphi 0, %s67
    %s87 = sphi 0, %s89
    %s90 = sphi 0, %s87
    %s91 = sphi 0, %s90
    %s107 = sphi 0, %s91
  $region4: #{tpu_custom_call.1} parent=0 // loop_header_branch
    %12 = sbr.rel (%p10) target = $region8
  $region5: #{tpu_custom_call.1} parent=0 // loop_body
    %s14 = ssub.s32 %s9, 1
    %s15 = ssub.s32 %s9, 2
    %s16 = sadd.s32 %s9, 1
    %s17 = ssub.s32 %s9, %s16
    %p18 = scmp.eq.s32.totalorder %s17, 0
    %s20 = sadd.s32 %s19, 1
    %s21 = scalar_select %p18, %s19, %s20
    %p24 = pneg %p18
    %p25 = scmp.eq.s32.totalorder %s9, 1
    %p26 = por %p24, %p25
    %p27 = scmp.ne.s32.totalorder %s19, %s22
    %p28 = scmp.eq.s32.totalorder %s9, 0
    %p29 = por %p27, %p28
    %p30 = scmp.ne.s32.totalorder %s19, %s22
    %p31 = scmp.eq.s32.totalorder %s14, 1
    %p32 = por %p30, %p31
    %p33 = scmp.ne.s32.totalorder %s22, %s23
    %p34 = scmp.eq.s32.totalorder %s14, 0
    %p35 = por %p33, %p34
    %p36 = scmp.ne.s32.totalorder %s22, %s23
    %p37 = scmp.eq.s32.totalorder %s15, 1
    %p38 = por %p36, %p37
    %p40 = scmp.ne.s32.totalorder %s23, %s39
    %p41 = scmp.eq.s32.totalorder %s15, 0
    %p42 = por %p40, %p41
    %s44 = sadd.s32 %s43, 1
    %p47 = scmp.eq.s32.totalorder %s9, 1
    %p48 = scmp.ne.s32.totalorder %s43, %s45
    %p49 = scmp.eq.s32.totalorder %s9, 0
    %p50 = por %p48, %p49
    %p51 = scmp.ne.s32.totalorder %s43, %s45
    %p52 = scmp.eq.s32.totalorder %s14, 1
    %p53 = por %p51, %p52
    %p54 = scmp.ne.s32.totalorder %s45, %s46
    %p55 = scmp.eq.s32.totalorder %s14, 0
    %p56 = por %p54, %p55
    %p57 = scmp.ne.s32.totalorder %s45, %s46
    %p58 = scmp.eq.s32.totalorder %s15, 1
    %p59 = por %p57, %p58
    %p61 = scmp.ne.s32.totalorder %s46, %s60
    %p62 = scmp.eq.s32.totalorder %s15, 0
    %p63 = por %p61, %p62
    %s65 = sadd.s32 %s64, 1
    %p68 = scmp.eq.s32.totalorder %s9, 1
    %p69 = scmp.ne.s32.totalorder %s64, %s66
    %p70 = scmp.eq.s32.totalorder %s9, 0
    %p71 = por %p69, %p70
    %p72 = scmp.ne.s32.totalorder %s64, %s66
    %p73 = scmp.eq.s32.totalorder %s14, 1
    %p74 = por %p72, %p73
    %p75 = scmp.ne.s32.totalorder %s66, %s67
    %p76 = scmp.eq.s32.totalorder %s14, 0
    %p77 = por %p75, %p76
    %p78 = scmp.ne.s32.totalorder %s66, %s67
    %p79 = scmp.eq.s32.totalorder %s15, 1
    %p80 = por %p78, %p79
    %p82 = scmp.ne.s32.totalorder %s67, %s81
    %p83 = scmp.eq.s32.totalorder %s15, 0
    %p84 = por %p82, %p83
    %s85 = ssub.s32 %s9, %s16
    %p86 = scmp.eq.s32.totalorder %s85, 0
    %s88 = sadd.s32 %s87, 1
    %s89 = scalar_select %p86, %s87, %s88
    %p92 = pneg %p86
    %p93 = scmp.eq.s32.totalorder %s9, 1
    %p94 = por %p92, %p93
    %p95 = scmp.ne.s32.totalorder %s87, %s90
    %p96 = scmp.eq.s32.totalorder %s9, 0
    %p97 = por %p95, %p96
    %p98 = scmp.ne.s32.totalorder %s87, %s90
    %p99 = scmp.eq.s32.totalorder %s14, 1
    %p100 = por %p98, %p99
    %p101 = scmp.ne.s32.totalorder %s90, %s91
    %p102 = scmp.eq.s32.totalorder %s14, 0
    %p103 = por %p101, %p102
    %p104 = scmp.ne.s32.totalorder %s90, %s91
    %p105 = scmp.eq.s32.totalorder %s15, 1
    %p106 = por %p104, %p105
    %p108 = scmp.ne.s32.totalorder %s91, %s107
    %p109 = scmp.eq.s32.totalorder %s15, 0
    %p110 = por %p108, %p109
    %p111 = scmp.le.s32.totalorder 1, %s9
    %p112 = scmp.lt.s32.totalorder %s9, 3
    %p113 = pnand %p111, %p112
    %p114 = pneg %p113
    // Predicated region
    $region9: #{tpu_custom_call.1} parent=5 // pred_check
      _
    $region10: #{tpu_custom_call.1} parent=5 // pred_check_branch
      %116 = sbr.rel (%p113) target = $region12
    $region11: #{tpu_custom_call.1} parent=5 // pred_region
      %s117 = ssub.s32 %s9, 1
      // Predicated region
      $region13: #{tpu_custom_call.1} parent=11 // pred_check
        %p118 = pneg %p56
      $region14: #{tpu_custom_call.1} parent=11 // pred_check_branch
        %120 = sbr.rel (%p118) target = $region16
      $region15: #{tpu_custom_call.1} parent=11 // pred_region
        _
      $region16: #{tpu_custom_call.1} parent=11 // pred_fallthru
        _
      // Predicated region
      $region17: #{tpu_custom_call.1} parent=11 // pred_check
        %p121 = pneg %p77
      $region18: #{tpu_custom_call.1} parent=11 // pred_check_branch
        %123 = sbr.rel (%p121) target = $region20
      $region19: #{tpu_custom_call.1} parent=11 // pred_region
        _
      $region20: #{tpu_custom_call.1} parent=11 // pred_fallthru
        _
    $region12: #{tpu_custom_call.1} parent=5 // pred_fallthru
      _
    %p124 = scmp.lt.s32.totalorder %s9, 2
    // Predicated region
    $region21: #{tpu_custom_call.1} parent=5 // pred_check
      %p125 = pneg %p124
    $region22: #{tpu_custom_call.1} parent=5 // pred_check_branch
      %127 = sbr.rel (%p125) target = $region24
    $region23: #{tpu_custom_call.1} parent=5 // pred_region
      // Predicated region
      $region25: #{tpu_custom_call.1} parent=23 // pred_check
        %p128 = pneg %p29
      $region26: #{tpu_custom_call.1} parent=23 // pred_check_branch
        %130 = sbr.rel (%p128) target = $region28
      $region27: #{tpu_custom_call.1} parent=23 // pred_region
        %p131 = scmp.lt.s32.totalorder %s9, 1
        %s132 = scalar_select %p131, %s9, 1
        %s133 = smul.addr %s132, 32
        %s134 = smul.addr %s133, 8
        %s135 = scalar_lea.vmem %s0, %s134
      $region28: #{tpu_custom_call.1} parent=23 // pred_fallthru
        _
    $region24: #{tpu_custom_call.1} parent=5 // pred_fallthru
      _
    %p136 = scmp.le.s32.totalorder 1, %s9
    %p137 = scmp.lt.s32.totalorder %s9, 3
    %p138 = pnand %p136, %p137
    %p139 = pneg %p138
    // Predicated region
    $region29: #{tpu_custom_call.1} parent=5 // pred_check
      _
    $region30: #{tpu_custom_call.1} parent=5 // pred_check_branch
      %141 = sbr.rel (%p138) target = $region32
    $region31: #{tpu_custom_call.1} parent=5 // pred_region
      %s142 = ssub.s32 %s9, 1
      %p143 = scmp.lt.s32.totalorder %s14, 1
      %s144 = scalar_select %p143, %s14, 1
      %s145 = smul.addr %s144, 32
      %s146 = smul.addr %s145, 8
      %s147 = scalar_lea.vmem %s0, %s146
      %p148 = pneg %p35
      %p149 = pneg %p32
      %p150 = pneg %p56
      %p151 = pneg %p53
      %p152 = pneg %p77
      %p153 = pneg %p74
      %p154 = pneg %p103
      %p155 = pneg %p100
      %p156 = scmp.lt.s32.totalorder %s14, 1
      %s157 = scalar_select %p156, %s14, 1
      %s158 = smul.addr %s157, 32
      %s159 = smul.addr %s158, 8
      %s160 = scalar_lea.vmem %s3, %s159
      %p161 = scmp.lt.s32.totalorder %s14, 1
      %s162 = scalar_select %p161, %s14, 1
      %s163 = smul.addr %s162, 32
      %s164 = smul.addr %s163, 8
      %s165 = scalar_lea.vmem %s0, %s164
      %p166 = scmp.lt.s32.totalorder %s14, 1
      %s167 = scalar_select %p166, %s14, 1
      %s168 = smul.addr %s167, 32
      %s169 = smul.addr %s168, 8
      %s170 = scalar_lea.vmem %s3, %s169
      %vm171 = vcmask 31744
      %172 = vst.msk [vmem:[#allocation2] sm:$0xff] %vm171, 0.0
      %173 = vst.msk [vmem:[#allocation2 + $0x8] sm:$0xff] %vm171, 0.0
      %vm174 = vcmask 25600
      %175 = vst.msk [vmem:[#allocation2 + $0x10] sm:$0x3] %vm174, 0.0
      %s176 = scalar_lea.vmem [#allocation2], 408
      %177 = vst.msk [vmem:[%s176] sm:$0xff] %vm171, 0.0
      %178 = vst.msk [vmem:[%s176 + $0x8] sm:$0xff] %vm171, 0.0
      %179 = vst.msk [vmem:[%s176 + $0x10] sm:$0x3] %vm174, 0.0
      %vm180 = vcmask 24576
      %181 = vst.msk [vmem:[#allocation2] sm:$0x1] %vm180, 0.0
      %182 = vst.msk [vmem:[#allocation2 + $0x18] sm:$0x1] %vm180, 0.0
      %183 = vst.msk [vmem:[#allocation2 + $0x30] sm:$0x1] %vm180, 0.0
      %184 = vst.msk [vmem:[#allocation2 + $0x48] sm:$0x1] %vm180, 0.0
      %185 = vst.msk [vmem:[#allocation2 + $0x60] sm:$0x1] %vm180, 0.0
      %186 = vst.msk [vmem:[#allocation2 + $0x78] sm:$0x1] %vm180, 0.0
      %187 = vst.msk [vmem:[#allocation2 + $0x90] sm:$0x1] %vm180, 0.0
      %188 = vst.msk [vmem:[#allocation2 + $0xa8] sm:$0x1] %vm180, 0.0
      %189 = vst.msk [vmem:[#allocation2 + $0xc0] sm:$0x1] %vm180, 0.0
      %190 = vst.msk [vmem:[#allocation2 + $0xd8] sm:$0x1] %vm180, 0.0
      %191 = vst.msk [vmem:[#allocation2 + $0xf0] sm:$0x1] %vm180, 0.0
      %192 = vst.msk [vmem:[#allocation2 + $0x108] sm:$0x1] %vm180, 0.0
      %193 = vst.msk [vmem:[#allocation2 + $0x120] sm:$0x1] %vm180, 0.0
      %194 = vst.msk [vmem:[#allocation2 + $0x138] sm:$0x1] %vm180, 0.0
      %195 = vst.msk [vmem:[#allocation2 + $0x150] sm:$0x1] %vm180, 0.0
      %196 = vst.msk [vmem:[#allocation2 + $0x168] sm:$0x1] %vm180, 0.0
      %197 = vst.msk [vmem:[#allocation2 + $0x180] sm:$0x1] %vm180, 0.0
      %198 = vst.msk [vmem:[#allocation2 + $0x198] sm:$0x1] %vm180, 0.0
      %199 = vst.msk [vmem:[#allocation2 + $0x11] sm:$0x1] %vm180, 0.0
      %200 = vst.msk [vmem:[#allocation2 + $0x29] sm:$0x1] %vm180, 0.0
      %201 = vst.msk [vmem:[#allocation2 + $0x41] sm:$0x1] %vm180, 0.0
      %202 = vst.msk [vmem:[#allocation2 + $0x59] sm:$0x1] %vm180, 0.0
      %203 = vst.msk [vmem:[#allocation2 + $0x71] sm:$0x1] %vm180, 0.0
      %204 = vst.msk [vmem:[#allocation2 + $0x89] sm:$0x1] %vm180, 0.0
      %205 = vst.msk [vmem:[#allocation2 + $0xa1] sm:$0x1] %vm180, 0.0
      %206 = vst.msk [vmem:[#allocation2 + $0xb9] sm:$0x1] %vm180, 0.0
      %207 = vst.msk [vmem:[#allocation2 + $0xd1] sm:$0x1] %vm180, 0.0
      %208 = vst.msk [vmem:[#allocation2 + $0xe9] sm:$0x1] %vm180, 0.0
      %209 = vst.msk [vmem:[#allocation2 + $0x101] sm:$0x1] %vm180, 0.0
      %210 = vst.msk [vmem:[#allocation2 + $0x119] sm:$0x1] %vm180, 0.0
      %211 = vst.msk [vmem:[#allocation2 + $0x131] sm:$0x1] %vm180, 0.0
      %212 = vst.msk [vmem:[#allocation2 + $0x149] sm:$0x1] %vm180, 0.0
      %213 = vst.msk [vmem:[#allocation2 + $0x161] sm:$0x1] %vm180, 0.0
      %214 = vst.msk [vmem:[#allocation2 + $0x179] sm:$0x1] %vm180, 0.0
      %215 = vst.msk [vmem:[#allocation2 + $0x191] sm:$0x1] %vm180, 0.0
      %216 = vst.msk [vmem:[#allocation2 + $0x1a9] sm:$0x1] %vm180, 0.0
      %v217 = vld [vmem:[%s165] sm:$0xff]
      %v218 = vld [vmem:[%s165 + $0x8] sm:$0xff]
      %v219 = vld [vmem:[%s165 + $0x10] sm:$0xff]
      %v220 = vld [vmem:[%s165 + $0x18] sm:$0xff]
      %v221 = vld [vmem:[%s165 + $0x20] sm:$0xff]
      %v222 = vld [vmem:[%s165 + $0x28] sm:$0xff]
      %v223 = vld [vmem:[%s165 + $0x30] sm:$0xff]
      %v224 = vld [vmem:[%s165 + $0x38] sm:$0xff]
      %v225 = vld [vmem:[%s165 + $0x40] sm:$0xff]
      %v226 = vld [vmem:[%s165 + $0x48] sm:$0xff]
      %v227 = vld [vmem:[%s165 + $0x50] sm:$0xff]
      %v228 = vld [vmem:[%s165 + $0x58] sm:$0xff]
      %v229 = vld [vmem:[%s165 + $0x60] sm:$0xff]
      %v230 = vld [vmem:[%s165 + $0x68] sm:$0xff]
      %v231 = vld [vmem:[%s165 + $0x70] sm:$0xff]
      %v232 = vld [vmem:[%s165 + $0x78] sm:$0xff]
      %v233 = vld [vmem:[%s165 + $0x80] sm:$0xff]
      %v234 = vld [vmem:[%s165 + $0x88] sm:$0xff]
      %v235 = vld [vmem:[%s165 + $0x90] sm:$0xff]
      %v236 = vld [vmem:[%s165 + $0x98] sm:$0xff]
      %v237 = vld [vmem:[%s165 + $0xa0] sm:$0xff]
      %v238 = vld [vmem:[%s165 + $0xa8] sm:$0xff]
      %v239 = vld [vmem:[%s165 + $0xb0] sm:$0xff]
      %v240 = vld [vmem:[%s165 + $0xb8] sm:$0xff]
      %v241 = vld [vmem:[%s165 + $0xc0] sm:$0xff]
      %v242 = vld [vmem:[%s165 + $0xc8] sm:$0xff]
      %v243 = vld [vmem:[%s165 + $0xd0] sm:$0xff]
      %v244 = vld [vmem:[%s165 + $0xd8] sm:$0xff]
      %v245 = vld [vmem:[%s165 + $0xe0] sm:$0xff]
      %v246 = vld [vmem:[%s165 + $0xe8] sm:$0xff]
      %v247 = vld [vmem:[%s165 + $0xf0] sm:$0xff]
      %v248 = vld [vmem:[%s165 + $0xf8] sm:$0xff]
      %s249 = scalar_lea.vmem [#allocation2], 24
      %250 = vst.msk [vmem:[%s249 + $0x1] sm:$0xff] %vm171, %v217
      %251 = vst.msk [vmem:[%s249 + $0x9] sm:$0xff] %vm171, %v218
      %252 = vst.msk [vmem:[%s249 + $0x19] sm:$0xff] %vm171, %v219
      %253 = vst.msk [vmem:[%s249 + $0x21] sm:$0xff] %vm171, %v220
      %254 = vst.msk [vmem:[%s249 + $0x31] sm:$0xff] %vm171, %v221
      %255 = vst.msk [vmem:[%s249 + $0x39] sm:$0xff] %vm171, %v222
      %256 = vst.msk [vmem:[%s249 + $0x49] sm:$0xff] %vm171, %v223
      %257 = vst.msk [vmem:[%s249 + $0x51] sm:$0xff] %vm171, %v224
      %258 = vst.msk [vmem:[%s249 + $0x61] sm:$0xff] %vm171, %v225
      %259 = vst.msk [vmem:[%s249 + $0x69] sm:$0xff] %vm171, %v226
      %260 = vst.msk [vmem:[%s249 + $0x79] sm:$0xff] %vm171, %v227
      %261 = vst.msk [vmem:[%s249 + $0x81] sm:$0xff] %vm171, %v228
      %262 = vst.msk [vmem:[%s249 + $0x91] sm:$0xff] %vm171, %v229
      %263 = vst.msk [vmem:[%s249 + $0x99] sm:$0xff] %vm171, %v230
      %264 = vst.msk [vmem:[%s249 + $0xa9] sm:$0xff] %vm171, %v231
      %265 = vst.msk [vmem:[%s249 + $0xb1] sm:$0xff] %vm171, %v232
      %266 = vst.msk [vmem:[%s249 + $0xc1] sm:$0xff] %vm171, %v233
      %267 = vst.msk [vmem:[%s249 + $0xc9] sm:$0xff] %vm171, %v234
      %268 = vst.msk [vmem:[%s249 + $0xd9] sm:$0xff] %vm171, %v235
      %269 = vst.msk [vmem:[%s249 + $0xe1] sm:$0xff] %vm171, %v236
      %270 = vst.msk [vmem:[%s249 + $0xf1] sm:$0xff] %vm171, %v237
      %271 = vst.msk [vmem:[%s249 + $0xf9] sm:$0xff] %vm171, %v238
      %272 = vst.msk [vmem:[%s249 + $0x109] sm:$0xff] %vm171, %v239
      %273 = vst.msk [vmem:[%s249 + $0x111] sm:$0xff] %vm171, %v240
      %274 = vst.msk [vmem:[%s249 + $0x121] sm:$0xff] %vm171, %v241
      %275 = vst.msk [vmem:[%s249 + $0x129] sm:$0xff] %vm171, %v242
      %276 = vst.msk [vmem:[%s249 + $0x139] sm:$0xff] %vm171, %v243
      %277 = vst.msk [vmem:[%s249 + $0x141] sm:$0xff] %vm171, %v244
      %278 = vst.msk [vmem:[%s249 + $0x151] sm:$0xff] %vm171, %v245
      %279 = vst.msk [vmem:[%s249 + $0x159] sm:$0xff] %vm171, %v246
      %280 = vst.msk [vmem:[%s249 + $0x169] sm:$0xff] %vm171, %v247
      %281 = vst.msk [vmem:[%s249 + $0x171] sm:$0xff] %vm171, %v248
      %v282 = vld [vmem:[#allocation2] sm:$0xff]
      %v283 = vld [vmem:[#allocation2 + $0x8] sm:$0xff]
      %v284 = vld [vmem:[#allocation2 + $0x18] sm:$0xff]
      %v285 = vld [vmem:[#allocation2 + $0x20] sm:$0xff]
      %v286 = vld [vmem:[#allocation2 + $0x30] sm:$0xff]
      %v287 = vld [vmem:[#allocation2 + $0x38] sm:$0xff]
      %v288 = vld [vmem:[#allocation2 + $0x48] sm:$0xff]
      %v289 = vld [vmem:[#allocation2 + $0x50] sm:$0xff]
      %v290 = vld [vmem:[#allocation2 + $0x60] sm:$0xff]
      %v291 = vld [vmem:[#allocation2 + $0x68] sm:$0xff]
      %v292 = vld [vmem:[#allocation2 + $0x78] sm:$0xff]
      %v293 = vld [vmem:[#allocation2 + $0x80] sm:$0xff]
      %v294 = vld [vmem:[#allocation2 + $0x90] sm:$0xff]
      %v295 = vld [vmem:[#allocation2 + $0x98] sm:$0xff]
      %v296 = vld [vmem:[#allocation2 + $0xa8] sm:$0xff]
      %v297 = vld [vmem:[#allocation2 + $0xb0] sm:$0xff]
      %v298 = vld [vmem:[#allocation2 + $0xc0] sm:$0xff]
      %v299 = vld [vmem:[#allocation2 + $0xc8] sm:$0xff]
      %v300 = vld [vmem:[#allocation2 + $0xd8] sm:$0xff]
      %v301 = vld [vmem:[#allocation2 + $0xe0] sm:$0xff]
      %v302 = vld [vmem:[#allocation2 + $0xf0] sm:$0xff]
      %v303 = vld [vmem:[#allocation2 + $0xf8] sm:$0xff]
      %v304 = vld [vmem:[#allocation2 + $0x108] sm:$0xff]
      %v305 = vld [vmem:[#allocation2 + $0x110] sm:$0xff]
      %v306 = vld [vmem:[#allocation2 + $0x120] sm:$0xff]
      %v307 = vld [vmem:[#allocation2 + $0x128] sm:$0xff]
      %v308 = vld [vmem:[#allocation2 + $0x138] sm:$0xff]
      %v309 = vld [vmem:[#allocation2 + $0x140] sm:$0xff]
      %v310 = vld [vmem:[#allocation2 + $0x150] sm:$0xff]
      %v311 = vld [vmem:[#allocation2 + $0x158] sm:$0xff]
      %v312 = vld [vmem:[#allocation2 + $0x168] sm:$0xff]
      %v313 = vld [vmem:[#allocation2 + $0x170] sm:$0xff]
      %314 = vst.msk [vmem:[#allocation3] sm:$0xff] %vm171, %v282
      %315 = vst.msk [vmem:[#allocation3 + $0x8] sm:$0xff] %vm171, %v283
      %316 = vst.msk [vmem:[#allocation3 + $0x10] sm:$0xff] %vm171, %v284
      %317 = vst.msk [vmem:[#allocation3 + $0x18] sm:$0xff] %vm171, %v285
      %318 = vst.msk [vmem:[#allocation3 + $0x20] sm:$0xff] %vm171, %v286
      %319 = vst.msk [vmem:[#allocation3 + $0x28] sm:$0xff] %vm171, %v287
      %320 = vst.msk [vmem:[#allocation3 + $0x30] sm:$0xff] %vm171, %v288
      %321 = vst.msk [vmem:[#allocation3 + $0x38] sm:$0xff] %vm171, %v289
      %322 = vst.msk [vmem:[#allocation3 + $0x40] sm:$0xff] %vm171, %v290
      %323 = vst.msk [vmem:[#allocation3 + $0x48] sm:$0xff] %vm171, %v291
      %324 = vst.msk [vmem:[#allocation3 + $0x50] sm:$0xff] %vm171, %v292
      %325 = vst.msk [vmem:[#allocation3 + $0x58] sm:$0xff] %vm171, %v293
      %326 = vst.msk [vmem:[#allocation3 + $0x60] sm:$0xff] %vm171, %v294
      %327 = vst.msk [vmem:[#allocation3 + $0x68] sm:$0xff] %vm171, %v295
      %328 = vst.msk [vmem:[#allocation3 + $0x70] sm:$0xff] %vm171, %v296
      %329 = vst.msk [vmem:[#allocation3 + $0x78] sm:$0xff] %vm171, %v297
      %330 = vst.msk [vmem:[#allocation3 + $0x80] sm:$0xff] %vm171, %v298
      %331 = vst.msk [vmem:[#allocation3 + $0x88] sm:$0xff] %vm171, %v299
      %332 = vst.msk [vmem:[#allocation3 + $0x90] sm:$0xff] %vm171, %v300
      %333 = vst.msk [vmem:[#allocation3 + $0x98] sm:$0xff] %vm171, %v301
      %334 = vst.msk [vmem:[#allocation3 + $0xa0] sm:$0xff] %vm171, %v302
      %335 = vst.msk [vmem:[#allocation3 + $0xa8] sm:$0xff] %vm171, %v303
      %336 = vst.msk [vmem:[#allocation3 + $0xb0] sm:$0xff] %vm171, %v304
      %337 = vst.msk [vmem:[#allocation3 + $0xb8] sm:$0xff] %vm171, %v305
      %338 = vst.msk [vmem:[#allocation3 + $0xc0] sm:$0xff] %vm171, %v306
      %339 = vst.msk [vmem:[#allocation3 + $0xc8] sm:$0xff] %vm171, %v307
      %340 = vst.msk [vmem:[#allocation3 + $0xd0] sm:$0xff] %vm171, %v308
      %341 = vst.msk [vmem:[#allocation3 + $0xd8] sm:$0xff] %vm171, %v309
      %342 = vst.msk [vmem:[#allocation3 + $0xe0] sm:$0xff] %vm171, %v310
      %343 = vst.msk [vmem:[#allocation3 + $0xe8] sm:$0xff] %vm171, %v311
      %344 = vst.msk [vmem:[#allocation3 + $0xf0] sm:$0xff] %vm171, %v312
      %345 = vst.msk [vmem:[#allocation3 + $0xf8] sm:$0xff] %vm171, %v313
      %v346 = vld [vmem:[#allocation2 + $0x1] sm:$0xff]
      %v347 = vld [vmem:[#allocation2 + $0x9] sm:$0xff]
      %v348 = vld [vmem:[#allocation2 + $0x19] sm:$0xff]
      %v349 = vld [vmem:[#allocation2 + $0x21] sm:$0xff]
      %v350 = vld [vmem:[#allocation2 + $0x31] sm:$0xff]
      %v351 = vld [vmem:[#allocation2 + $0x39] sm:$0xff]
      %v352 = vld [vmem:[#allocation2 + $0x49] sm:$0xff]
      %v353 = vld [vmem:[#allocation2 + $0x51] sm:$0xff]
      %v354 = vld [vmem:[#allocation2 + $0x61] sm:$0xff]
      %v355 = vld [vmem:[#allocation2 + $0x69] sm:$0xff]
      %v356 = vld [vmem:[#allocation2 + $0x79] sm:$0xff]
      %v357 = vld [vmem:[#allocation2 + $0x81] sm:$0xff]
      %v358 = vld [vmem:[#allocation2 + $0x91] sm:$0xff]
      %v359 = vld [vmem:[#allocation2 + $0x99] sm:$0xff]
      %v360 = vld [vmem:[#allocation2 + $0xa9] sm:$0xff]
      %v361 = vld [vmem:[#allocation2 + $0xb1] sm:$0xff]
      %v362 = vld [vmem:[#allocation2 + $0xc1] sm:$0xff]
      %v363 = vld [vmem:[#allocation2 + $0xc9] sm:$0xff]
      %v364 = vld [vmem:[#allocation2 + $0xd9] sm:$0xff]
      %v365 = vld [vmem:[#allocation2 + $0xe1] sm:$0xff]
      %v366 = vld [vmem:[#allocation2 + $0xf1] sm:$0xff]
      %v367 = vld [vmem:[#allocation2 + $0xf9] sm:$0xff]
      %v368 = vld [vmem:[#allocation2 + $0x109] sm:$0xff]
      %v369 = vld [vmem:[#allocation2 + $0x111] sm:$0xff]
      %v370 = vld [vmem:[#allocation2 + $0x121] sm:$0xff]
      %v371 = vld [vmem:[#allocation2 + $0x129] sm:$0xff]
      %v372 = vld [vmem:[#allocation2 + $0x139] sm:$0xff]
      %v373 = vld [vmem:[#allocation2 + $0x141] sm:$0xff]
      %v374 = vld [vmem:[#allocation2 + $0x151] sm:$0xff]
      %v375 = vld [vmem:[#allocation2 + $0x159] sm:$0xff]
      %v376 = vld [vmem:[#allocation2 + $0x169] sm:$0xff]
      %v377 = vld [vmem:[#allocation2 + $0x171] sm:$0xff]
      %410 = vrot.lane.b32.xlu0 %v346, 4
      %v411 = vpop.permute.xlu0 %410
      %412 = vrot.lane.b32.xlu0 %v347, 4
      %v413 = vpop.permute.xlu0 %412
      %414 = vrot.lane.b32.xlu0 %v348, 4
      %v415 = vpop.permute.xlu0 %414
      %416 = vrot.lane.b32.xlu0 %v349, 4
      %v417 = vpop.permute.xlu0 %416
      %418 = vrot.lane.b32.xlu0 %v350, 4
      %v419 = vpop.permute.xlu0 %418
      %420 = vrot.lane.b32.xlu0 %v351, 4
      %v421 = vpop.permute.xlu0 %420
      %422 = vrot.lane.b32.xlu0 %v352, 4
      %v423 = vpop.permute.xlu0 %422
      %424 = vrot.lane.b32.xlu0 %v353, 4
      %v425 = vpop.permute.xlu0 %424
      %426 = vrot.lane.b32.xlu0 %v354, 4
      %v427 = vpop.permute.xlu0 %426
      %428 = vrot.lane.b32.xlu0 %v355, 4
      %v429 = vpop.permute.xlu0 %428
      %430 = vrot.lane.b32.xlu0 %v356, 4
      %v431 = vpop.permute.xlu0 %430
      %432 = vrot.lane.b32.xlu0 %v357, 4
      %v433 = vpop.permute.xlu0 %432
      %434 = vrot.lane.b32.xlu0 %v358, 4
      %v435 = vpop.permute.xlu0 %434
      %436 = vrot.lane.b32.xlu0 %v359, 4
      %v437 = vpop.permute.xlu0 %436
      %438 = vrot.lane.b32.xlu0 %v360, 4
      %v439 = vpop.permute.xlu0 %438
      %440 = vrot.lane.b32.xlu0 %v361, 4
      %v441 = vpop.permute.xlu0 %440
      %442 = vrot.lane.b32.xlu0 %v362, 4
      %v443 = vpop.permute.xlu0 %442
      %444 = vrot.lane.b32.xlu0 %v363, 4
      %v445 = vpop.permute.xlu0 %444
      %446 = vrot.lane.b32.xlu0 %v364, 4
      %v447 = vpop.permute.xlu0 %446
      %448 = vrot.lane.b32.xlu0 %v365, 4
      %v449 = vpop.permute.xlu0 %448
      %450 = vrot.lane.b32.xlu0 %v366, 4
      %v451 = vpop.permute.xlu0 %450
      %452 = vrot.lane.b32.xlu0 %v367, 4
      %v453 = vpop.permute.xlu0 %452
      %454 = vrot.lane.b32.xlu0 %v368, 4
      %v455 = vpop.permute.xlu0 %454
      %456 = vrot.lane.b32.xlu0 %v369, 4
      %v457 = vpop.permute.xlu0 %456
      %458 = vrot.lane.b32.xlu0 %v370, 4
      %v459 = vpop.permute.xlu0 %458
      %460 = vrot.lane.b32.xlu0 %v371, 4
      %v461 = vpop.permute.xlu0 %460
      %462 = vrot.lane.b32.xlu0 %v372, 4
      %v463 = vpop.permute.xlu0 %462
      %464 = vrot.lane.b32.xlu0 %v373, 4
      %v465 = vpop.permute.xlu0 %464
      %466 = vrot.lane.b32.xlu0 %v374, 4
      %v467 = vpop.permute.xlu0 %466
      %468 = vrot.lane.b32.xlu0 %v375, 4
      %v469 = vpop.permute.xlu0 %468
      %470 = vrot.lane.b32.xlu0 %v376, 4
      %v471 = vpop.permute.xlu0 %470
      %472 = vrot.lane.b32.xlu0 %v377, 4
      %v473 = vpop.permute.xlu0 %472
      %vm506 = vcmask 64544
      %507 = vst.msk [vmem:[#allocation3] sm:$0xff] %vm506, %v411
      %508 = vst.msk [vmem:[#allocation3 + $0x8] sm:$0xff] %vm506, %v413
      %509 = vst.msk [vmem:[#allocation3 + $0x10] sm:$0xff] %vm506, %v415
      %510 = vst.msk [vmem:[#allocation3 + $0x18] sm:$0xff] %vm506, %v417
      %511 = vst.msk [vmem:[#allocation3 + $0x20] sm:$0xff] %vm506, %v419
      %512 = vst.msk [vmem:[#allocation3 + $0x28] sm:$0xff] %vm506, %v421
      %513 = vst.msk [vmem:[#allocation3 + $0x30] sm:$0xff] %vm506, %v423
      %514 = vst.msk [vmem:[#allocation3 + $0x38] sm:$0xff] %vm506, %v425
      %515 = vst.msk [vmem:[#allocation3 + $0x40] sm:$0xff] %vm506, %v427
      %516 = vst.msk [vmem:[#allocation3 + $0x48] sm:$0xff] %vm506, %v429
      %517 = vst.msk [vmem:[#allocation3 + $0x50] sm:$0xff] %vm506, %v431
      %518 = vst.msk [vmem:[#allocation3 + $0x58] sm:$0xff] %vm506, %v433
      %519 = vst.msk [vmem:[#allocation3 + $0x60] sm:$0xff] %vm506, %v435
      %520 = vst.msk [vmem:[#allocation3 + $0x68] sm:$0xff] %vm506, %v437
      %521 = vst.msk [vmem:[#allocation3 + $0x70] sm:$0xff] %vm506, %v439
      %522 = vst.msk [vmem:[#allocation3 + $0x78] sm:$0xff] %vm506, %v441
      %523 = vst.msk [vmem:[#allocation3 + $0x80] sm:$0xff] %vm506, %v443
      %524 = vst.msk [vmem:[#allocation3 + $0x88] sm:$0xff] %vm506, %v445
      %525 = vst.msk [vmem:[#allocation3 + $0x90] sm:$0xff] %vm506, %v447
      %526 = vst.msk [vmem:[#allocation3 + $0x98] sm:$0xff] %vm506, %v449
      %527 = vst.msk [vmem:[#allocation3 + $0xa0] sm:$0xff] %vm506, %v451
      %528 = vst.msk [vmem:[#allocation3 + $0xa8] sm:$0xff] %vm506, %v453
      %529 = vst.msk [vmem:[#allocation3 + $0xb0] sm:$0xff] %vm506, %v455
      %530 = vst.msk [vmem:[#allocation3 + $0xb8] sm:$0xff] %vm506, %v457
      %531 = vst.msk [vmem:[#allocation3 + $0xc0] sm:$0xff] %vm506, %v459
      %532 = vst.msk [vmem:[#allocation3 + $0xc8] sm:$0xff] %vm506, %v461
      %533 = vst.msk [vmem:[#allocation3 + $0xd0] sm:$0xff] %vm506, %v463
      %534 = vst.msk [vmem:[#allocation3 + $0xd8] sm:$0xff] %vm506, %v465
      %535 = vst.msk [vmem:[#allocation3 + $0xe0] sm:$0xff] %vm506, %v467
      %536 = vst.msk [vmem:[#allocation3 + $0xe8] sm:$0xff] %vm506, %v469
      %537 = vst.msk [vmem:[#allocation3 + $0xf0] sm:$0xff] %vm506, %v471
      %538 = vst.msk [vmem:[#allocation3 + $0xf8] sm:$0xff] %vm506, %v473
      %v539 = vld [vmem:[#allocation2 + $0x2] sm:$0xff]
      %v540 = vld [vmem:[#allocation2 + $0xa] sm:$0xff]
      %v541 = vld [vmem:[#allocation2 + $0x1a] sm:$0xff]
      %v542 = vld [vmem:[#allocation2 + $0x22] sm:$0xff]
      %v543 = vld [vmem:[#allocation2 + $0x32] sm:$0xff]
      %v544 = vld [vmem:[#allocation2 + $0x3a] sm:$0xff]
      %v545 = vld [vmem:[#allocation2 + $0x4a] sm:$0xff]
      %v546 = vld [vmem:[#allocation2 + $0x52] sm:$0xff]
      %v547 = vld [vmem:[#allocation2 + $0x62] sm:$0xff]
      %v548 = vld [vmem:[#allocation2 + $0x6a] sm:$0xff]
      %v549 = vld [vmem:[#allocation2 + $0x7a] sm:$0xff]
      %v550 = vld [vmem:[#allocation2 + $0x82] sm:$0xff]
      %v551 = vld [vmem:[#allocation2 + $0x92] sm:$0xff]
      %v552 = vld [vmem:[#allocation2 + $0x9a] sm:$0xff]
      %v553 = vld [vmem:[#allocation2 + $0xaa] sm:$0xff]
      %v554 = vld [vmem:[#allocation2 + $0xb2] sm:$0xff]
      %v555 = vld [vmem:[#allocation2 + $0xc2] sm:$0xff]
      %v556 = vld [vmem:[#allocation2 + $0xca] sm:$0xff]
      %v557 = vld [vmem:[#allocation2 + $0xda] sm:$0xff]
      %v558 = vld [vmem:[#allocation2 + $0xe2] sm:$0xff]
      %v559 = vld [vmem:[#allocation2 + $0xf2] sm:$0xff]
      %v560 = vld [vmem:[#allocation2 + $0xfa] sm:$0xff]
      %v561 = vld [vmem:[#allocation2 + $0x10a] sm:$0xff]
      %v562 = vld [vmem:[#allocation2 + $0x112] sm:$0xff]
      %v563 = vld [vmem:[#allocation2 + $0x122] sm:$0xff]
      %v564 = vld [vmem:[#allocation2 + $0x12a] sm:$0xff]
      %v565 = vld [vmem:[#allocation2 + $0x13a] sm:$0xff]
      %v566 = vld [vmem:[#allocation2 + $0x142] sm:$0xff]
      %v567 = vld [vmem:[#allocation2 + $0x152] sm:$0xff]
      %v568 = vld [vmem:[#allocation2 + $0x15a] sm:$0xff]
      %v569 = vld [vmem:[#allocation2 + $0x16a] sm:$0xff]
      %v570 = vld [vmem:[#allocation2 + $0x172] sm:$0xff]
      %603 = vrot.lane.b32.xlu0 %v539, 8
      %v604 = vpop.permute.xlu0 %603
      %605 = vrot.lane.b32.xlu0 %v540, 8
      %v606 = vpop.permute.xlu0 %605
      %607 = vrot.lane.b32.xlu0 %v541, 8
      %v608 = vpop.permute.xlu0 %607
      %609 = vrot.lane.b32.xlu0 %v542, 8
      %v610 = vpop.permute.xlu0 %609
      %611 = vrot.lane.b32.xlu0 %v543, 8
      %v612 = vpop.permute.xlu0 %611
      %613 = vrot.lane.b32.xlu0 %v544, 8
      %v614 = vpop.permute.xlu0 %613
      %615 = vrot.lane.b32.xlu0 %v545, 8
      %v616 = vpop.permute.xlu0 %615
      %617 = vrot.lane.b32.xlu0 %v546, 8
      %v618 = vpop.permute.xlu0 %617
      %619 = vrot.lane.b32.xlu0 %v547, 8
      %v620 = vpop.permute.xlu0 %619
      %621 = vrot.lane.b32.xlu0 %v548, 8
      %v622 = vpop.permute.xlu0 %621
      %623 = vrot.lane.b32.xlu0 %v549, 8
      %v624 = vpop.permute.xlu0 %623
      %625 = vrot.lane.b32.xlu0 %v550, 8
      %v626 = vpop.permute.xlu0 %625
      %627 = vrot.lane.b32.xlu0 %v551, 8
      %v628 = vpop.permute.xlu0 %627
      %629 = vrot.lane.b32.xlu0 %v552, 8
      %v630 = vpop.permute.xlu0 %629
      %631 = vrot.lane.b32.xlu0 %v553, 8
      %v632 = vpop.permute.xlu0 %631
      %633 = vrot.lane.b32.xlu0 %v554, 8
      %v634 = vpop.permute.xlu0 %633
      %635 = vrot.lane.b32.xlu0 %v555, 8
      %v636 = vpop.permute.xlu0 %635
      %637 = vrot.lane.b32.xlu0 %v556, 8
      %v638 = vpop.permute.xlu0 %637
      %639 = vrot.lane.b32.xlu0 %v557, 8
      %v640 = vpop.permute.xlu0 %639
      %641 = vrot.lane.b32.xlu0 %v558, 8
      %v642 = vpop.permute.xlu0 %641
      %643 = vrot.lane.b32.xlu0 %v559, 8
      %v644 = vpop.permute.xlu0 %643
      %645 = vrot.lane.b32.xlu0 %v560, 8
      %v646 = vpop.permute.xlu0 %645
      %647 = vrot.lane.b32.xlu0 %v561, 8
      %v648 = vpop.permute.xlu0 %647
      %649 = vrot.lane.b32.xlu0 %v562, 8
      %v650 = vpop.permute.xlu0 %649
      %651 = vrot.lane.b32.xlu0 %v563, 8
      %v652 = vpop.permute.xlu0 %651
      %653 = vrot.lane.b32.xlu0 %v564, 8
      %v654 = vpop.permute.xlu0 %653
      %655 = vrot.lane.b32.xlu0 %v565, 8
      %v656 = vpop.permute.xlu0 %655
      %657 = vrot.lane.b32.xlu0 %v566, 8
      %v658 = vpop.permute.xlu0 %657
      %659 = vrot.lane.b32.xlu0 %v567, 8
      %v660 = vpop.permute.xlu0 %659
      %661 = vrot.lane.b32.xlu0 %v568, 8
      %v662 = vpop.permute.xlu0 %661
      %663 = vrot.lane.b32.xlu0 %v569, 8
      %v664 = vpop.permute.xlu0 %663
      %665 = vrot.lane.b32.xlu0 %v570, 8
      %v666 = vpop.permute.xlu0 %665
      %vm699 = vcmask 97344
      %700 = vst.msk [vmem:[#allocation3] sm:$0xff] %vm699, %v604
      %701 = vst.msk [vmem:[#allocation3 + $0x8] sm:$0xff] %vm699, %v606
      %702 = vst.msk [vmem:[#allocation3 + $0x10] sm:$0xff] %vm699, %v608
      %703 = vst.msk [vmem:[#allocation3 + $0x18] sm:$0xff] %vm699, %v610
      %704 = vst.msk [vmem:[#allocation3 + $0x20] sm:$0xff] %vm699, %v612
      %705 = vst.msk [vmem:[#allocation3 + $0x28] sm:$0xff] %vm699, %v614
      %706 = vst.msk [vmem:[#allocation3 + $0x30] sm:$0xff] %vm699, %v616
      %707 = vst.msk [vmem:[#allocation3 + $0x38] sm:$0xff] %vm699, %v618
      %708 = vst.msk [vmem:[#allocation3 + $0x40] sm:$0xff] %vm699, %v620
      %709 = vst.msk [vmem:[#allocation3 + $0x48] sm:$0xff] %vm699, %v622
      %710 = vst.msk [vmem:[#allocation3 + $0x50] sm:$0xff] %vm699, %v624
      %711 = vst.msk [vmem:[#allocation3 + $0x58] sm:$0xff] %vm699, %v626
      %712 = vst.msk [vmem:[#allocation3 + $0x60] sm:$0xff] %vm699, %v628
      %713 = vst.msk [vmem:[#allocation3 + $0x68] sm:$0xff] %vm699, %v630
      %714 = vst.msk [vmem:[#allocation3 + $0x70] sm:$0xff] %vm699, %v632
      %715 = vst.msk [vmem:[#allocation3 + $0x78] sm:$0xff] %vm699, %v634
      %716 = vst.msk [vmem:[#allocation3 + $0x80] sm:$0xff] %vm699, %v636
      %717 = vst.msk [vmem:[#allocation3 + $0x88] sm:$0xff] %vm699, %v638
      %718 = vst.msk [vmem:[#allocation3 + $0x90] sm:$0xff] %vm699, %v640
      %719 = vst.msk [vmem:[#allocation3 + $0x98] sm:$0xff] %vm699, %v642
      %720 = vst.msk [vmem:[#allocation3 + $0xa0] sm:$0xff] %vm699, %v644
      %721 = vst.msk [vmem:[#allocation3 + $0xa8] sm:$0xff] %vm699, %v646
      %722 = vst.msk [vmem:[#allocation3 + $0xb0] sm:$0xff] %vm699, %v648
      %723 = vst.msk [vmem:[#allocation3 + $0xb8] sm:$0xff] %vm699, %v650
      %724 = vst.msk [vmem:[#allocation3 + $0xc0] sm:$0xff] %vm699, %v652
      %725 = vst.msk [vmem:[#allocation3 + $0xc8] sm:$0xff] %vm699, %v654
      %726 = vst.msk [vmem:[#allocation3 + $0xd0] sm:$0xff] %vm699, %v656
      %727 = vst.msk [vmem:[#allocation3 + $0xd8] sm:$0xff] %vm699, %v658
      %728 = vst.msk [vmem:[#allocation3 + $0xe0] sm:$0xff] %vm699, %v660
      %729 = vst.msk [vmem:[#allocation3 + $0xe8] sm:$0xff] %vm699, %v662
      %730 = vst.msk [vmem:[#allocation3 + $0xf0] sm:$0xff] %vm699, %v664
      %731 = vst.msk [vmem:[#allocation3 + $0xf8] sm:$0xff] %vm699, %v666
      %v732 = vld [vmem:[%s249] sm:$0xff]
      %v733 = vld [vmem:[%s249 + $0x8] sm:$0xff]
      %v734 = vld [vmem:[%s249 + $0x18] sm:$0xff]
      %v735 = vld [vmem:[%s249 + $0x20] sm:$0xff]
      %v736 = vld [vmem:[%s249 + $0x30] sm:$0xff]
      %v737 = vld [vmem:[%s249 + $0x38] sm:$0xff]
      %v738 = vld [vmem:[%s249 + $0x48] sm:$0xff]
      %v739 = vld [vmem:[%s249 + $0x50] sm:$0xff]
      %v740 = vld [vmem:[%s249 + $0x60] sm:$0xff]
      %v741 = vld [vmem:[%s249 + $0x68] sm:$0xff]
      %v742 = vld [vmem:[%s249 + $0x78] sm:$0xff]
      %v743 = vld [vmem:[%s249 + $0x80] sm:$0xff]
      %v744 = vld [vmem:[%s249 + $0x90] sm:$0xff]
      %v745 = vld [vmem:[%s249 + $0x98] sm:$0xff]
      %v746 = vld [vmem:[%s249 + $0xa8] sm:$0xff]
      %v747 = vld [vmem:[%s249 + $0xb0] sm:$0xff]
      %v748 = vld [vmem:[%s249 + $0xc0] sm:$0xff]
      %v749 = vld [vmem:[%s249 + $0xc8] sm:$0xff]
      %v750 = vld [vmem:[%s249 + $0xd8] sm:$0xff]
      %v751 = vld [vmem:[%s249 + $0xe0] sm:$0xff]
      %v752 = vld [vmem:[%s249 + $0xf0] sm:$0xff]
      %v753 = vld [vmem:[%s249 + $0xf8] sm:$0xff]
      %v754 = vld [vmem:[%s249 + $0x108] sm:$0xff]
      %v755 = vld [vmem:[%s249 + $0x110] sm:$0xff]
      %v756 = vld [vmem:[%s249 + $0x120] sm:$0xff]
      %v757 = vld [vmem:[%s249 + $0x128] sm:$0xff]
      %v758 = vld [vmem:[%s249 + $0x138] sm:$0xff]
      %v759 = vld [vmem:[%s249 + $0x140] sm:$0xff]
      %v760 = vld [vmem:[%s249 + $0x150] sm:$0xff]
      %v761 = vld [vmem:[%s249 + $0x158] sm:$0xff]
      %v762 = vld [vmem:[%s249 + $0x168] sm:$0xff]
      %v763 = vld [vmem:[%s249 + $0x170] sm:$0xff]
      %796 = vrot.lane.b32.xlu0 %v732, 12
      %v797 = vpop.permute.xlu0 %796
      %798 = vrot.lane.b32.xlu0 %v733, 12
      %v799 = vpop.permute.xlu0 %798
      %800 = vrot.lane.b32.xlu0 %v734, 12
      %v801 = vpop.permute.xlu0 %800
      %802 = vrot.lane.b32.xlu0 %v735, 12
      %v803 = vpop.permute.xlu0 %802
      %804 = vrot.lane.b32.xlu0 %v736, 12
      %v805 = vpop.permute.xlu0 %804
      %806 = vrot.lane.b32.xlu0 %v737, 12
      %v807 = vpop.permute.xlu0 %806
      %808 = vrot.lane.b32.xlu0 %v738, 12
      %v809 = vpop.permute.xlu0 %808
      %810 = vrot.lane.b32.xlu0 %v739, 12
      %v811 = vpop.permute.xlu0 %810
      %812 = vrot.lane.b32.xlu0 %v740, 12
      %v813 = vpop.permute.xlu0 %812
      %814 = vrot.lane.b32.xlu0 %v741, 12
      %v815 = vpop.permute.xlu0 %814
      %816 = vrot.lane.b32.xlu0 %v742, 12
      %v817 = vpop.permute.xlu0 %816
      %818 = vrot.lane.b32.xlu0 %v743, 12
      %v819 = vpop.permute.xlu0 %818
      %820 = vrot.lane.b32.xlu0 %v744, 12
      %v821 = vpop.permute.xlu0 %820
      %822 = vrot.lane.b32.xlu0 %v745, 12
      %v823 = vpop.permute.xlu0 %822
      %824 = vrot.lane.b32.xlu0 %v746, 12
      %v825 = vpop.permute.xlu0 %824
      %826 = vrot.lane.b32.xlu0 %v747, 12
      %v827 = vpop.permute.xlu0 %826
      %828 = vrot.lane.b32.xlu0 %v748, 12
      %v829 = vpop.permute.xlu0 %828
      %830 = vrot.lane.b32.xlu0 %v749, 12
      %v831 = vpop.permute.xlu0 %830
      %832 = vrot.lane.b32.xlu0 %v750, 12
      %v833 = vpop.permute.xlu0 %832
      %834 = vrot.lane.b32.xlu0 %v751, 12
      %v835 = vpop.permute.xlu0 %834
      %836 = vrot.lane.b32.xlu0 %v752, 12
      %v837 = vpop.permute.xlu0 %836
      %838 = vrot.lane.b32.xlu0 %v753, 12
      %v839 = vpop.permute.xlu0 %838
      %840 = vrot.lane.b32.xlu0 %v754, 12
      %v841 = vpop.permute.xlu0 %840
      %842 = vrot.lane.b32.xlu0 %v755, 12
      %v843 = vpop.permute.xlu0 %842
      %844 = vrot.lane.b32.xlu0 %v756, 12
      %v845 = vpop.permute.xlu0 %844
      %846 = vrot.lane.b32.xlu0 %v757, 12
      %v847 = vpop.permute.xlu0 %846
      %848 = vrot.lane.b32.xlu0 %v758, 12
      %v849 = vpop.permute.xlu0 %848
      %850 = vrot.lane.b32.xlu0 %v759, 12
      %v851 = vpop.permute.xlu0 %850
      %852 = vrot.lane.b32.xlu0 %v760, 12
      %v853 = vpop.permute.xlu0 %852
      %854 = vrot.lane.b32.xlu0 %v761, 12
      %v855 = vpop.permute.xlu0 %854
      %856 = vrot.lane.b32.xlu0 %v762, 12
      %v857 = vpop.permute.xlu0 %856
      %858 = vrot.lane.b32.xlu0 %v763, 12
      %v859 = vpop.permute.xlu0 %858
      %vm892 = vcmask 130144
      %893 = vst.msk [vmem:[#allocation3] sm:$0xff] %vm892, %v797
      %894 = vst.msk [vmem:[#allocation3 + $0x8] sm:$0xff] %vm892, %v799
      %895 = vst.msk [vmem:[#allocation3 + $0x10] sm:$0xff] %vm892, %v801
      %896 = vst.msk [vmem:[#allocation3 + $0x18] sm:$0xff] %vm892, %v803
      %897 = vst.msk [vmem:[#allocation3 + $0x20] sm:$0xff] %vm892, %v805
      %898 = vst.msk [vmem:[#allocation3 + $0x28] sm:$0xff] %vm892, %v807
      %899 = vst.msk [vmem:[#allocation3 + $0x30] sm:$0xff] %vm892, %v809
      %900 = vst.msk [vmem:[#allocation3 + $0x38] sm:$0xff] %vm892, %v811
      %901 = vst.msk [vmem:[#allocation3 + $0x40] sm:$0xff] %vm892, %v813
      %902 = vst.msk [vmem:[#allocation3 + $0x48] sm:$0xff] %vm892, %v815
      %903 = vst.msk [vmem:[#allocation3 + $0x50] sm:$0xff] %vm892, %v817
      %904 = vst.msk [vmem:[#allocation3 + $0x58] sm:$0xff] %vm892, %v819
      %905 = vst.msk [vmem:[#allocation3 + $0x60] sm:$0xff] %vm892, %v821
      %906 = vst.msk [vmem:[#allocation3 + $0x68] sm:$0xff] %vm892, %v823
      %907 = vst.msk [vmem:[#allocation3 + $0x70] sm:$0xff] %vm892, %v825
      %908 = vst.msk [vmem:[#allocation3 + $0x78] sm:$0xff] %vm892, %v827
      %909 = vst.msk [vmem:[#allocation3 + $0x80] sm:$0xff] %vm892, %v829
      %910 = vst.msk [vmem:[#allocation3 + $0x88] sm:$0xff] %vm892, %v831
      %911 = vst.msk [vmem:[#allocation3 + $0x90] sm:$0xff] %vm892, %v833
      %912 = vst.msk [vmem:[#allocation3 + $0x98] sm:$0xff] %vm892, %v835
      %913 = vst.msk [vmem:[#allocation3 + $0xa0] sm:$0xff] %vm892, %v837
      %914 = vst.msk [vmem:[#allocation3 + $0xa8] sm:$0xff] %vm892, %v839
      %915 = vst.msk [vmem:[#allocation3 + $0xb0] sm:$0xff] %vm892, %v841
      %916 = vst.msk [vmem:[#allocation3 + $0xb8] sm:$0xff] %vm892, %v843
      %917 = vst.msk [vmem:[#allocation3 + $0xc0] sm:$0xff] %vm892, %v845
      %918 = vst.msk [vmem:[#allocation3 + $0xc8] sm:$0xff] %vm892, %v847
      %919 = vst.msk [vmem:[#allocation3 + $0xd0] sm:$0xff] %vm892, %v849
      %920 = vst.msk [vmem:[#allocation3 + $0xd8] sm:$0xff] %vm892, %v851
      %921 = vst.msk [vmem:[#allocation3 + $0xe0] sm:$0xff] %vm892, %v853
      %922 = vst.msk [vmem:[#allocation3 + $0xe8] sm:$0xff] %vm892, %v855
      %923 = vst.msk [vmem:[#allocation3 + $0xf0] sm:$0xff] %vm892, %v857
      %924 = vst.msk [vmem:[#allocation3 + $0xf8] sm:$0xff] %vm892, %v859
      %v925 = vld [vmem:[%s249 + $0x1] sm:$0xff]
      %v926 = vld [vmem:[%s249 + $0x9] sm:$0xff]
      %v927 = vld [vmem:[%s249 + $0x19] sm:$0xff]
      %v928 = vld [vmem:[%s249 + $0x21] sm:$0xff]
      %v929 = vld [vmem:[%s249 + $0x31] sm:$0xff]
      %v930 = vld [vmem:[%s249 + $0x39] sm:$0xff]
      %v931 = vld [vmem:[%s249 + $0x49] sm:$0xff]
      %v932 = vld [vmem:[%s249 + $0x51] sm:$0xff]
      %v933 = vld [vmem:[%s249 + $0x61] sm:$0xff]
      %v934 = vld [vmem:[%s249 + $0x69] sm:$0xff]
      %v935 = vld [vmem:[%s249 + $0x79] sm:$0xff]
      %v936 = vld [vmem:[%s249 + $0x81] sm:$0xff]
      %v937 = vld [vmem:[%s249 + $0x91] sm:$0xff]
      %v938 = vld [vmem:[%s249 + $0x99] sm:$0xff]
      %v939 = vld [vmem:[%s249 + $0xa9] sm:$0xff]
      %v940 = vld [vmem:[%s249 + $0xb1] sm:$0xff]
      %v941 = vld [vmem:[%s249 + $0xc1] sm:$0xff]
      %v942 = vld [vmem:[%s249 + $0xc9] sm:$0xff]
      %v943 = vld [vmem:[%s249 + $0xd9] sm:$0xff]
      %v944 = vld [vmem:[%s249 + $0xe1] sm:$0xff]
      %v945 = vld [vmem:[%s249 + $0xf1] sm:$0xff]
      %v946 = vld [vmem:[%s249 + $0xf9] sm:$0xff]
      %v947 = vld [vmem:[%s249 + $0x109] sm:$0xff]
      %v948 = vld [vmem:[%s249 + $0x111] sm:$0xff]
      %v949 = vld [vmem:[%s249 + $0x121] sm:$0xff]
      %v950 = vld [vmem:[%s249 + $0x129] sm:$0xff]
      %v951 = vld [vmem:[%s249 + $0x139] sm:$0xff]
      %v952 = vld [vmem:[%s249 + $0x141] sm:$0xff]
      %v953 = vld [vmem:[%s249 + $0x151] sm:$0xff]
      %v954 = vld [vmem:[%s249 + $0x159] sm:$0xff]
      %v955 = vld [vmem:[%s249 + $0x169] sm:$0xff]
      %v956 = vld [vmem:[%s249 + $0x171] sm:$0xff]
      %989 = vrot.lane.b32.xlu0 %v925, 16
      %v990 = vpop.permute.xlu0 %989
      %991 = vrot.lane.b32.xlu0 %v926, 16
      %v992 = vpop.permute.xlu0 %991
      %993 = vrot.lane.b32.xlu0 %v927, 16
      %v994 = vpop.permute.xlu0 %993
      %995 = vrot.lane.b32.xlu0 %v928, 16
      %v996 = vpop.permute.xlu0 %995
      %997 = vrot.lane.b32.xlu0 %v929, 16
      %v998 = vpop.permute.xlu0 %997
      %999 = vrot.lane.b32.xlu0 %v930, 16
      %v1000 = vpop.permute.xlu0 %999
      %1001 = vrot.lane.b32.xlu0 %v931, 16
      %v1002 = vpop.permute.xlu0 %1001
      %1003 = vrot.lane.b32.xlu0 %v932, 16
      %v1004 = vpop.permute.xlu0 %1003
      %1005 = vrot.lane.b32.xlu0 %v933, 16
      %v1006 = vpop.permute.xlu0 %1005
      %1007 = vrot.lane.b32.xlu0 %v934, 16
      %v1008 = vpop.permute.xlu0 %1007
      %1009 = vrot.lane.b32.xlu0 %v935, 16
      %v1010 = vpop.permute.xlu0 %1009
      %1011 = vrot.lane.b32.xlu0 %v936, 16
      %v1012 = vpop.permute.xlu0 %1011
      %1013 = vrot.lane.b32.xlu0 %v937, 16
      %v1014 = vpop.permute.xlu0 %1013
      %1015 = vrot.lane.b32.xlu0 %v938, 16
      %v1016 = vpop.permute.xlu0 %1015
      %1017 = vrot.lane.b32.xlu0 %v939, 16
      %v1018 = vpop.permute.xlu0 %1017
      %1019 = vrot.lane.b32.xlu0 %v940, 16
      %v1020 = vpop.permute.xlu0 %1019
      %1021 = vrot.lane.b32.xlu0 %v941, 16
      %v1022 = vpop.permute.xlu0 %1021
      %1023 = vrot.lane.b32.xlu0 %v942, 16
      %v1024 = vpop.permute.xlu0 %1023
      %1025 = vrot.lane.b32.xlu0 %v943, 16
      %v1026 = vpop.permute.xlu0 %1025
      %1027 = vrot.lane.b32.xlu0 %v944, 16
      %v1028 = vpop.permute.xlu0 %1027
      %1029 = vrot.lane.b32.xlu0 %v945, 16
      %v1030 = vpop.permute.xlu0 %1029
      %1031 = vrot.lane.b32.xlu0 %v946, 16
      %v1032 = vpop.permute.xlu0 %1031
      %1033 = vrot.lane.b32.xlu0 %v947, 16
      %v1034 = vpop.permute.xlu0 %1033
      %1035 = vrot.lane.b32.xlu0 %v948, 16
      %v1036 = vpop.permute.xlu0 %1035
      %1037 = vrot.lane.b32.xlu0 %v949, 16
      %v1038 = vpop.permute.xlu0 %1037
      %1039 = vrot.lane.b32.xlu0 %v950, 16
      %v1040 = vpop.permute.xlu0 %1039
      %1041 = vrot.lane.b32.xlu0 %v951, 16
      %v1042 = vpop.permute.xlu0 %1041
      %1043 = vrot.lane.b32.xlu0 %v952, 16
      %v1044 = vpop.permute.xlu0 %1043
      %1045 = vrot.lane.b32.xlu0 %v953, 16
      %v1046 = vpop.permute.xlu0 %1045
      %1047 = vrot.lane.b32.xlu0 %v954, 16
      %v1048 = vpop.permute.xlu0 %1047
      %1049 = vrot.lane.b32.xlu0 %v955, 16
      %v1050 = vpop.permute.xlu0 %1049
      %1051 = vrot.lane.b32.xlu0 %v956, 16
      %v1052 = vpop.permute.xlu0 %1051
      %vm1085 = vcmask 162944
      %1086 = vst.msk [vmem:[#allocation3] sm:$0xff] %vm1085, %v990
      %1087 = vst.msk [vmem:[#allocation3 + $0x8] sm:$0xff] %vm1085, %v992
      %1088 = vst.msk [vmem:[#allocation3 + $0x10] sm:$0xff] %vm1085, %v994
      %1089 = vst.msk [vmem:[#allocation3 + $0x18] sm:$0xff] %vm1085, %v996
      %1090 = vst.msk [vmem:[#allocation3 + $0x20] sm:$0xff] %vm1085, %v998
      %1091 = vst.msk [vmem:[#allocation3 + $0x28] sm:$0xff] %vm1085, %v1000
      %1092 = vst.msk [vmem:[#allocation3 + $0x30] sm:$0xff] %vm1085, %v1002
      %1093 = vst.msk [vmem:[#allocation3 + $0x38] sm:$0xff] %vm1085, %v1004
      %1094 = vst.msk [vmem:[#allocation3 + $0x40] sm:$0xff] %vm1085, %v1006
      %1095 = vst.msk [vmem:[#allocation3 + $0x48] sm:$0xff] %vm1085, %v1008
      %1096 = vst.msk [vmem:[#allocation3 + $0x50] sm:$0xff] %vm1085, %v1010
      %1097 = vst.msk [vmem:[#allocation3 + $0x58] sm:$0xff] %vm1085, %v1012
      %1098 = vst.msk [vmem:[#allocation3 + $0x60] sm:$0xff] %vm1085, %v1014
      %1099 = vst.msk [vmem:[#allocation3 + $0x68] sm:$0xff] %vm1085, %v1016
      %1100 = vst.msk [vmem:[#allocation3 + $0x70] sm:$0xff] %vm1085, %v1018
      %1101 = vst.msk [vmem:[#allocation3 + $0x78] sm:$0xff] %vm1085, %v1020
      %1102 = vst.msk [vmem:[#allocation3 + $0x80] sm:$0xff] %vm1085, %v1022
      %1103 = vst.msk [vmem:[#allocation3 + $0x88] sm:$0xff] %vm1085, %v1024
      %1104 = vst.msk [vmem:[#allocation3 + $0x90] sm:$0xff] %vm1085, %v1026
      %1105 = vst.msk [vmem:[#allocation3 + $0x98] sm:$0xff] %vm1085, %v1028
      %1106 = vst.msk [vmem:[#allocation3 + $0xa0] sm:$0xff] %vm1085, %v1030
      %1107 = vst.msk [vmem:[#allocation3 + $0xa8] sm:$0xff] %vm1085, %v1032
      %1108 = vst.msk [vmem:[#allocation3 + $0xb0] sm:$0xff] %vm1085, %v1034
      %1109 = vst.msk [vmem:[#allocation3 + $0xb8] sm:$0xff] %vm1085, %v1036
      %1110 = vst.msk [vmem:[#allocation3 + $0xc0] sm:$0xff] %vm1085, %v1038
      %1111 = vst.msk [vmem:[#allocation3 + $0xc8] sm:$0xff] %vm1085, %v1040
      %1112 = vst.msk [vmem:[#allocation3 + $0xd0] sm:$0xff] %vm1085, %v1042
      %1113 = vst.msk [vmem:[#allocation3 + $0xd8] sm:$0xff] %vm1085, %v1044
      %1114 = vst.msk [vmem:[#allocation3 + $0xe0] sm:$0xff] %vm1085, %v1046
      %1115 = vst.msk [vmem:[#allocation3 + $0xe8] sm:$0xff] %vm1085, %v1048
      %1116 = vst.msk [vmem:[#allocation3 + $0xf0] sm:$0xff] %vm1085, %v1050
      %1117 = vst.msk [vmem:[#allocation3 + $0xf8] sm:$0xff] %vm1085, %v1052
      %v1118 = vld [vmem:[%s249 + $0x2] sm:$0xff]
      %v1119 = vld [vmem:[%s249 + $0xa] sm:$0xff]
      %v1120 = vld [vmem:[%s249 + $0x1a] sm:$0xff]
      %v1121 = vld [vmem:[%s249 + $0x22] sm:$0xff]
      %v1122 = vld [vmem:[%s249 + $0x32] sm:$0xff]
      %v1123 = vld [vmem:[%s249 + $0x3a] sm:$0xff]
      %v1124 = vld [vmem:[%s249 + $0x4a] sm:$0xff]
      %v1125 = vld [vmem:[%s249 + $0x52] sm:$0xff]
      %v1126 = vld [vmem:[%s249 + $0x62] sm:$0xff]
      %v1127 = vld [vmem:[%s249 + $0x6a] sm:$0xff]
      %v1128 = vld [vmem:[%s249 + $0x7a] sm:$0xff]
      %v1129 = vld [vmem:[%s249 + $0x82] sm:$0xff]
      %v1130 = vld [vmem:[%s249 + $0x92] sm:$0xff]
      %v1131 = vld [vmem:[%s249 + $0x9a] sm:$0xff]
      %v1132 = vld [vmem:[%s249 + $0xaa] sm:$0xff]
      %v1133 = vld [vmem:[%s249 + $0xb2] sm:$0xff]
      %v1134 = vld [vmem:[%s249 + $0xc2] sm:$0xff]
      %v1135 = vld [vmem:[%s249 + $0xca] sm:$0xff]
      %v1136 = vld [vmem:[%s249 + $0xda] sm:$0xff]
      %v1137 = vld [vmem:[%s249 + $0xe2] sm:$0xff]
      %v1138 = vld [vmem:[%s249 + $0xf2] sm:$0xff]
      %v1139 = vld [vmem:[%s249 + $0xfa] sm:$0xff]
      %v1140 = vld [vmem:[%s249 + $0x10a] sm:$0xff]
      %v1141 = vld [vmem:[%s249 + $0x112] sm:$0xff]
      %v1142 = vld [vmem:[%s249 + $0x122] sm:$0xff]
      %v1143 = vld [vmem:[%s249 + $0x12a] sm:$0xff]
      %v1144 = vld [vmem:[%s249 + $0x13a] sm:$0xff]
      %v1145 = vld [vmem:[%s249 + $0x142] sm:$0xff]
      %v1146 = vld [vmem:[%s249 + $0x152] sm:$0xff]
      %v1147 = vld [vmem:[%s249 + $0x15a] sm:$0xff]
      %v1148 = vld [vmem:[%s249 + $0x16a] sm:$0xff]
      %v1149 = vld [vmem:[%s249 + $0x172] sm:$0xff]
      %1182 = vrot.lane.b32.xlu0 %v1118, 20
      %v1183 = vpop.permute.xlu0 %1182
      %1184 = vrot.lane.b32.xlu0 %v1119, 20
      %v1185 = vpop.permute.xlu0 %1184
      %1186 = vrot.lane.b32.xlu0 %v1120, 20
      %v1187 = vpop.permute.xlu0 %1186
      %1188 = vrot.lane.b32.xlu0 %v1121, 20
      %v1189 = vpop.permute.xlu0 %1188
      %1190 = vrot.lane.b32.xlu0 %v1122, 20
      %v1191 = vpop.permute.xlu0 %1190
      %1192 = vrot.lane.b32.xlu0 %v1123, 20
      %v1193 = vpop.permute.xlu0 %1192
      %1194 = vrot.lane.b32.xlu0 %v1124, 20
      %v1195 = vpop.permute.xlu0 %1194
      %1196 = vrot.lane.b32.xlu0 %v1125, 20
      %v1197 = vpop.permute.xlu0 %1196
      %1198 = vrot.lane.b32.xlu0 %v1126, 20
      %v1199 = vpop.permute.xlu0 %1198
      %1200 = vrot.lane.b32.xlu0 %v1127, 20
      %v1201 = vpop.permute.xlu0 %1200
      %1202 = vrot.lane.b32.xlu0 %v1128, 20
      %v1203 = vpop.permute.xlu0 %1202
      %1204 = vrot.lane.b32.xlu0 %v1129, 20
      %v1205 = vpop.permute.xlu0 %1204
      %1206 = vrot.lane.b32.xlu0 %v1130, 20
      %v1207 = vpop.permute.xlu0 %1206
      %1208 = vrot.lane.b32.xlu0 %v1131, 20
      %v1209 = vpop.permute.xlu0 %1208
      %1210 = vrot.lane.b32.xlu0 %v1132, 20
      %v1211 = vpop.permute.xlu0 %1210
      %1212 = vrot.lane.b32.xlu0 %v1133, 20
      %v1213 = vpop.permute.xlu0 %1212
      %1214 = vrot.lane.b32.xlu0 %v1134, 20
      %v1215 = vpop.permute.xlu0 %1214
      %1216 = vrot.lane.b32.xlu0 %v1135, 20
      %v1217 = vpop.permute.xlu0 %1216
      %1218 = vrot.lane.b32.xlu0 %v1136, 20
      %v1219 = vpop.permute.xlu0 %1218
      %1220 = vrot.lane.b32.xlu0 %v1137, 20
      %v1221 = vpop.permute.xlu0 %1220
      %1222 = vrot.lane.b32.xlu0 %v1138, 20
      %v1223 = vpop.permute.xlu0 %1222
      %1224 = vrot.lane.b32.xlu0 %v1139, 20
      %v1225 = vpop.permute.xlu0 %1224
      %1226 = vrot.lane.b32.xlu0 %v1140, 20
      %v1227 = vpop.permute.xlu0 %1226
      %1228 = vrot.lane.b32.xlu0 %v1141, 20
      %v1229 = vpop.permute.xlu0 %1228
      %1230 = vrot.lane.b32.xlu0 %v1142, 20
      %v1231 = vpop.permute.xlu0 %1230
      %1232 = vrot.lane.b32.xlu0 %v1143, 20
      %v1233 = vpop.permute.xlu0 %1232
      %1234 = vrot.lane.b32.xlu0 %v1144, 20
      %v1235 = vpop.permute.xlu0 %1234
      %1236 = vrot.lane.b32.xlu0 %v1145, 20
      %v1237 = vpop.permute.xlu0 %1236
      %1238 = vrot.lane.b32.xlu0 %v1146, 20
      %v1239 = vpop.permute.xlu0 %1238
      %1240 = vrot.lane.b32.xlu0 %v1147, 20
      %v1241 = vpop.permute.xlu0 %1240
      %1242 = vrot.lane.b32.xlu0 %v1148, 20
      %v1243 = vpop.permute.xlu0 %1242
      %1244 = vrot.lane.b32.xlu0 %v1149, 20
      %v1245 = vpop.permute.xlu0 %1244
      %vm1278 = vcmask 195744
      %1279 = vst.msk [vmem:[#allocation3] sm:$0xff] %vm1278, %v1183
      %1280 = vst.msk [vmem:[#allocation3 + $0x8] sm:$0xff] %vm1278, %v1185
      %1281 = vst.msk [vmem:[#allocation3 + $0x10] sm:$0xff] %vm1278, %v1187
      %1282 = vst.msk [vmem:[#allocation3 + $0x18] sm:$0xff] %vm1278, %v1189
      %1283 = vst.msk [vmem:[#allocation3 + $0x20] sm:$0xff] %vm1278, %v1191
      %1284 = vst.msk [vmem:[#allocation3 + $0x28] sm:$0xff] %vm1278, %v1193
      %1285 = vst.msk [vmem:[#allocation3 + $0x30] sm:$0xff] %vm1278, %v1195
      %1286 = vst.msk [vmem:[#allocation3 + $0x38] sm:$0xff] %vm1278, %v1197
      %1287 = vst.msk [vmem:[#allocation3 + $0x40] sm:$0xff] %vm1278, %v1199
      %1288 = vst.msk [vmem:[#allocation3 + $0x48] sm:$0xff] %vm1278, %v1201
      %1289 = vst.msk [vmem:[#allocation3 + $0x50] sm:$0xff] %vm1278, %v1203
      %1290 = vst.msk [vmem:[#allocation3 + $0x58] sm:$0xff] %vm1278, %v1205
      %1291 = vst.msk [vmem:[#allocation3 + $0x60] sm:$0xff] %vm1278, %v1207
      %1292 = vst.msk [vmem:[#allocation3 + $0x68] sm:$0xff] %vm1278, %v1209
      %1293 = vst.msk [vmem:[#allocation3 + $0x70] sm:$0xff] %vm1278, %v1211
      %1294 = vst.msk [vmem:[#allocation3 + $0x78] sm:$0xff] %vm1278, %v1213
      %1295 = vst.msk [vmem:[#allocation3 + $0x80] sm:$0xff] %vm1278, %v1215
      %1296 = vst.msk [vmem:[#allocation3 + $0x88] sm:$0xff] %vm1278, %v1217
      %1297 = vst.msk [vmem:[#allocation3 + $0x90] sm:$0xff] %vm1278, %v1219
      %1298 = vst.msk [vmem:[#allocation3 + $0x98] sm:$0xff] %vm1278, %v1221
      %1299 = vst.msk [vmem:[#allocation3 + $0xa0] sm:$0xff] %vm1278, %v1223
      %1300 = vst.msk [vmem:[#allocation3 + $0xa8] sm:$0xff] %vm1278, %v1225
      %1301 = vst.msk [vmem:[#allocation3 + $0xb0] sm:$0xff] %vm1278, %v1227
      %1302 = vst.msk [vmem:[#allocation3 + $0xb8] sm:$0xff] %vm1278, %v1229
      %1303 = vst.msk [vmem:[#allocation3 + $0xc0] sm:$0xff] %vm1278, %v1231
      %1304 = vst.msk [vmem:[#allocation3 + $0xc8] sm:$0xff] %vm1278, %v1233
      %1305 = vst.msk [vmem:[#allocation3 + $0xd0] sm:$0xff] %vm1278, %v1235
      %1306 = vst.msk [vmem:[#allocation3 + $0xd8] sm:$0xff] %vm1278, %v1237
      %1307 = vst.msk [vmem:[#allocation3 + $0xe0] sm:$0xff] %vm1278, %v1239
      %1308 = vst.msk [vmem:[#allocation3 + $0xe8] sm:$0xff] %vm1278, %v1241
      %1309 = vst.msk [vmem:[#allocation3 + $0xf0] sm:$0xff] %vm1278, %v1243
      %1310 = vst.msk [vmem:[#allocation3 + $0xf8] sm:$0xff] %vm1278, %v1245
      %s1311 = scalar_lea.vmem [#allocation2], 48
      %v1312 = vld [vmem:[%s1311] sm:$0xff]
      %v1313 = vld [vmem:[%s1311 + $0x8] sm:$0xff]
      %v1314 = vld [vmem:[%s1311 + $0x18] sm:$0xff]
      %v1315 = vld [vmem:[%s1311 + $0x20] sm:$0xff]
      %v1316 = vld [vmem:[%s1311 + $0x30] sm:$0xff]
      %v1317 = vld [vmem:[%s1311 + $0x38] sm:$0xff]
      %v1318 = vld [vmem:[%s1311 + $0x48] sm:$0xff]
      %v1319 = vld [vmem:[%s1311 + $0x50] sm:$0xff]
      %v1320 = vld [vmem:[%s1311 + $0x60] sm:$0xff]
      %v1321 = vld [vmem:[%s1311 + $0x68] sm:$0xff]
      %v1322 = vld [vmem:[%s1311 + $0x78] sm:$0xff]
      %v1323 = vld [vmem:[%s1311 + $0x80] sm:$0xff]
      %v1324 = vld [vmem:[%s1311 + $0x90] sm:$0xff]
      %v1325 = vld [vmem:[%s1311 + $0x98] sm:$0xff]
      %v1326 = vld [vmem:[%s1311 + $0xa8] sm:$0xff]
      %v1327 = vld [vmem:[%s1311 + $0xb0] sm:$0xff]
      %v1328 = vld [vmem:[%s1311 + $0xc0] sm:$0xff]
      %v1329 = vld [vmem:[%s1311 + $0xc8] sm:$0xff]
      %v1330 = vld [vmem:[%s1311 + $0xd8] sm:$0xff]
      %v1331 = vld [vmem:[%s1311 + $0xe0] sm:$0xff]
      %v1332 = vld [vmem:[%s1311 + $0xf0] sm:$0xff]
      %v1333 = vld [vmem:[%s1311 + $0xf8] sm:$0xff]
      %v1334 = vld [vmem:[%s1311 + $0x108] sm:$0xff]
      %v1335 = vld [vmem:[%s1311 + $0x110] sm:$0xff]
      %v1336 = vld [vmem:[%s1311 + $0x120] sm:$0xff]
      %v1337 = vld [vmem:[%s1311 + $0x128] sm:$0xff]
      %v1338 = vld [vmem:[%s1311 + $0x138] sm:$0xff]
      %v1339 = vld [vmem:[%s1311 + $0x140] sm:$0xff]
      %v1340 = vld [vmem:[%s1311 + $0x150] sm:$0xff]
      %v1341 = vld [vmem:[%s1311 + $0x158] sm:$0xff]
      %v1342 = vld [vmem:[%s1311 + $0x168] sm:$0xff]
      %v1343 = vld [vmem:[%s1311 + $0x170] sm:$0xff]
      %1376 = vrot.lane.b32.xlu0 %v1312, 24
      %v1377 = vpop.permute.xlu0 %1376
      %1378 = vrot.lane.b32.xlu0 %v1313, 24
      %v1379 = vpop.permute.xlu0 %1378
      %1380 = vrot.lane.b32.xlu0 %v1314, 24
      %v1381 = vpop.permute.xlu0 %1380
      %1382 = vrot.lane.b32.xlu0 %v1315, 24
      %v1383 = vpop.permute.xlu0 %1382
      %1384 = vrot.lane.b32.xlu0 %v1316, 24
      %v1385 = vpop.permute.xlu0 %1384
      %1386 = vrot.lane.b32.xlu0 %v1317, 24
      %v1387 = vpop.permute.xlu0 %1386
      %1388 = vrot.lane.b32.xlu0 %v1318, 24
      %v1389 = vpop.permute.xlu0 %1388
      %1390 = vrot.lane.b32.xlu0 %v1319, 24
      %v1391 = vpop.permute.xlu0 %1390
      %1392 = vrot.lane.b32.xlu0 %v1320, 24
      %v1393 = vpop.permute.xlu0 %1392
      %1394 = vrot.lane.b32.xlu0 %v1321, 24
      %v1395 = vpop.permute.xlu0 %1394
      %1396 = vrot.lane.b32.xlu0 %v1322, 24
      %v1397 = vpop.permute.xlu0 %1396
      %1398 = vrot.lane.b32.xlu0 %v1323, 24
      %v1399 = vpop.permute.xlu0 %1398
      %1400 = vrot.lane.b32.xlu0 %v1324, 24
      %v1401 = vpop.permute.xlu0 %1400
      %1402 = vrot.lane.b32.xlu0 %v1325, 24
      %v1403 = vpop.permute.xlu0 %1402
      %1404 = vrot.lane.b32.xlu0 %v1326, 24
      %v1405 = vpop.permute.xlu0 %1404
      %1406 = vrot.lane.b32.xlu0 %v1327, 24
      %v1407 = vpop.permute.xlu0 %1406
      %1408 = vrot.lane.b32.xlu0 %v1328, 24
      %v1409 = vpop.permute.xlu0 %1408
      %1410 = vrot.lane.b32.xlu0 %v1329, 24
      %v1411 = vpop.permute.xlu0 %1410
      %1412 = vrot.lane.b32.xlu0 %v1330, 24
      %v1413 = vpop.permute.xlu0 %1412
      %1414 = vrot.lane.b32.xlu0 %v1331, 24
      %v1415 = vpop.permute.xlu0 %1414
      %1416 = vrot.lane.b32.xlu0 %v1332, 24
      %v1417 = vpop.permute.xlu0 %1416
      %1418 = vrot.lane.b32.xlu0 %v1333, 24
      %v1419 = vpop.permute.xlu0 %1418
      %1420 = vrot.lane.b32.xlu0 %v1334, 24
      %v1421 = vpop.permute.xlu0 %1420
      %1422 = vrot.lane.b32.xlu0 %v1335, 24
      %v1423 = vpop.permute.xlu0 %1422
      %1424 = vrot.lane.b32.xlu0 %v1336, 24
      %v1425 = vpop.permute.xlu0 %1424
      %1426 = vrot.lane.b32.xlu0 %v1337, 24
      %v1427 = vpop.permute.xlu0 %1426
      %1428 = vrot.lane.b32.xlu0 %v1338, 24
      %v1429 = vpop.permute.xlu0 %1428
      %1430 = vrot.lane.b32.xlu0 %v1339, 24
      %v1431 = vpop.permute.xlu0 %1430
      %1432 = vrot.lane.b32.xlu0 %v1340, 24
      %v1433 = vpop.permute.xlu0 %1432
      %1434 = vrot.lane.b32.xlu0 %v1341, 24
      %v1435 = vpop.permute.xlu0 %1434
      %1436 = vrot.lane.b32.xlu0 %v1342, 24
      %v1437 = vpop.permute.xlu0 %1436
      %1438 = vrot.lane.b32.xlu0 %v1343, 24
      %v1439 = vpop.permute.xlu0 %1438
      %vm1472 = vcmask 228544
      %1473 = vst.msk [vmem:[#allocation3] sm:$0xff] %vm1472, %v1377
      %1474 = vst.msk [vmem:[#allocation3 + $0x8] sm:$0xff] %vm1472, %v1379
      %1475 = vst.msk [vmem:[#allocation3 + $0x10] sm:$0xff] %vm1472, %v1381
      %1476 = vst.msk [vmem:[#allocation3 + $0x18] sm:$0xff] %vm1472, %v1383
      %1477 = vst.msk [vmem:[#allocation3 + $0x20] sm:$0xff] %vm1472, %v1385
      %1478 = vst.msk [vmem:[#allocation3 + $0x28] sm:$0xff] %vm1472, %v1387
      %1479 = vst.msk [vmem:[#allocation3 + $0x30] sm:$0xff] %vm1472, %v1389
      %1480 = vst.msk [vmem:[#allocation3 + $0x38] sm:$0xff] %vm1472, %v1391
      %1481 = vst.msk [vmem:[#allocation3 + $0x40] sm:$0xff] %vm1472, %v1393
      %1482 = vst.msk [vmem:[#allocation3 + $0x48] sm:$0xff] %vm1472, %v1395
      %1483 = vst.msk [vmem:[#allocation3 + $0x50] sm:$0xff] %vm1472, %v1397
      %1484 = vst.msk [vmem:[#allocation3 + $0x58] sm:$0xff] %vm1472, %v1399
      %1485 = vst.msk [vmem:[#allocation3 + $0x60] sm:$0xff] %vm1472, %v1401
      %1486 = vst.msk [vmem:[#allocation3 + $0x68] sm:$0xff] %vm1472, %v1403
      %1487 = vst.msk [vmem:[#allocation3 + $0x70] sm:$0xff] %vm1472, %v1405
      %1488 = vst.msk [vmem:[#allocation3 + $0x78] sm:$0xff] %vm1472, %v1407
      %1489 = vst.msk [vmem:[#allocation3 + $0x80] sm:$0xff] %vm1472, %v1409
      %1490 = vst.msk [vmem:[#allocation3 + $0x88] sm:$0xff] %vm1472, %v1411
      %1491 = vst.msk [vmem:[#allocation3 + $0x90] sm:$0xff] %vm1472, %v1413
      %1492 = vst.msk [vmem:[#allocation3 + $0x98] sm:$0xff] %vm1472, %v1415
      %1493 = vst.msk [vmem:[#allocation3 + $0xa0] sm:$0xff] %vm1472, %v1417
      %1494 = vst.msk [vmem:[#allocation3 + $0xa8] sm:$0xff] %vm1472, %v1419
      %1495 = vst.msk [vmem:[#allocation3 + $0xb0] sm:$0xff] %vm1472, %v1421
      %1496 = vst.msk [vmem:[#allocation3 + $0xb8] sm:$0xff] %vm1472, %v1423
      %1497 = vst.msk [vmem:[#allocation3 + $0xc0] sm:$0xff] %vm1472, %v1425
      %1498 = vst.msk [vmem:[#allocation3 + $0xc8] sm:$0xff] %vm1472, %v1427
      %1499 = vst.msk [vmem:[#allocation3 + $0xd0] sm:$0xff] %vm1472, %v1429
      %1500 = vst.msk [vmem:[#allocation3 + $0xd8] sm:$0xff] %vm1472, %v1431
      %1501 = vst.msk [vmem:[#allocation3 + $0xe0] sm:$0xff] %vm1472, %v1433
      %1502 = vst.msk [vmem:[#allocation3 + $0xe8] sm:$0xff] %vm1472, %v1435
      %1503 = vst.msk [vmem:[#allocation3 + $0xf0] sm:$0xff] %vm1472, %v1437
      %1504 = vst.msk [vmem:[#allocation3 + $0xf8] sm:$0xff] %vm1472, %v1439
      %v1505 = vld [vmem:[%s1311 + $0x1] sm:$0xff]
      %v1506 = vld [vmem:[%s1311 + $0x9] sm:$0xff]
      %v1507 = vld [vmem:[%s1311 + $0x19] sm:$0xff]
      %v1508 = vld [vmem:[%s1311 + $0x21] sm:$0xff]
      %v1509 = vld [vmem:[%s1311 + $0x31] sm:$0xff]
      %v1510 = vld [vmem:[%s1311 + $0x39] sm:$0xff]
      %v1511 = vld [vmem:[%s1311 + $0x49] sm:$0xff]
      %v1512 = vld [vmem:[%s1311 + $0x51] sm:$0xff]
      %v1513 = vld [vmem:[%s1311 + $0x61] sm:$0xff]
      %v1514 = vld [vmem:[%s1311 + $0x69] sm:$0xff]
      %v1515 = vld [vmem:[%s1311 + $0x79] sm:$0xff]
      %v1516 = vld [vmem:[%s1311 + $0x81] sm:$0xff]
      %v1517 = vld [vmem:[%s1311 + $0x91] sm:$0xff]
      %v1518 = vld [vmem:[%s1311 + $0x99] sm:$0xff]
      %v1519 = vld [vmem:[%s1311 + $0xa9] sm:$0xff]
      %v1520 = vld [vmem:[%s1311 + $0xb1] sm:$0xff]
      %v1521 = vld [vmem:[%s1311 + $0xc1] sm:$0xff]
      %v1522 = vld [vmem:[%s1311 + $0xc9] sm:$0xff]
      %v1523 = vld [vmem:[%s1311 + $0xd9] sm:$0xff]
      %v1524 = vld [vmem:[%s1311 + $0xe1] sm:$0xff]
      %v1525 = vld [vmem:[%s1311 + $0xf1] sm:$0xff]
      %v1526 = vld [vmem:[%s1311 + $0xf9] sm:$0xff]
      %v1527 = vld [vmem:[%s1311 + $0x109] sm:$0xff]
      %v1528 = vld [vmem:[%s1311 + $0x111] sm:$0xff]
      %v1529 = vld [vmem:[%s1311 + $0x121] sm:$0xff]
      %v1530 = vld [vmem:[%s1311 + $0x129] sm:$0xff]
      %v1531 = vld [vmem:[%s1311 + $0x139] sm:$0xff]
      %v1532 = vld [vmem:[%s1311 + $0x141] sm:$0xff]
      %v1533 = vld [vmem:[%s1311 + $0x151] sm:$0xff]
      %v1534 = vld [vmem:[%s1311 + $0x159] sm:$0xff]
      %v1535 = vld [vmem:[%s1311 + $0x169] sm:$0xff]
      %v1536 = vld [vmem:[%s1311 + $0x171] sm:$0xff]
      %1569 = vrot.lane.b32.xlu0 %v1505, 28
      %v1570 = vpop.permute.xlu0 %1569
      %1571 = vrot.lane.b32.xlu0 %v1506, 28
      %v1572 = vpop.permute.xlu0 %1571
      %1573 = vrot.lane.b32.xlu0 %v1507, 28
      %v1574 = vpop.permute.xlu0 %1573
      %1575 = vrot.lane.b32.xlu0 %v1508, 28
      %v1576 = vpop.permute.xlu0 %1575
      %1577 = vrot.lane.b32.xlu0 %v1509, 28
      %v1578 = vpop.permute.xlu0 %1577
      %1579 = vrot.lane.b32.xlu0 %v1510, 28
      %v1580 = vpop.permute.xlu0 %1579
      %1581 = vrot.lane.b32.xlu0 %v1511, 28
      %v1582 = vpop.permute.xlu0 %1581
      %1583 = vrot.lane.b32.xlu0 %v1512, 28
      %v1584 = vpop.permute.xlu0 %1583
      %1585 = vrot.lane.b32.xlu0 %v1513, 28
      %v1586 = vpop.permute.xlu0 %1585
      %1587 = vrot.lane.b32.xlu0 %v1514, 28
      %v1588 = vpop.permute.xlu0 %1587
      %1589 = vrot.lane.b32.xlu0 %v1515, 28
      %v1590 = vpop.permute.xlu0 %1589
      %1591 = vrot.lane.b32.xlu0 %v1516, 28
      %v1592 = vpop.permute.xlu0 %1591
      %1593 = vrot.lane.b32.xlu0 %v1517, 28
      %v1594 = vpop.permute.xlu0 %1593
      %1595 = vrot.lane.b32.xlu0 %v1518, 28
      %v1596 = vpop.permute.xlu0 %1595
      %1597 = vrot.lane.b32.xlu0 %v1519, 28
      %v1598 = vpop.permute.xlu0 %1597
      %1599 = vrot.lane.b32.xlu0 %v1520, 28
      %v1600 = vpop.permute.xlu0 %1599
      %1601 = vrot.lane.b32.xlu0 %v1521, 28
      %v1602 = vpop.permute.xlu0 %1601
      %1603 = vrot.lane.b32.xlu0 %v1522, 28
      %v1604 = vpop.permute.xlu0 %1603
      %1605 = vrot.lane.b32.xlu0 %v1523, 28
      %v1606 = vpop.permute.xlu0 %1605
      %1607 = vrot.lane.b32.xlu0 %v1524, 28
      %v1608 = vpop.permute.xlu0 %1607
      %1609 = vrot.lane.b32.xlu0 %v1525, 28
      %v1610 = vpop.permute.xlu0 %1609
      %1611 = vrot.lane.b32.xlu0 %v1526, 28
      %v1612 = vpop.permute.xlu0 %1611
      %1613 = vrot.lane.b32.xlu0 %v1527, 28
      %v1614 = vpop.permute.xlu0 %1613
      %1615 = vrot.lane.b32.xlu0 %v1528, 28
      %v1616 = vpop.permute.xlu0 %1615
      %1617 = vrot.lane.b32.xlu0 %v1529, 28
      %v1618 = vpop.permute.xlu0 %1617
      %1619 = vrot.lane.b32.xlu0 %v1530, 28
      %v1620 = vpop.permute.xlu0 %1619
      %1621 = vrot.lane.b32.xlu0 %v1531, 28
      %v1622 = vpop.permute.xlu0 %1621
      %1623 = vrot.lane.b32.xlu0 %v1532, 28
      %v1624 = vpop.permute.xlu0 %1623
      %1625 = vrot.lane.b32.xlu0 %v1533, 28
      %v1626 = vpop.permute.xlu0 %1625
      %1627 = vrot.lane.b32.xlu0 %v1534, 28
      %v1628 = vpop.permute.xlu0 %1627
      %1629 = vrot.lane.b32.xlu0 %v1535, 28
      %v1630 = vpop.permute.xlu0 %1629
      %1631 = vrot.lane.b32.xlu0 %v1536, 28
      %v1632 = vpop.permute.xlu0 %1631
      %vm1665 = vcmask 261344
      %1666 = vst.msk [vmem:[#allocation3] sm:$0xff] %vm1665, %v1570
      %1667 = vst.msk [vmem:[#allocation3 + $0x8] sm:$0xff] %vm1665, %v1572
      %1668 = vst.msk [vmem:[#allocation3 + $0x10] sm:$0xff] %vm1665, %v1574
      %1669 = vst.msk [vmem:[#allocation3 + $0x18] sm:$0xff] %vm1665, %v1576
      %1670 = vst.msk [vmem:[#allocation3 + $0x20] sm:$0xff] %vm1665, %v1578
      %1671 = vst.msk [vmem:[#allocation3 + $0x28] sm:$0xff] %vm1665, %v1580
      %1672 = vst.msk [vmem:[#allocation3 + $0x30] sm:$0xff] %vm1665, %v1582
      %1673 = vst.msk [vmem:[#allocation3 + $0x38] sm:$0xff] %vm1665, %v1584
      %1674 = vst.msk [vmem:[#allocation3 + $0x40] sm:$0xff] %vm1665, %v1586
      %1675 = vst.msk [vmem:[#allocation3 + $0x48] sm:$0xff] %vm1665, %v1588
      %1676 = vst.msk [vmem:[#allocation3 + $0x50] sm:$0xff] %vm1665, %v1590
      %1677 = vst.msk [vmem:[#allocation3 + $0x58] sm:$0xff] %vm1665, %v1592
      %1678 = vst.msk [vmem:[#allocation3 + $0x60] sm:$0xff] %vm1665, %v1594
      %1679 = vst.msk [vmem:[#allocation3 + $0x68] sm:$0xff] %vm1665, %v1596
      %1680 = vst.msk [vmem:[#allocation3 + $0x70] sm:$0xff] %vm1665, %v1598
      %1681 = vst.msk [vmem:[#allocation3 + $0x78] sm:$0xff] %vm1665, %v1600
      %1682 = vst.msk [vmem:[#allocation3 + $0x80] sm:$0xff] %vm1665, %v1602
      %1683 = vst.msk [vmem:[#allocation3 + $0x88] sm:$0xff] %vm1665, %v1604
      %1684 = vst.msk [vmem:[#allocation3 + $0x90] sm:$0xff] %vm1665, %v1606
      %1685 = vst.msk [vmem:[#allocation3 + $0x98] sm:$0xff] %vm1665, %v1608
      %1686 = vst.msk [vmem:[#allocation3 + $0xa0] sm:$0xff] %vm1665, %v1610
      %1687 = vst.msk [vmem:[#allocation3 + $0xa8] sm:$0xff] %vm1665, %v1612
      %1688 = vst.msk [vmem:[#allocation3 + $0xb0] sm:$0xff] %vm1665, %v1614
      %1689 = vst.msk [vmem:[#allocation3 + $0xb8] sm:$0xff] %vm1665, %v1616
      %1690 = vst.msk [vmem:[#allocation3 + $0xc0] sm:$0xff] %vm1665, %v1618
      %1691 = vst.msk [vmem:[#allocation3 + $0xc8] sm:$0xff] %vm1665, %v1620
      %1692 = vst.msk [vmem:[#allocation3 + $0xd0] sm:$0xff] %vm1665, %v1622
      %1693 = vst.msk [vmem:[#allocation3 + $0xd8] sm:$0xff] %vm1665, %v1624
      %1694 = vst.msk [vmem:[#allocation3 + $0xe0] sm:$0xff] %vm1665, %v1626
      %1695 = vst.msk [vmem:[#allocation3 + $0xe8] sm:$0xff] %vm1665, %v1628
      %1696 = vst.msk [vmem:[#allocation3 + $0xf0] sm:$0xff] %vm1665, %v1630
      %1697 = vst.msk [vmem:[#allocation3 + $0xf8] sm:$0xff] %vm1665, %v1632
      %v1698 = vld [vmem:[%s1311 + $0x2] sm:$0xff]
      %v1699 = vld [vmem:[%s1311 + $0xa] sm:$0xff]
      %v1700 = vld [vmem:[%s1311 + $0x1a] sm:$0xff]
      %v1701 = vld [vmem:[%s1311 + $0x22] sm:$0xff]
      %v1702 = vld [vmem:[%s1311 + $0x32] sm:$0xff]
      %v1703 = vld [vmem:[%s1311 + $0x3a] sm:$0xff]
      %v1704 = vld [vmem:[%s1311 + $0x4a] sm:$0xff]
      %v1705 = vld [vmem:[%s1311 + $0x52] sm:$0xff]
      %v1706 = vld [vmem:[%s1311 + $0x62] sm:$0xff]
      %v1707 = vld [vmem:[%s1311 + $0x6a] sm:$0xff]
      %v1708 = vld [vmem:[%s1311 + $0x7a] sm:$0xff]
      %v1709 = vld [vmem:[%s1311 + $0x82] sm:$0xff]
      %v1710 = vld [vmem:[%s1311 + $0x92] sm:$0xff]
      %v1711 = vld [vmem:[%s1311 + $0x9a] sm:$0xff]
      %v1712 = vld [vmem:[%s1311 + $0xaa] sm:$0xff]
      %v1713 = vld [vmem:[%s1311 + $0xb2] sm:$0xff]
      %v1714 = vld [vmem:[%s1311 + $0xc2] sm:$0xff]
      %v1715 = vld [vmem:[%s1311 + $0xca] sm:$0xff]
      %v1716 = vld [vmem:[%s1311 + $0xda] sm:$0xff]
      %v1717 = vld [vmem:[%s1311 + $0xe2] sm:$0xff]
      %v1718 = vld [vmem:[%s1311 + $0xf2] sm:$0xff]
      %v1719 = vld [vmem:[%s1311 + $0xfa] sm:$0xff]
      %v1720 = vld [vmem:[%s1311 + $0x10a] sm:$0xff]
      %v1721 = vld [vmem:[%s1311 + $0x112] sm:$0xff]
      %v1722 = vld [vmem:[%s1311 + $0x122] sm:$0xff]
      %v1723 = vld [vmem:[%s1311 + $0x12a] sm:$0xff]
      %v1724 = vld [vmem:[%s1311 + $0x13a] sm:$0xff]
      %v1725 = vld [vmem:[%s1311 + $0x142] sm:$0xff]
      %v1726 = vld [vmem:[%s1311 + $0x152] sm:$0xff]
      %v1727 = vld [vmem:[%s1311 + $0x15a] sm:$0xff]
      %v1728 = vld [vmem:[%s1311 + $0x16a] sm:$0xff]
      %v1729 = vld [vmem:[%s1311 + $0x172] sm:$0xff]
      %1762 = vrot.lane.b32.xlu0 %v1698, 32
      %v1763 = vpop.permute.xlu0 %1762
      %1764 = vrot.lane.b32.xlu0 %v1699, 32
      %v1765 = vpop.permute.xlu0 %1764
      %1766 = vrot.lane.b32.xlu0 %v1700, 32
      %v1767 = vpop.permute.xlu0 %1766
      %1768 = vrot.lane.b32.xlu0 %v1701, 32
      %v1769 = vpop.permute.xlu0 %1768
      %1770 = vrot.lane.b32.xlu0 %v1702, 32
      %v1771 = vpop.permute.xlu0 %1770
      %1772 = vrot.lane.b32.xlu0 %v1703, 32
      %v1773 = vpop.permute.xlu0 %1772
      %1774 = vrot.lane.b32.xlu0 %v1704, 32
      %v1775 = vpop.permute.xlu0 %1774
      %1776 = vrot.lane.b32.xlu0 %v1705, 32
      %v1777 = vpop.permute.xlu0 %1776
      %1778 = vrot.lane.b32.xlu0 %v1706, 32
      %v1779 = vpop.permute.xlu0 %1778
      %1780 = vrot.lane.b32.xlu0 %v1707, 32
      %v1781 = vpop.permute.xlu0 %1780
      %1782 = vrot.lane.b32.xlu0 %v1708, 32
      %v1783 = vpop.permute.xlu0 %1782
      %1784 = vrot.lane.b32.xlu0 %v1709, 32
      %v1785 = vpop.permute.xlu0 %1784
      %1786 = vrot.lane.b32.xlu0 %v1710, 32
      %v1787 = vpop.permute.xlu0 %1786
      %1788 = vrot.lane.b32.xlu0 %v1711, 32
      %v1789 = vpop.permute.xlu0 %1788
      %1790 = vrot.lane.b32.xlu0 %v1712, 32
      %v1791 = vpop.permute.xlu0 %1790
      %1792 = vrot.lane.b32.xlu0 %v1713, 32
      %v1793 = vpop.permute.xlu0 %1792
      %1794 = vrot.lane.b32.xlu0 %v1714, 32
      %v1795 = vpop.permute.xlu0 %1794
      %1796 = vrot.lane.b32.xlu0 %v1715, 32
      %v1797 = vpop.permute.xlu0 %1796
      %1798 = vrot.lane.b32.xlu0 %v1716, 32
      %v1799 = vpop.permute.xlu0 %1798
      %1800 = vrot.lane.b32.xlu0 %v1717, 32
      %v1801 = vpop.permute.xlu0 %1800
      %1802 = vrot.lane.b32.xlu0 %v1718, 32
      %v1803 = vpop.permute.xlu0 %1802
      %1804 = vrot.lane.b32.xlu0 %v1719, 32
      %v1805 = vpop.permute.xlu0 %1804
      %1806 = vrot.lane.b32.xlu0 %v1720, 32
      %v1807 = vpop.permute.xlu0 %1806
      %1808 = vrot.lane.b32.xlu0 %v1721, 32
      %v1809 = vpop.permute.xlu0 %1808
      %1810 = vrot.lane.b32.xlu0 %v1722, 32
      %v1811 = vpop.permute.xlu0 %1810
      %1812 = vrot.lane.b32.xlu0 %v1723, 32
      %v1813 = vpop.permute.xlu0 %1812
      %1814 = vrot.lane.b32.xlu0 %v1724, 32
      %v1815 = vpop.permute.xlu0 %1814
      %1816 = vrot.lane.b32.xlu0 %v1725, 32
      %v1817 = vpop.permute.xlu0 %1816
      %1818 = vrot.lane.b32.xlu0 %v1726, 32
      %v1819 = vpop.permute.xlu0 %1818
      %1820 = vrot.lane.b32.xlu0 %v1727, 32
      %v1821 = vpop.permute.xlu0 %1820
      %1822 = vrot.lane.b32.xlu0 %v1728, 32
      %v1823 = vpop.permute.xlu0 %1822
      %1824 = vrot.lane.b32.xlu0 %v1729, 32
      %v1825 = vpop.permute.xlu0 %1824
      %vm1858 = vcmask 294144
      %1859 = vst.msk [vmem:[#allocation3] sm:$0xff] %vm1858, %v1763
      %1860 = vst.msk [vmem:[#allocation3 + $0x8] sm:$0xff] %vm1858, %v1765
      %1861 = vst.msk [vmem:[#allocation3 + $0x10] sm:$0xff] %vm1858, %v1767
      %1862 = vst.msk [vmem:[#allocation3 + $0x18] sm:$0xff] %vm1858, %v1769
      %1863 = vst.msk [vmem:[#allocation3 + $0x20] sm:$0xff] %vm1858, %v1771
      %1864 = vst.msk [vmem:[#allocation3 + $0x28] sm:$0xff] %vm1858, %v1773
      %1865 = vst.msk [vmem:[#allocation3 + $0x30] sm:$0xff] %vm1858, %v1775
      %1866 = vst.msk [vmem:[#allocation3 + $0x38] sm:$0xff] %vm1858, %v1777
      %1867 = vst.msk [vmem:[#allocation3 + $0x40] sm:$0xff] %vm1858, %v1779
      %1868 = vst.msk [vmem:[#allocation3 + $0x48] sm:$0xff] %vm1858, %v1781
      %1869 = vst.msk [vmem:[#allocation3 + $0x50] sm:$0xff] %vm1858, %v1783
      %1870 = vst.msk [vmem:[#allocation3 + $0x58] sm:$0xff] %vm1858, %v1785
      %1871 = vst.msk [vmem:[#allocation3 + $0x60] sm:$0xff] %vm1858, %v1787
      %1872 = vst.msk [vmem:[#allocation3 + $0x68] sm:$0xff] %vm1858, %v1789
      %1873 = vst.msk [vmem:[#allocation3 + $0x70] sm:$0xff] %vm1858, %v1791
      %1874 = vst.msk [vmem:[#allocation3 + $0x78] sm:$0xff] %vm1858, %v1793
      %1875 = vst.msk [vmem:[#allocation3 + $0x80] sm:$0xff] %vm1858, %v1795
      %1876 = vst.msk [vmem:[#allocation3 + $0x88] sm:$0xff] %vm1858, %v1797
      %1877 = vst.msk [vmem:[#allocation3 + $0x90] sm:$0xff] %vm1858, %v1799
      %1878 = vst.msk [vmem:[#allocation3 + $0x98] sm:$0xff] %vm1858, %v1801
      %1879 = vst.msk [vmem:[#allocation3 + $0xa0] sm:$0xff] %vm1858, %v1803
      %1880 = vst.msk [vmem:[#allocation3 + $0xa8] sm:$0xff] %vm1858, %v1805
      %1881 = vst.msk [vmem:[#allocation3 + $0xb0] sm:$0xff] %vm1858, %v1807
      %1882 = vst.msk [vmem:[#allocation3 + $0xb8] sm:$0xff] %vm1858, %v1809
      %1883 = vst.msk [vmem:[#allocation3 + $0xc0] sm:$0xff] %vm1858, %v1811
      %1884 = vst.msk [vmem:[#allocation3 + $0xc8] sm:$0xff] %vm1858, %v1813
      %1885 = vst.msk [vmem:[#allocation3 + $0xd0] sm:$0xff] %vm1858, %v1815
      %1886 = vst.msk [vmem:[#allocation3 + $0xd8] sm:$0xff] %vm1858, %v1817
      %1887 = vst.msk [vmem:[#allocation3 + $0xe0] sm:$0xff] %vm1858, %v1819
      %1888 = vst.msk [vmem:[#allocation3 + $0xe8] sm:$0xff] %vm1858, %v1821
      %1889 = vst.msk [vmem:[#allocation3 + $0xf0] sm:$0xff] %vm1858, %v1823
      %1890 = vst.msk [vmem:[#allocation3 + $0xf8] sm:$0xff] %vm1858, %v1825
      %v1891 = vld [vmem:[#allocation3] sm:$0xff]
      %v1892 = vld [vmem:[#allocation3 + $0x8] sm:$0xff]
      %v1893 = vld [vmem:[#allocation3 + $0x10] sm:$0xff]
      %v1894 = vld [vmem:[#allocation3 + $0x18] sm:$0xff]
      %v1895 = vld [vmem:[#allocation3 + $0x20] sm:$0xff]
      %v1896 = vld [vmem:[#allocation3 + $0x28] sm:$0xff]
      %v1897 = vld [vmem:[#allocation3 + $0x30] sm:$0xff]
      %v1898 = vld [vmem:[#allocation3 + $0x38] sm:$0xff]
      %v1899 = vld [vmem:[#allocation3 + $0x40] sm:$0xff]
      %v1900 = vld [vmem:[#allocation3 + $0x48] sm:$0xff]
      %v1901 = vld [vmem:[#allocation3 + $0x50] sm:$0xff]
      %v1902 = vld [vmem:[#allocation3 + $0x58] sm:$0xff]
      %v1903 = vld [vmem:[#allocation3 + $0x60] sm:$0xff]
      %v1904 = vld [vmem:[#allocation3 + $0x68] sm:$0xff]
      %v1905 = vld [vmem:[#allocation3 + $0x70] sm:$0xff]
      %v1906 = vld [vmem:[#allocation3 + $0x78] sm:$0xff]
      %v1907 = vld [vmem:[#allocation3 + $0x80] sm:$0xff]
      %v1908 = vld [vmem:[#allocation3 + $0x88] sm:$0xff]
      %v1909 = vld [vmem:[#allocation3 + $0x90] sm:$0xff]
      %v1910 = vld [vmem:[#allocation3 + $0x98] sm:$0xff]
      %v1911 = vld [vmem:[#allocation3 + $0xa0] sm:$0xff]
      %v1912 = vld [vmem:[#allocation3 + $0xa8] sm:$0xff]
      %v1913 = vld [vmem:[#allocation3 + $0xb0] sm:$0xff]
      %v1914 = vld [vmem:[#allocation3 + $0xb8] sm:$0xff]
      %v1915 = vld [vmem:[#allocation3 + $0xc0] sm:$0xff]
      %v1916 = vld [vmem:[#allocation3 + $0xc8] sm:$0xff]
      %v1917 = vld [vmem:[#allocation3 + $0xd0] sm:$0xff]
      %v1918 = vld [vmem:[#allocation3 + $0xd8] sm:$0xff]
      %v1919 = vld [vmem:[#allocation3 + $0xe0] sm:$0xff]
      %v1920 = vld [vmem:[#allocation3 + $0xe8] sm:$0xff]
      %v1921 = vld [vmem:[#allocation3 + $0xf0] sm:$0xff]
      %v1922 = vld [vmem:[#allocation3 + $0xf8] sm:$0xff]
      %v1923 = vld [vmem:[%s1] sm:$0xff]
      %v1924 = vld [vmem:[%s1 + $0x8] sm:$0xff]
      %v1925 = vld [vmem:[%s1 + $0x10] sm:$0xff]
      %v1926 = vld [vmem:[%s1 + $0x18] sm:$0xff]
      %v1927 = vld [vmem:[%s1 + $0x20] sm:$0xf]
      %vm1928 = vcmask 293888
      %v1930 = vsel %vm1928, %v1891, 0
      %v1933 = vsel %vm1928, %v1892, 0
      %v1936 = vsel %vm1928, %v1893, 0
      %v1939 = vsel %vm1928, %v1894, 0
      %v1942 = vsel %vm1928, %v1895, 0
      %v1945 = vsel %vm1928, %v1896, 0
      %v1948 = vsel %vm1928, %v1897, 0
      %v1951 = vsel %vm1928, %v1898, 0
      %v1954 = vsel %vm1928, %v1899, 0
      %v1957 = vsel %vm1928, %v1900, 0
      %v1960 = vsel %vm1928, %v1901, 0
      %v1963 = vsel %vm1928, %v1902, 0
      %v1966 = vsel %vm1928, %v1903, 0
      %v1969 = vsel %vm1928, %v1904, 0
      %v1972 = vsel %vm1928, %v1905, 0
      %v1975 = vsel %vm1928, %v1906, 0
      %v1978 = vsel %vm1928, %v1907, 0
      %v1981 = vsel %vm1928, %v1908, 0
      %v1984 = vsel %vm1928, %v1909, 0
      %v1987 = vsel %vm1928, %v1910, 0
      %v1990 = vsel %vm1928, %v1911, 0
      %v1993 = vsel %vm1928, %v1912, 0
      %v1996 = vsel %vm1928, %v1913, 0
      %v1999 = vsel %vm1928, %v1914, 0
      %v2002 = vsel %vm1928, %v1915, 0
      %v2005 = vsel %vm1928, %v1916, 0
      %v2008 = vsel %vm1928, %v1917, 0
      %v2011 = vsel %vm1928, %v1918, 0
      %v2014 = vsel %vm1928, %v1919, 0
      %v2017 = vsel %vm1928, %v1920, 0
      %v2020 = vsel %vm1928, %v1921, 0
      %v2023 = vsel %vm1928, %v1922, 0
      %vm2025 = vcmask 1043456
      %v2027 = vsel %vm2025, %v1927, 0
      %2029 = vmatprep.subr.mxu0 0.0
      %2030 = vmatpush1.msra.mxu0 %v1923
      %2031 = vmatprep.subr.mxu0 0.0
      %2032 = vmatpush1.msra.mxu0 %v1924
      %2033 = vmatprep.subr.mxu0 0.0
      %2034 = vmatpush1.msra.mxu0 %v1925
      %2035 = vmatprep.subr.mxu0 0.0
      %2036 = vmatpush1.msra.mxu0 %v1926
      %2037 = vmatprep.subr.mxu0 0.0
      %2038 = vmatpush1.msra.mxu0 %v2027
      %2039 = vmatprep.subr.mxu0 0.0
      %2040 = vmatpush1.msra.mxu0 0.0
      %2041 = vmatprep.subr.mxu0 0.0
      %2042 = vmatpush1.msra.mxu0 0.0
      %2043 = vmatprep.subr.mxu0 0.0
      %2044 = vmatpush1.msra.mxu0 0.0
      %2045 = vmatprep.subr.mxu0 0.0
      %2046 = vmatpush1.msra.mxu0 0.0
      %2047 = vmatprep.subr.mxu0 0.0
      %2048 = vmatpush1.msra.mxu0 0.0
      %2049 = vmatprep.subr.mxu0 0.0
      %2050 = vmatpush1.msra.mxu0 0.0
      %2051 = vmatprep.subr.mxu0 0.0
      %2052 = vmatpush1.msra.mxu0 0.0
      %2053 = vmatprep.subr.mxu0 0.0
      %2054 = vmatpush1.msra.mxu0 0.0
      %2055 = vmatprep.subr.mxu0 0.0
      %2056 = vmatpush1.msra.mxu0 0.0
      %2057 = vmatprep.subr.mxu0 0.0
      %2058 = vmatpush1.msra.mxu0 0.0
      %2059 = vmatprep.subr.mxu0 0.0
      %2060 = vmatpush1.msra.mxu0 0.0
      %2061 = vmatprep.subr.mxu0 0.0
      %2062 = vmatpush1.msra.mxu0 0.0
      %2063 = vmatprep.subr.mxu0 0.0
      %2064 = vmatpush1.msra.mxu0 0.0
      %2065 = vmatprep.subr.mxu0 0.0
      %2066 = vmatpush1.msra.mxu0 0.0
      %2067 = vmatprep.subr.mxu0 0.0
      %2068 = vmatpush1.msra.mxu0 0.0
      %2069 = vmatprep.subr.mxu0 0.0
      %2070 = vmatpush1.msra.mxu0 0.0
      %2071 = vmatprep.subr.mxu0 0.0
      %2072 = vmatpush1.msra.mxu0 0.0
      %2073 = vmatprep.subr.mxu0 0.0
      %2074 = vmatpush1.msra.mxu0 0.0
      %2075 = vmatprep.subr.mxu0 0.0
      %2076 = vmatpush1.msra.mxu0 0.0
      %2077 = vmatprep.subr.mxu0 0.0
      %2078 = vmatpush1.msra.mxu0 0.0
      %2079 = vmatprep.subr.mxu0 0.0
      %2080 = vmatpush1.msra.mxu0 0.0
      %2081 = vmatprep.subr.mxu0 0.0
      %2082 = vmatpush1.msra.mxu0 0.0
      %2083 = vmatprep.subr.mxu0 0.0
      %2084 = vmatpush1.msra.mxu0 0.0
      %2085 = vmatprep.subr.mxu0 0.0
      %2086 = vmatpush1.msra.mxu0 0.0
      %2087 = vmatprep.subr.mxu0 0.0
      %2088 = vmatpush1.msra.mxu0 0.0
      %2089 = vmatprep.subr.mxu0 0.0
      %2090 = vmatpush1.msra.mxu0 0.0
      %2091 = vmatprep.subr.mxu0 0.0
      %2092 = vmatpush1.msra.mxu0 0.0
      %2093 = vmatprep.mubr.f32.mxu0 0.0
      %2094 = vmatmul.mubr.f32.gmra.mrb[0].mxu0 %v1930
      %v2095 = vpop.f32.mrb[0].mxu0
      %v2096 = vadd.f32 0.0, %v2095
      %v2097 = vpop.f32.mrb[0].mxu0
      %2098 = vmatprep.mubr.f32.mxu0 0.0
      %2099 = vmatmul.mubr.f32.gmra.mrb[0].mxu0 %v1933
      %v2100 = vpop.f32.mrb[0].mxu0
      %v2101 = vadd.f32 0.0, %v2100
      %v2102 = vpop.f32.mrb[0].mxu0
      %2103 = vmatprep.mubr.f32.mxu0 0.0
      %2104 = vmatmul.mubr.f32.gmra.mrb[0].mxu0 %v1936
      %v2105 = vpop.f32.mrb[0].mxu0
      %v2106 = vadd.f32 0.0, %v2105
      %v2107 = vpop.f32.mrb[0].mxu0
      %2108 = vmatprep.mubr.f32.mxu0 0.0
      %2109 = vmatmul.mubr.f32.gmra.mrb[0].mxu0 %v1939
      %v2110 = vpop.f32.mrb[0].mxu0
      %v2111 = vadd.f32 0.0, %v2110
      %v2112 = vpop.f32.mrb[0].mxu0
      %2113 = vmatprep.mubr.f32.mxu0 0.0
      %2114 = vmatmul.mubr.f32.gmra.mrb[0].mxu0 %v1942
      %v2115 = vpop.f32.mrb[0].mxu0
      %v2116 = vadd.f32 0.0, %v2115
      %v2117 = vpop.f32.mrb[0].mxu0
      %2118 = vmatprep.mubr.f32.mxu0 0.0
      %2119 = vmatmul.mubr.f32.gmra.mrb[0].mxu0 %v1945
      %v2120 = vpop.f32.mrb[0].mxu0
      %v2121 = vadd.f32 0.0, %v2120
      %v2122 = vpop.f32.mrb[0].mxu0
      %2123 = vmatprep.mubr.f32.mxu0 0.0
      %2124 = vmatmul.mubr.f32.gmra.mrb[0].mxu0 %v1948
      %v2125 = vpop.f32.mrb[0].mxu0
      %v2126 = vadd.f32 0.0, %v2125
      %v2127 = vpop.f32.mrb[0].mxu0
      %2128 = vmatprep.mubr.f32.mxu0 0.0
      %2129 = vmatmul.mubr.f32.gmra.mrb[0].mxu0 %v1951
      %v2130 = vpop.f32.mrb[0].mxu0
      %v2131 = vadd.f32 0.0, %v2130
      %v2132 = vpop.f32.mrb[0].mxu0
      %2133 = vmatprep.mubr.f32.mxu0 0.0
      %2134 = vmatmul.mubr.f32.gmra.mrb[0].mxu0 %v1954
      %v2135 = vpop.f32.mrb[0].mxu0
      %v2136 = vadd.f32 0.0, %v2135
      %v2137 = vpop.f32.mrb[0].mxu0
      %2138 = vmatprep.mubr.f32.mxu0 0.0
      %2139 = vmatmul.mubr.f32.gmra.mrb[0].mxu0 %v1957
      %v2140 = vpop.f32.mrb[0].mxu0
      %v2141 = vadd.f32 0.0, %v2140
      %v2142 = vpop.f32.mrb[0].mxu0
      %2143 = vmatprep.mubr.f32.mxu0 0.0
      %2144 = vmatmul.mubr.f32.gmra.mrb[0].mxu0 %v1960
      %v2145 = vpop.f32.mrb[0].mxu0
      %v2146 = vadd.f32 0.0, %v2145
      %v2147 = vpop.f32.mrb[0].mxu0
      %2148 = vmatprep.mubr.f32.mxu0 0.0
      %2149 = vmatmul.mubr.f32.gmra.mrb[0].mxu0 %v1963
      %v2150 = vpop.f32.mrb[0].mxu0
      %v2151 = vadd.f32 0.0, %v2150
      %v2152 = vpop.f32.mrb[0].mxu0
      %2153 = vmatprep.mubr.f32.mxu0 0.0
      %2154 = vmatmul.mubr.f32.gmra.mrb[0].mxu0 %v1966
      %v2155 = vpop.f32.mrb[0].mxu0
      %v2156 = vadd.f32 0.0, %v2155
      %v2157 = vpop.f32.mrb[0].mxu0
      %2158 = vmatprep.mubr.f32.mxu0 0.0
      %2159 = vmatmul.mubr.f32.gmra.mrb[0].mxu0 %v1969
      %v2160 = vpop.f32.mrb[0].mxu0
      %v2161 = vadd.f32 0.0, %v2160
      %v2162 = vpop.f32.mrb[0].mxu0
      %2163 = vmatprep.mubr.f32.mxu0 0.0
      %2164 = vmatmul.mubr.f32.gmra.mrb[0].mxu0 %v1972
      %v2165 = vpop.f32.mrb[0].mxu0
      %v2166 = vadd.f32 0.0, %v2165
      %v2167 = vpop.f32.mrb[0].mxu0
      %2168 = vmatprep.mubr.f32.mxu0 0.0
      %2169 = vmatmul.mubr.f32.gmra.mrb[0].mxu0 %v1975
      %v2170 = vpop.f32.mrb[0].mxu0
      %v2171 = vadd.f32 0.0, %v2170
      %v2172 = vpop.f32.mrb[0].mxu0
      %2173 = vmatprep.mubr.f32.mxu0 0.0
      %2174 = vmatmul.mubr.f32.gmra.mrb[0].mxu0 %v1978
      %v2175 = vpop.f32.mrb[0].mxu0
      %v2176 = vadd.f32 0.0, %v2175
      %v2177 = vpop.f32.mrb[0].mxu0
      %2178 = vmatprep.mubr.f32.mxu0 0.0
      %2179 = vmatmul.mubr.f32.gmra.mrb[0].mxu0 %v1981
      %v2180 = vpop.f32.mrb[0].mxu0
      %v2181 = vadd.f32 0.0, %v2180
      %v2182 = vpop.f32.mrb[0].mxu0
      %2183 = vmatprep.mubr.f32.mxu0 0.0
      %2184 = vmatmul.mubr.f32.gmra.mrb[0].mxu0 %v1984
      %v2185 = vpop.f32.mrb[0].mxu0
      %v2186 = vadd.f32 0.0, %v2185
      %v2187 = vpop.f32.mrb[0].mxu0
      %2188 = vmatprep.mubr.f32.mxu0 0.0
      %2189 = vmatmul.mubr.f32.gmra.mrb[0].mxu0 %v1987
      %v2190 = vpop.f32.mrb[0].mxu0
      %v2191 = vadd.f32 0.0, %v2190
      %v2192 = vpop.f32.mrb[0].mxu0
      %2193 = vmatprep.mubr.f32.mxu0 0.0
      %2194 = vmatmul.mubr.f32.gmra.mrb[0].mxu0 %v1990
      %v2195 = vpop.f32.mrb[0].mxu0
      %v2196 = vadd.f32 0.0, %v2195
      %v2197 = vpop.f32.mrb[0].mxu0
      %2198 = vmatprep.mubr.f32.mxu0 0.0
      %2199 = vmatmul.mubr.f32.gmra.mrb[0].mxu0 %v1993
      %v2200 = vpop.f32.mrb[0].mxu0
      %v2201 = vadd.f32 0.0, %v2200
      %v2202 = vpop.f32.mrb[0].mxu0
      %2203 = vmatprep.mubr.f32.mxu0 0.0
      %2204 = vmatmul.mubr.f32.gmra.mrb[0].mxu0 %v1996
      %v2205 = vpop.f32.mrb[0].mxu0
      %v2206 = vadd.f32 0.0, %v2205
      %v2207 = vpop.f32.mrb[0].mxu0
      %2208 = vmatprep.mubr.f32.mxu0 0.0
      %2209 = vmatmul.mubr.f32.gmra.mrb[0].mxu0 %v1999
      %v2210 = vpop.f32.mrb[0].mxu0
      %v2211 = vadd.f32 0.0, %v2210
      %v2212 = vpop.f32.mrb[0].mxu0
      %2213 = vmatprep.mubr.f32.mxu0 0.0
      %2214 = vmatmul.mubr.f32.gmra.mrb[0].mxu0 %v2002
      %v2215 = vpop.f32.mrb[0].mxu0
      %v2216 = vadd.f32 0.0, %v2215
      %v2217 = vpop.f32.mrb[0].mxu0
      %2218 = vmatprep.mubr.f32.mxu0 0.0
      %2219 = vmatmul.mubr.f32.gmra.mrb[0].mxu0 %v2005
      %v2220 = vpop.f32.mrb[0].mxu0
      %v2221 = vadd.f32 0.0, %v2220
      %v2222 = vpop.f32.mrb[0].mxu0
      %2223 = vmatprep.mubr.f32.mxu0 0.0
      %2224 = vmatmul.mubr.f32.gmra.mrb[0].mxu0 %v2008
      %v2225 = vpop.f32.mrb[0].mxu0
      %v2226 = vadd.f32 0.0, %v2225
      %v2227 = vpop.f32.mrb[0].mxu0
      %2228 = vmatprep.mubr.f32.mxu0 0.0
      %2229 = vmatmul.mubr.f32.gmra.mrb[0].mxu0 %v2011
      %v2230 = vpop.f32.mrb[0].mxu0
      %v2231 = vadd.f32 0.0, %v2230
      %v2232 = vpop.f32.mrb[0].mxu0
      %2233 = vmatprep.mubr.f32.mxu0 0.0
      %2234 = vmatmul.mubr.f32.gmra.mrb[0].mxu0 %v2014
      %v2235 = vpop.f32.mrb[0].mxu0
      %v2236 = vadd.f32 0.0, %v2235
      %v2237 = vpop.f32.mrb[0].mxu0
      %2238 = vmatprep.mubr.f32.mxu0 0.0
      %2239 = vmatmul.mubr.f32.gmra.mrb[0].mxu0 %v2017
      %v2240 = vpop.f32.mrb[0].mxu0
      %v2241 = vadd.f32 0.0, %v2240
      %v2242 = vpop.f32.mrb[0].mxu0
      %2243 = vmatprep.mubr.f32.mxu0 0.0
      %2244 = vmatmul.mubr.f32.gmra.mrb[0].mxu0 %v2020
      %v2245 = vpop.f32.mrb[0].mxu0
      %v2246 = vadd.f32 0.0, %v2245
      %v2247 = vpop.f32.mrb[0].mxu0
      %2248 = vmatprep.mubr.f32.mxu0 0.0
      %2249 = vmatmul.mubr.f32.gmra.mrb[0].mxu0 %v2023
      %v2250 = vpop.f32.mrb[0].mxu0
      %v2251 = vadd.f32 0.0, %v2250
      %v2252 = vpop.f32.mrb[0].mxu0
      %2253 = vdwg.mxu0
      %v2254 = vsel %vm171, %v2096, 0.0
      %v2255 = vsel %vm171, %v2101, 0.0
      %v2256 = vadd.f32 %v2254, %v2255
      %v2257 = vsel %vm171, %v2106, 0.0
      %v2258 = vadd.f32 %v2256, %v2257
      %v2259 = vsel %vm171, %v2111, 0.0
      %v2260 = vadd.f32 %v2258, %v2259
      %v2261 = vsel %vm171, %v2116, 0.0
      %v2262 = vadd.f32 %v2260, %v2261
      %v2263 = vsel %vm171, %v2121, 0.0
      %v2264 = vadd.f32 %v2262, %v2263
      %v2265 = vsel %vm171, %v2126, 0.0
      %v2266 = vadd.f32 %v2264, %v2265
      %v2267 = vsel %vm171, %v2131, 0.0
      %v2268 = vadd.f32 %v2266, %v2267
      %v2269 = vsel %vm171, %v2136, 0.0
      %v2270 = vadd.f32 %v2268, %v2269
      %v2271 = vsel %vm171, %v2141, 0.0
      %v2272 = vadd.f32 %v2270, %v2271
      %v2273 = vsel %vm171, %v2146, 0.0
      %v2274 = vadd.f32 %v2272, %v2273
      %v2275 = vsel %vm171, %v2151, 0.0
      %v2276 = vadd.f32 %v2274, %v2275
      %v2277 = vsel %vm171, %v2156, 0.0
      %v2278 = vadd.f32 %v2276, %v2277
      %v2279 = vsel %vm171, %v2161, 0.0
      %v2280 = vadd.f32 %v2278, %v2279
      %v2281 = vsel %vm171, %v2166, 0.0
      %v2282 = vadd.f32 %v2280, %v2281
      %v2283 = vsel %vm171, %v2171, 0.0
      %v2284 = vadd.f32 %v2282, %v2283
      %v2285 = vsel %vm171, %v2176, 0.0
      %v2286 = vadd.f32 %v2284, %v2285
      %v2287 = vsel %vm171, %v2181, 0.0
      %v2288 = vadd.f32 %v2286, %v2287
      %v2289 = vsel %vm171, %v2186, 0.0
      %v2290 = vadd.f32 %v2288, %v2289
      %v2291 = vsel %vm171, %v2191, 0.0
      %v2292 = vadd.f32 %v2290, %v2291
      %v2293 = vsel %vm171, %v2196, 0.0
      %v2294 = vadd.f32 %v2292, %v2293
      %v2295 = vsel %vm171, %v2201, 0.0
      %v2296 = vadd.f32 %v2294, %v2295
      %v2297 = vsel %vm171, %v2206, 0.0
      %v2298 = vadd.f32 %v2296, %v2297
      %v2299 = vsel %vm171, %v2211, 0.0
      %v2300 = vadd.f32 %v2298, %v2299
      %v2301 = vsel %vm171, %v2216, 0.0
      %v2302 = vadd.f32 %v2300, %v2301
      %v2303 = vsel %vm171, %v2221, 0.0
      %v2304 = vadd.f32 %v2302, %v2303
      %v2305 = vsel %vm171, %v2226, 0.0
      %v2306 = vadd.f32 %v2304, %v2305
      %v2307 = vsel %vm171, %v2231, 0.0
      %v2308 = vadd.f32 %v2306, %v2307
      %v2309 = vsel %vm171, %v2236, 0.0
      %v2310 = vadd.f32 %v2308, %v2309
      %v2311 = vsel %vm171, %v2241, 0.0
      %v2312 = vadd.f32 %v2310, %v2311
      %v2313 = vsel %vm171, %v2246, 0.0
      %v2314 = vadd.f32 %v2312, %v2313
      %v2315 = vsel %vm171, %v2251, 0.0
      %v2316 = vadd.f32 %v2314, %v2315
      %v2317 = vrot.slane %v2316, 4
      %v2318 = vadd.f32 %v2316, %v2317
      %v2319 = vrot.slane %v2318, 2
      %v2320 = vadd.f32 %v2318, %v2319
      %v2321 = vrot.slane %v2320, 1
      %v2322 = vadd.f32 %v2320, %v2321
      %v2323 = vrcp.pop 256.0
      %v2324 = vmul.f32 %v2322, %v2323
      %v2325 = vmul.f32 %v2096, %v2096
      %v2326 = vmul.f32 %v2101, %v2101
      %v2327 = vmul.f32 %v2106, %v2106
      %v2328 = vmul.f32 %v2111, %v2111
      %v2329 = vmul.f32 %v2116, %v2116
      %v2330 = vmul.f32 %v2121, %v2121
      %v2331 = vmul.f32 %v2126, %v2126
      %v2332 = vmul.f32 %v2131, %v2131
      %v2333 = vmul.f32 %v2136, %v2136
      %v2334 = vmul.f32 %v2141, %v2141
      %v2335 = vmul.f32 %v2146, %v2146
      %v2336 = vmul.f32 %v2151, %v2151
      %v2337 = vmul.f32 %v2156, %v2156
      %v2338 = vmul.f32 %v2161, %v2161
      %v2339 = vmul.f32 %v2166, %v2166
      %v2340 = vmul.f32 %v2171, %v2171
      %v2341 = vmul.f32 %v2176, %v2176
      %v2342 = vmul.f32 %v2181, %v2181
      %v2343 = vmul.f32 %v2186, %v2186
      %v2344 = vmul.f32 %v2191, %v2191
      %v2345 = vmul.f32 %v2196, %v2196
      %v2346 = vmul.f32 %v2201, %v2201
      %v2347 = vmul.f32 %v2206, %v2206
      %v2348 = vmul.f32 %v2211, %v2211
      %v2349 = vmul.f32 %v2216, %v2216
      %v2350 = vmul.f32 %v2221, %v2221
      %v2351 = vmul.f32 %v2226, %v2226
      %v2352 = vmul.f32 %v2231, %v2231
      %v2353 = vmul.f32 %v2236, %v2236
      %v2354 = vmul.f32 %v2241, %v2241
      %v2355 = vmul.f32 %v2246, %v2246
      %v2356 = vmul.f32 %v2251, %v2251
      %v2357 = vsel %vm171, %v2325, 0.0
      %v2358 = vsel %vm171, %v2326, 0.0
      %v2359 = vadd.f32 %v2357, %v2358
      %v2360 = vsel %vm171, %v2327, 0.0
      %v2361 = vadd.f32 %v2359, %v2360
      %v2362 = vsel %vm171, %v2328, 0.0
      %v2363 = vadd.f32 %v2361, %v2362
      %v2364 = vsel %vm171, %v2329, 0.0
      %v2365 = vadd.f32 %v2363, %v2364
      %v2366 = vsel %vm171, %v2330, 0.0
      %v2367 = vadd.f32 %v2365, %v2366
      %v2368 = vsel %vm171, %v2331, 0.0
      %v2369 = vadd.f32 %v2367, %v2368
      %v2370 = vsel %vm171, %v2332, 0.0
      %v2371 = vadd.f32 %v2369, %v2370
      %v2372 = vsel %vm171, %v2333, 0.0
      %v2373 = vadd.f32 %v2371, %v2372
      %v2374 = vsel %vm171, %v2334, 0.0
      %v2375 = vadd.f32 %v2373, %v2374
      %v2376 = vsel %vm171, %v2335, 0.0
      %v2377 = vadd.f32 %v2375, %v2376
      %v2378 = vsel %vm171, %v2336, 0.0
      %v2379 = vadd.f32 %v2377, %v2378
      %v2380 = vsel %vm171, %v2337, 0.0
      %v2381 = vadd.f32 %v2379, %v2380
      %v2382 = vsel %vm171, %v2338, 0.0
      %v2383 = vadd.f32 %v2381, %v2382
      %v2384 = vsel %vm171, %v2339, 0.0
      %v2385 = vadd.f32 %v2383, %v2384
      %v2386 = vsel %vm171, %v2340, 0.0
      %v2387 = vadd.f32 %v2385, %v2386
      %v2388 = vsel %vm171, %v2341, 0.0
      %v2389 = vadd.f32 %v2387, %v2388
      %v2390 = vsel %vm171, %v2342, 0.0
      %v2391 = vadd.f32 %v2389, %v2390
      %v2392 = vsel %vm171, %v2343, 0.0
      %v2393 = vadd.f32 %v2391, %v2392
      %v2394 = vsel %vm171, %v2344, 0.0
      %v2395 = vadd.f32 %v2393, %v2394
      %v2396 = vsel %vm171, %v2345, 0.0
      %v2397 = vadd.f32 %v2395, %v2396
      %v2398 = vsel %vm171, %v2346, 0.0
      %v2399 = vadd.f32 %v2397, %v2398
      %v2400 = vsel %vm171, %v2347, 0.0
      %v2401 = vadd.f32 %v2399, %v2400
      %v2402 = vsel %vm171, %v2348, 0.0
      %v2403 = vadd.f32 %v2401, %v2402
      %v2404 = vsel %vm171, %v2349, 0.0
      %v2405 = vadd.f32 %v2403, %v2404
      %v2406 = vsel %vm171, %v2350, 0.0
      %v2407 = vadd.f32 %v2405, %v2406
      %v2408 = vsel %vm171, %v2351, 0.0
      %v2409 = vadd.f32 %v2407, %v2408
      %v2410 = vsel %vm171, %v2352, 0.0
      %v2411 = vadd.f32 %v2409, %v2410
      %v2412 = vsel %vm171, %v2353, 0.0
      %v2413 = vadd.f32 %v2411, %v2412
      %v2414 = vsel %vm171, %v2354, 0.0
      %v2415 = vadd.f32 %v2413, %v2414
      %v2416 = vsel %vm171, %v2355, 0.0
      %v2417 = vadd.f32 %v2415, %v2416
      %v2418 = vsel %vm171, %v2356, 0.0
      %v2419 = vadd.f32 %v2417, %v2418
      %v2420 = vrot.slane %v2419, 4
      %v2421 = vadd.f32 %v2419, %v2420
      %v2422 = vrot.slane %v2421, 2
      %v2423 = vadd.f32 %v2421, %v2422
      %v2424 = vrot.slane %v2423, 1
      %v2425 = vadd.f32 %v2423, %v2424
      %v2426 = vmul.f32 %v2425, %v2323
      %v2427 = vmul.f32 %v2324, %v2324
      %v2428 = vsub.f32 %v2426, %v2427
      %v2429 = vmax.f32 %v2428, 0.0
      %v2430 = vsub.f32 %v2096, %v2324
      %v2431 = vsub.f32 %v2101, %v2324
      %v2432 = vsub.f32 %v2106, %v2324
      %v2433 = vsub.f32 %v2111, %v2324
      %v2434 = vsub.f32 %v2116, %v2324
      %v2435 = vsub.f32 %v2121, %v2324
      %v2436 = vsub.f32 %v2126, %v2324
      %v2437 = vsub.f32 %v2131, %v2324
      %v2438 = vsub.f32 %v2136, %v2324
      %v2439 = vsub.f32 %v2141, %v2324
      %v2440 = vsub.f32 %v2146, %v2324
      %v2441 = vsub.f32 %v2151, %v2324
      %v2442 = vsub.f32 %v2156, %v2324
      %v2443 = vsub.f32 %v2161, %v2324
      %v2444 = vsub.f32 %v2166, %v2324
      %v2445 = vsub.f32 %v2171, %v2324
      %v2446 = vsub.f32 %v2176, %v2324
      %v2447 = vsub.f32 %v2181, %v2324
      %v2448 = vsub.f32 %v2186, %v2324
      %v2449 = vsub.f32 %v2191, %v2324
      %v2450 = vsub.f32 %v2196, %v2324
      %v2451 = vsub.f32 %v2201, %v2324
      %v2452 = vsub.f32 %v2206, %v2324
      %v2453 = vsub.f32 %v2211, %v2324
      %v2454 = vsub.f32 %v2216, %v2324
      %v2455 = vsub.f32 %v2221, %v2324
      %v2456 = vsub.f32 %v2226, %v2324
      %v2457 = vsub.f32 %v2231, %v2324
      %v2458 = vsub.f32 %v2236, %v2324
      %v2459 = vsub.f32 %v2241, %v2324
      %v2460 = vsub.f32 %v2246, %v2324
      %v2461 = vsub.f32 %v2251, %v2324
      %v2462 = vadd.f32 %v2429, 1e-05
      %v2463 = vrsqrt.pop %v2462
      %v2464 = vmul.f32 %v2430, %v2463
      %v2465 = vmul.f32 %v2431, %v2463
      %v2466 = vmul.f32 %v2432, %v2463
      %v2467 = vmul.f32 %v2433, %v2463
      %v2468 = vmul.f32 %v2434, %v2463
      %v2469 = vmul.f32 %v2435, %v2463
      %v2470 = vmul.f32 %v2436, %v2463
      %v2471 = vmul.f32 %v2437, %v2463
      %v2472 = vmul.f32 %v2438, %v2463
      %v2473 = vmul.f32 %v2439, %v2463
      %v2474 = vmul.f32 %v2440, %v2463
      %v2475 = vmul.f32 %v2441, %v2463
      %v2476 = vmul.f32 %v2442, %v2463
      %v2477 = vmul.f32 %v2443, %v2463
      %v2478 = vmul.f32 %v2444, %v2463
      %v2479 = vmul.f32 %v2445, %v2463
      %v2480 = vmul.f32 %v2446, %v2463
      %v2481 = vmul.f32 %v2447, %v2463
      %v2482 = vmul.f32 %v2448, %v2463
      %v2483 = vmul.f32 %v2449, %v2463
      %v2484 = vmul.f32 %v2450, %v2463
      %v2485 = vmul.f32 %v2451, %v2463
      %v2486 = vmul.f32 %v2452, %v2463
      %v2487 = vmul.f32 %v2453, %v2463
      %v2488 = vmul.f32 %v2454, %v2463
      %v2489 = vmul.f32 %v2455, %v2463
      %v2490 = vmul.f32 %v2456, %v2463
      %v2491 = vmul.f32 %v2457, %v2463
      %v2492 = vmul.f32 %v2458, %v2463
      %v2493 = vmul.f32 %v2459, %v2463
      %v2494 = vmul.f32 %v2460, %v2463
      %v2495 = vmul.f32 %v2461, %v2463
      %v2496 = vmax.f32 %v2464, 0.0
      %v2497 = vmax.f32 %v2465, 0.0
      %v2498 = vmax.f32 %v2466, 0.0
      %v2499 = vmax.f32 %v2467, 0.0
      %v2500 = vmax.f32 %v2468, 0.0
      %v2501 = vmax.f32 %v2469, 0.0
      %v2502 = vmax.f32 %v2470, 0.0
      %v2503 = vmax.f32 %v2471, 0.0
      %v2504 = vmax.f32 %v2472, 0.0
      %v2505 = vmax.f32 %v2473, 0.0
      %v2506 = vmax.f32 %v2474, 0.0
      %v2507 = vmax.f32 %v2475, 0.0
      %v2508 = vmax.f32 %v2476, 0.0
      %v2509 = vmax.f32 %v2477, 0.0
      %v2510 = vmax.f32 %v2478, 0.0
      %v2511 = vmax.f32 %v2479, 0.0
      %v2512 = vmax.f32 %v2480, 0.0
      %v2513 = vmax.f32 %v2481, 0.0
      %v2514 = vmax.f32 %v2482, 0.0
      %v2515 = vmax.f32 %v2483, 0.0
      %v2516 = vmax.f32 %v2484, 0.0
      %v2517 = vmax.f32 %v2485, 0.0
      %v2518 = vmax.f32 %v2486, 0.0
      %v2519 = vmax.f32 %v2487, 0.0
      %v2520 = vmax.f32 %v2488, 0.0
      %v2521 = vmax.f32 %v2489, 0.0
      %v2522 = vmax.f32 %v2490, 0.0
      %v2523 = vmax.f32 %v2491, 0.0
      %v2524 = vmax.f32 %v2492, 0.0
      %v2525 = vmax.f32 %v2493, 0.0
      %v2526 = vmax.f32 %v2494, 0.0
      %v2527 = vmax.f32 %v2495, 0.0
      %2528 = vst.msk [vmem:[%s249 + $0x1] sm:$0xff] %vm171, %v2496
      %2529 = vst.msk [vmem:[%s249 + $0x9] sm:$0xff] %vm171, %v2497
      %2530 = vst.msk [vmem:[%s249 + $0x19] sm:$0xff] %vm171, %v2498
      %2531 = vst.msk [vmem:[%s249 + $0x21] sm:$0xff] %vm171, %v2499
      %2532 = vst.msk [vmem:[%s249 + $0x31] sm:$0xff] %vm171, %v2500
      %2533 = vst.msk [vmem:[%s249 + $0x39] sm:$0xff] %vm171, %v2501
      %2534 = vst.msk [vmem:[%s249 + $0x49] sm:$0xff] %vm171, %v2502
      %2535 = vst.msk [vmem:[%s249 + $0x51] sm:$0xff] %vm171, %v2503
      %2536 = vst.msk [vmem:[%s249 + $0x61] sm:$0xff] %vm171, %v2504
      %2537 = vst.msk [vmem:[%s249 + $0x69] sm:$0xff] %vm171, %v2505
      %2538 = vst.msk [vmem:[%s249 + $0x79] sm:$0xff] %vm171, %v2506
      %2539 = vst.msk [vmem:[%s249 + $0x81] sm:$0xff] %vm171, %v2507
      %2540 = vst.msk [vmem:[%s249 + $0x91] sm:$0xff] %vm171, %v2508
      %2541 = vst.msk [vmem:[%s249 + $0x99] sm:$0xff] %vm171, %v2509
      %2542 = vst.msk [vmem:[%s249 + $0xa9] sm:$0xff] %vm171, %v2510
      %2543 = vst.msk [vmem:[%s249 + $0xb1] sm:$0xff] %vm171, %v2511
      %2544 = vst.msk [vmem:[%s249 + $0xc1] sm:$0xff] %vm171, %v2512
      %2545 = vst.msk [vmem:[%s249 + $0xc9] sm:$0xff] %vm171, %v2513
      %2546 = vst.msk [vmem:[%s249 + $0xd9] sm:$0xff] %vm171, %v2514
      %2547 = vst.msk [vmem:[%s249 + $0xe1] sm:$0xff] %vm171, %v2515
      %2548 = vst.msk [vmem:[%s249 + $0xf1] sm:$0xff] %vm171, %v2516
      %2549 = vst.msk [vmem:[%s249 + $0xf9] sm:$0xff] %vm171, %v2517
      %2550 = vst.msk [vmem:[%s249 + $0x109] sm:$0xff] %vm171, %v2518
      %2551 = vst.msk [vmem:[%s249 + $0x111] sm:$0xff] %vm171, %v2519
      %2552 = vst.msk [vmem:[%s249 + $0x121] sm:$0xff] %vm171, %v2520
      %2553 = vst.msk [vmem:[%s249 + $0x129] sm:$0xff] %vm171, %v2521
      %2554 = vst.msk [vmem:[%s249 + $0x139] sm:$0xff] %vm171, %v2522
      %2555 = vst.msk [vmem:[%s249 + $0x141] sm:$0xff] %vm171, %v2523
      %2556 = vst.msk [vmem:[%s249 + $0x151] sm:$0xff] %vm171, %v2524
      %2557 = vst.msk [vmem:[%s249 + $0x159] sm:$0xff] %vm171, %v2525
      %2558 = vst.msk [vmem:[%s249 + $0x169] sm:$0xff] %vm171, %v2526
      %2559 = vst.msk [vmem:[%s249 + $0x171] sm:$0xff] %vm171, %v2527
      %v2560 = vld [vmem:[#allocation2] sm:$0xff]
      %v2561 = vld [vmem:[#allocation2 + $0x8] sm:$0xff]
      %v2562 = vld [vmem:[#allocation2 + $0x18] sm:$0xff]
      %v2563 = vld [vmem:[#allocation2 + $0x20] sm:$0xff]
      %v2564 = vld [vmem:[#allocation2 + $0x30] sm:$0xff]
      %v2565 = vld [vmem:[#allocation2 + $0x38] sm:$0xff]
      %v2566 = vld [vmem:[#allocation2 + $0x48] sm:$0xff]
      %v2567 = vld [vmem:[#allocation2 + $0x50] sm:$0xff]
      %v2568 = vld [vmem:[#allocation2 + $0x60] sm:$0xff]
      %v2569 = vld [vmem:[#allocation2 + $0x68] sm:$0xff]
      %v2570 = vld [vmem:[#allocation2 + $0x78] sm:$0xff]
      %v2571 = vld [vmem:[#allocation2 + $0x80] sm:$0xff]
      %v2572 = vld [vmem:[#allocation2 + $0x90] sm:$0xff]
      %v2573 = vld [vmem:[#allocation2 + $0x98] sm:$0xff]
      %v2574 = vld [vmem:[#allocation2 + $0xa8] sm:$0xff]
      %v2575 = vld [vmem:[#allocation2 + $0xb0] sm:$0xff]
      %v2576 = vld [vmem:[#allocation2 + $0xc0] sm:$0xff]
      %v2577 = vld [vmem:[#allocation2 + $0xc8] sm:$0xff]
      %v2578 = vld [vmem:[#allocation2 + $0xd8] sm:$0xff]
      %v2579 = vld [vmem:[#allocation2 + $0xe0] sm:$0xff]
      %v2580 = vld [vmem:[#allocation2 + $0xf0] sm:$0xff]
      %v2581 = vld [vmem:[#allocation2 + $0xf8] sm:$0xff]
      %v2582 = vld [vmem:[#allocation2 + $0x108] sm:$0xff]
      %v2583 = vld [vmem:[#allocation2 + $0x110] sm:$0xff]
      %v2584 = vld [vmem:[#allocation2 + $0x120] sm:$0xff]
      %v2585 = vld [vmem:[#allocation2 + $0x128] sm:$0xff]
      %v2586 = vld [vmem:[#allocation2 + $0x138] sm:$0xff]
      %v2587 = vld [vmem:[#allocation2 + $0x140] sm:$0xff]
      %v2588 = vld [vmem:[#allocation2 + $0x150] sm:$0xff]
      %v2589 = vld [vmem:[#allocation2 + $0x158] sm:$0xff]
      %v2590 = vld [vmem:[#allocation2 + $0x168] sm:$0xff]
      %v2591 = vld [vmem:[#allocation2 + $0x170] sm:$0xff]
      %2592 = vst.msk [vmem:[#allocation3] sm:$0xff] %vm171, %v2560
      %2593 = vst.msk [vmem:[#allocation3 + $0x8] sm:$0xff] %vm171, %v2561
      %2594 = vst.msk [vmem:[#allocation3 + $0x10] sm:$0xff] %vm171, %v2562
      %2595 = vst.msk [vmem:[#allocation3 + $0x18] sm:$0xff] %vm171, %v2563
      %2596 = vst.msk [vmem:[#allocation3 + $0x20] sm:$0xff] %vm171, %v2564
      %2597 = vst.msk [vmem:[#allocation3 + $0x28] sm:$0xff] %vm171, %v2565
      %2598 = vst.msk [vmem:[#allocation3 + $0x30] sm:$0xff] %vm171, %v2566
      %2599 = vst.msk [vmem:[#allocation3 + $0x38] sm:$0xff] %vm171, %v2567
      %2600 = vst.msk [vmem:[#allocation3 + $0x40] sm:$0xff] %vm171, %v2568
      %2601 = vst.msk [vmem:[#allocation3 + $0x48] sm:$0xff] %vm171, %v2569
      %2602 = vst.msk [vmem:[#allocation3 + $0x50] sm:$0xff] %vm171, %v2570
      %2603 = vst.msk [vmem:[#allocation3 + $0x58] sm:$0xff] %vm171, %v2571
      %2604 = vst.msk [vmem:[#allocation3 + $0x60] sm:$0xff] %vm171, %v2572
      %2605 = vst.msk [vmem:[#allocation3 + $0x68] sm:$0xff] %vm171, %v2573
      %2606 = vst.msk [vmem:[#allocation3 + $0x70] sm:$0xff] %vm171, %v2574
      %2607 = vst.msk [vmem:[#allocation3 + $0x78] sm:$0xff] %vm171, %v2575
      %2608 = vst.msk [vmem:[#allocation3 + $0x80] sm:$0xff] %vm171, %v2576
      %2609 = vst.msk [vmem:[#allocation3 + $0x88] sm:$0xff] %vm171, %v2577
      %2610 = vst.msk [vmem:[#allocation3 + $0x90] sm:$0xff] %vm171, %v2578
      %2611 = vst.msk [vmem:[#allocation3 + $0x98] sm:$0xff] %vm171, %v2579
      %2612 = vst.msk [vmem:[#allocation3 + $0xa0] sm:$0xff] %vm171, %v2580
      %2613 = vst.msk [vmem:[#allocation3 + $0xa8] sm:$0xff] %vm171, %v2581
      %2614 = vst.msk [vmem:[#allocation3 + $0xb0] sm:$0xff] %vm171, %v2582
      %2615 = vst.msk [vmem:[#allocation3 + $0xb8] sm:$0xff] %vm171, %v2583
      %2616 = vst.msk [vmem:[#allocation3 + $0xc0] sm:$0xff] %vm171, %v2584
      %2617 = vst.msk [vmem:[#allocation3 + $0xc8] sm:$0xff] %vm171, %v2585
      %2618 = vst.msk [vmem:[#allocation3 + $0xd0] sm:$0xff] %vm171, %v2586
      %2619 = vst.msk [vmem:[#allocation3 + $0xd8] sm:$0xff] %vm171, %v2587
      %2620 = vst.msk [vmem:[#allocation3 + $0xe0] sm:$0xff] %vm171, %v2588
      %2621 = vst.msk [vmem:[#allocation3 + $0xe8] sm:$0xff] %vm171, %v2589
      %2622 = vst.msk [vmem:[#allocation3 + $0xf0] sm:$0xff] %vm171, %v2590
      %2623 = vst.msk [vmem:[#allocation3 + $0xf8] sm:$0xff] %vm171, %v2591
      %v2624 = vld [vmem:[#allocation2 + $0x1] sm:$0xff]
      %v2625 = vld [vmem:[#allocation2 + $0x9] sm:$0xff]
      %v2626 = vld [vmem:[#allocation2 + $0x19] sm:$0xff]
      %v2627 = vld [vmem:[#allocation2 + $0x21] sm:$0xff]
      %v2628 = vld [vmem:[#allocation2 + $0x31] sm:$0xff]
      %v2629 = vld [vmem:[#allocation2 + $0x39] sm:$0xff]
      %v2630 = vld [vmem:[#allocation2 + $0x49] sm:$0xff]
      %v2631 = vld [vmem:[#allocation2 + $0x51] sm:$0xff]
      %v2632 = vld [vmem:[#allocation2 + $0x61] sm:$0xff]
      %v2633 = vld [vmem:[#allocation2 + $0x69] sm:$0xff]
      %v2634 = vld [vmem:[#allocation2 + $0x79] sm:$0xff]
      %v2635 = vld [vmem:[#allocation2 + $0x81] sm:$0xff]
      %v2636 = vld [vmem:[#allocation2 + $0x91] sm:$0xff]
      %v2637 = vld [vmem:[#allocation2 + $0x99] sm:$0xff]
      %v2638 = vld [vmem:[#allocation2 + $0xa9] sm:$0xff]
      %v2639 = vld [vmem:[#allocation2 + $0xb1] sm:$0xff]
      %v2640 = vld [vmem:[#allocation2 + $0xc1] sm:$0xff]
      %v2641 = vld [vmem:[#allocation2 + $0xc9] sm:$0xff]
      %v2642 = vld [vmem:[#allocation2 + $0xd9] sm:$0xff]
      %v2643 = vld [vmem:[#allocation2 + $0xe1] sm:$0xff]
      %v2644 = vld [vmem:[#allocation2 + $0xf1] sm:$0xff]
      %v2645 = vld [vmem:[#allocation2 + $0xf9] sm:$0xff]
      %v2646 = vld [vmem:[#allocation2 + $0x109] sm:$0xff]
      %v2647 = vld [vmem:[#allocation2 + $0x111] sm:$0xff]
      %v2648 = vld [vmem:[#allocation2 + $0x121] sm:$0xff]
      %v2649 = vld [vmem:[#allocation2 + $0x129] sm:$0xff]
      %v2650 = vld [vmem:[#allocation2 + $0x139] sm:$0xff]
      %v2651 = vld [vmem:[#allocation2 + $0x141] sm:$0xff]
      %v2652 = vld [vmem:[#allocation2 + $0x151] sm:$0xff]
      %v2653 = vld [vmem:[#allocation2 + $0x159] sm:$0xff]
      %v2654 = vld [vmem:[#allocation2 + $0x169] sm:$0xff]
      %v2655 = vld [vmem:[#allocation2 + $0x171] sm:$0xff]
      %2688 = vrot.lane.b32.xlu0 %v2624, 4
      %v2689 = vpop.permute.xlu0 %2688
      %2690 = vrot.lane.b32.xlu0 %v2625, 4
      %v2691 = vpop.permute.xlu0 %2690
      %2692 = vrot.lane.b32.xlu0 %v2626, 4
      %v2693 = vpop.permute.xlu0 %2692
      %2694 = vrot.lane.b32.xlu0 %v2627, 4
      %v2695 = vpop.permute.xlu0 %2694
      %2696 = vrot.lane.b32.xlu0 %v2628, 4
      %v2697 = vpop.permute.xlu0 %2696
      %2698 = vrot.lane.b32.xlu0 %v2629, 4
      %v2699 = vpop.permute.xlu0 %2698
      %2700 = vrot.lane.b32.xlu0 %v2630, 4
      %v2701 = vpop.permute.xlu0 %2700
      %2702 = vrot.lane.b32.xlu0 %v2631, 4
      %v2703 = vpop.permute.xlu0 %2702
      %2704 = vrot.lane.b32.xlu0 %v2632, 4
      %v2705 = vpop.permute.xlu0 %2704
      %2706 = vrot.lane.b32.xlu0 %v2633, 4
      %v2707 = vpop.permute.xlu0 %2706
      %2708 = vrot.lane.b32.xlu0 %v2634, 4
      %v2709 = vpop.permute.xlu0 %2708
      %2710 = vrot.lane.b32.xlu0 %v2635, 4
      %v2711 = vpop.permute.xlu0 %2710
      %2712 = vrot.lane.b32.xlu0 %v2636, 4
      %v2713 = vpop.permute.xlu0 %2712
      %2714 = vrot.lane.b32.xlu0 %v2637, 4
      %v2715 = vpop.permute.xlu0 %2714
      %2716 = vrot.lane.b32.xlu0 %v2638, 4
      %v2717 = vpop.permute.xlu0 %2716
      %2718 = vrot.lane.b32.xlu0 %v2639, 4
      %v2719 = vpop.permute.xlu0 %2718
      %2720 = vrot.lane.b32.xlu0 %v2640, 4
      %v2721 = vpop.permute.xlu0 %2720
      %2722 = vrot.lane.b32.xlu0 %v2641, 4
      %v2723 = vpop.permute.xlu0 %2722
      %2724 = vrot.lane.b32.xlu0 %v2642, 4
      %v2725 = vpop.permute.xlu0 %2724
      %2726 = vrot.lane.b32.xlu0 %v2643, 4
      %v2727 = vpop.permute.xlu0 %2726
      %2728 = vrot.lane.b32.xlu0 %v2644, 4
      %v2729 = vpop.permute.xlu0 %2728
      %2730 = vrot.lane.b32.xlu0 %v2645, 4
      %v2731 = vpop.permute.xlu0 %2730
      %2732 = vrot.lane.b32.xlu0 %v2646, 4
      %v2733 = vpop.permute.xlu0 %2732
      %2734 = vrot.lane.b32.xlu0 %v2647, 4
      %v2735 = vpop.permute.xlu0 %2734
      %2736 = vrot.lane.b32.xlu0 %v2648, 4
      %v2737 = vpop.permute.xlu0 %2736
      %2738 = vrot.lane.b32.xlu0 %v2649, 4
      %v2739 = vpop.permute.xlu0 %2738
      %2740 = vrot.lane.b32.xlu0 %v2650, 4
      %v2741 = vpop.permute.xlu0 %2740
      %2742 = vrot.lane.b32.xlu0 %v2651, 4
      %v2743 = vpop.permute.xlu0 %2742
      %2744 = vrot.lane.b32.xlu0 %v2652, 4
      %v2745 = vpop.permute.xlu0 %2744
      %2746 = vrot.lane.b32.xlu0 %v2653, 4
      %v2747 = vpop.permute.xlu0 %2746
      %2748 = vrot.lane.b32.xlu0 %v2654, 4
      %v2749 = vpop.permute.xlu0 %2748
      %2750 = vrot.lane.b32.xlu0 %v2655, 4
      %v2751 = vpop.permute.xlu0 %2750
      %2784 = vst.msk [vmem:[#allocation3] sm:$0xff] %vm506, %v2689
      %2785 = vst.msk [vmem:[#allocation3 + $0x8] sm:$0xff] %vm506, %v2691
      %2786 = vst.msk [vmem:[#allocation3 + $0x10] sm:$0xff] %vm506, %v2693
      %2787 = vst.msk [vmem:[#allocation3 + $0x18] sm:$0xff] %vm506, %v2695
      %2788 = vst.msk [vmem:[#allocation3 + $0x20] sm:$0xff] %vm506, %v2697
      %2789 = vst.msk [vmem:[#allocation3 + $0x28] sm:$0xff] %vm506, %v2699
      %2790 = vst.msk [vmem:[#allocation3 + $0x30] sm:$0xff] %vm506, %v2701
      %2791 = vst.msk [vmem:[#allocation3 + $0x38] sm:$0xff] %vm506, %v2703
      %2792 = vst.msk [vmem:[#allocation3 + $0x40] sm:$0xff] %vm506, %v2705
      %2793 = vst.msk [vmem:[#allocation3 + $0x48] sm:$0xff] %vm506, %v2707
      %2794 = vst.msk [vmem:[#allocation3 + $0x50] sm:$0xff] %vm506, %v2709
      %2795 = vst.msk [vmem:[#allocation3 + $0x58] sm:$0xff] %vm506, %v2711
      %2796 = vst.msk [vmem:[#allocation3 + $0x60] sm:$0xff] %vm506, %v2713
      %2797 = vst.msk [vmem:[#allocation3 + $0x68] sm:$0xff] %vm506, %v2715
      %2798 = vst.msk [vmem:[#allocation3 + $0x70] sm:$0xff] %vm506, %v2717
      %2799 = vst.msk [vmem:[#allocation3 + $0x78] sm:$0xff] %vm506, %v2719
      %2800 = vst.msk [vmem:[#allocation3 + $0x80] sm:$0xff] %vm506, %v2721
      %2801 = vst.msk [vmem:[#allocation3 + $0x88] sm:$0xff] %vm506, %v2723
      %2802 = vst.msk [vmem:[#allocation3 + $0x90] sm:$0xff] %vm506, %v2725
      %2803 = vst.msk [vmem:[#allocation3 + $0x98] sm:$0xff] %vm506, %v2727
      %2804 = vst.msk [vmem:[#allocation3 + $0xa0] sm:$0xff] %vm506, %v2729
      %2805 = vst.msk [vmem:[#allocation3 + $0xa8] sm:$0xff] %vm506, %v2731
      %2806 = vst.msk [vmem:[#allocation3 + $0xb0] sm:$0xff] %vm506, %v2733
      %2807 = vst.msk [vmem:[#allocation3 + $0xb8] sm:$0xff] %vm506, %v2735
      %2808 = vst.msk [vmem:[#allocation3 + $0xc0] sm:$0xff] %vm506, %v2737
      %2809 = vst.msk [vmem:[#allocation3 + $0xc8] sm:$0xff] %vm506, %v2739
      %2810 = vst.msk [vmem:[#allocation3 + $0xd0] sm:$0xff] %vm506, %v2741
      %2811 = vst.msk [vmem:[#allocation3 + $0xd8] sm:$0xff] %vm506, %v2743
      %2812 = vst.msk [vmem:[#allocation3 + $0xe0] sm:$0xff] %vm506, %v2745
      %2813 = vst.msk [vmem:[#allocation3 + $0xe8] sm:$0xff] %vm506, %v2747
      %2814 = vst.msk [vmem:[#allocation3 + $0xf0] sm:$0xff] %vm506, %v2749
      %2815 = vst.msk [vmem:[#allocation3 + $0xf8] sm:$0xff] %vm506, %v2751
      %v2816 = vld [vmem:[#allocation2 + $0x2] sm:$0xff]
      %v2817 = vld [vmem:[#allocation2 + $0xa] sm:$0xff]
      %v2818 = vld [vmem:[#allocation2 + $0x1a] sm:$0xff]
      %v2819 = vld [vmem:[#allocation2 + $0x22] sm:$0xff]
      %v2820 = vld [vmem:[#allocation2 + $0x32] sm:$0xff]
      %v2821 = vld [vmem:[#allocation2 + $0x3a] sm:$0xff]
      %v2822 = vld [vmem:[#allocation2 + $0x4a] sm:$0xff]
      %v2823 = vld [vmem:[#allocation2 + $0x52] sm:$0xff]
      %v2824 = vld [vmem:[#allocation2 + $0x62] sm:$0xff]
      %v2825 = vld [vmem:[#allocation2 + $0x6a] sm:$0xff]
      %v2826 = vld [vmem:[#allocation2 + $0x7a] sm:$0xff]
      %v2827 = vld [vmem:[#allocation2 + $0x82] sm:$0xff]
      %v2828 = vld [vmem:[#allocation2 + $0x92] sm:$0xff]
      %v2829 = vld [vmem:[#allocation2 + $0x9a] sm:$0xff]
      %v2830 = vld [vmem:[#allocation2 + $0xaa] sm:$0xff]
      %v2831 = vld [vmem:[#allocation2 + $0xb2] sm:$0xff]
      %v2832 = vld [vmem:[#allocation2 + $0xc2] sm:$0xff]
      %v2833 = vld [vmem:[#allocation2 + $0xca] sm:$0xff]
      %v2834 = vld [vmem:[#allocation2 + $0xda] sm:$0xff]
      %v2835 = vld [vmem:[#allocation2 + $0xe2] sm:$0xff]
      %v2836 = vld [vmem:[#allocation2 + $0xf2] sm:$0xff]
      %v2837 = vld [vmem:[#allocation2 + $0xfa] sm:$0xff]
      %v2838 = vld [vmem:[#allocation2 + $0x10a] sm:$0xff]
      %v2839 = vld [vmem:[#allocation2 + $0x112] sm:$0xff]
      %v2840 = vld [vmem:[#allocation2 + $0x122] sm:$0xff]
      %v2841 = vld [vmem:[#allocation2 + $0x12a] sm:$0xff]
      %v2842 = vld [vmem:[#allocation2 + $0x13a] sm:$0xff]
      %v2843 = vld [vmem:[#allocation2 + $0x142] sm:$0xff]
      %v2844 = vld [vmem:[#allocation2 + $0x152] sm:$0xff]
      %v2845 = vld [vmem:[#allocation2 + $0x15a] sm:$0xff]
      %v2846 = vld [vmem:[#allocation2 + $0x16a] sm:$0xff]
      %v2847 = vld [vmem:[#allocation2 + $0x172] sm:$0xff]
      %2880 = vrot.lane.b32.xlu0 %v2816, 8
      %v2881 = vpop.permute.xlu0 %2880
      %2882 = vrot.lane.b32.xlu0 %v2817, 8
      %v2883 = vpop.permute.xlu0 %2882
      %2884 = vrot.lane.b32.xlu0 %v2818, 8
      %v2885 = vpop.permute.xlu0 %2884
      %2886 = vrot.lane.b32.xlu0 %v2819, 8
      %v2887 = vpop.permute.xlu0 %2886
      %2888 = vrot.lane.b32.xlu0 %v2820, 8
      %v2889 = vpop.permute.xlu0 %2888
      %2890 = vrot.lane.b32.xlu0 %v2821, 8
      %v2891 = vpop.permute.xlu0 %2890
      %2892 = vrot.lane.b32.xlu0 %v2822, 8
      %v2893 = vpop.permute.xlu0 %2892
      %2894 = vrot.lane.b32.xlu0 %v2823, 8
      %v2895 = vpop.permute.xlu0 %2894
      %2896 = vrot.lane.b32.xlu0 %v2824, 8
      %v2897 = vpop.permute.xlu0 %2896
      %2898 = vrot.lane.b32.xlu0 %v2825, 8
      %v2899 = vpop.permute.xlu0 %2898
      %2900 = vrot.lane.b32.xlu0 %v2826, 8
      %v2901 = vpop.permute.xlu0 %2900
      %2902 = vrot.lane.b32.xlu0 %v2827, 8
      %v2903 = vpop.permute.xlu0 %2902
      %2904 = vrot.lane.b32.xlu0 %v2828, 8
      %v2905 = vpop.permute.xlu0 %2904
      %2906 = vrot.lane.b32.xlu0 %v2829, 8
      %v2907 = vpop.permute.xlu0 %2906
      %2908 = vrot.lane.b32.xlu0 %v2830, 8
      %v2909 = vpop.permute.xlu0 %2908
      %2910 = vrot.lane.b32.xlu0 %v2831, 8
      %v2911 = vpop.permute.xlu0 %2910
      %2912 = vrot.lane.b32.xlu0 %v2832, 8
      %v2913 = vpop.permute.xlu0 %2912
      %2914 = vrot.lane.b32.xlu0 %v2833, 8
      %v2915 = vpop.permute.xlu0 %2914
      %2916 = vrot.lane.b32.xlu0 %v2834, 8
      %v2917 = vpop.permute.xlu0 %2916
      %2918 = vrot.lane.b32.xlu0 %v2835, 8
      %v2919 = vpop.permute.xlu0 %2918
      %2920 = vrot.lane.b32.xlu0 %v2836, 8
      %v2921 = vpop.permute.xlu0 %2920
      %2922 = vrot.lane.b32.xlu0 %v2837, 8
      %v2923 = vpop.permute.xlu0 %2922
      %2924 = vrot.lane.b32.xlu0 %v2838, 8
      %v2925 = vpop.permute.xlu0 %2924
      %2926 = vrot.lane.b32.xlu0 %v2839, 8
      %v2927 = vpop.permute.xlu0 %2926
      %2928 = vrot.lane.b32.xlu0 %v2840, 8
      %v2929 = vpop.permute.xlu0 %2928
      %2930 = vrot.lane.b32.xlu0 %v2841, 8
      %v2931 = vpop.permute.xlu0 %2930
      %2932 = vrot.lane.b32.xlu0 %v2842, 8
      %v2933 = vpop.permute.xlu0 %2932
      %2934 = vrot.lane.b32.xlu0 %v2843, 8
      %v2935 = vpop.permute.xlu0 %2934
      %2936 = vrot.lane.b32.xlu0 %v2844, 8
      %v2937 = vpop.permute.xlu0 %2936
      %2938 = vrot.lane.b32.xlu0 %v2845, 8
      %v2939 = vpop.permute.xlu0 %2938
      %2940 = vrot.lane.b32.xlu0 %v2846, 8
      %v2941 = vpop.permute.xlu0 %2940
      %2942 = vrot.lane.b32.xlu0 %v2847, 8
      %v2943 = vpop.permute.xlu0 %2942
      %2976 = vst.msk [vmem:[#allocation3] sm:$0xff] %vm699, %v2881
      %2977 = vst.msk [vmem:[#allocation3 + $0x8] sm:$0xff] %vm699, %v2883
      %2978 = vst.msk [vmem:[#allocation3 + $0x10] sm:$0xff] %vm699, %v2885
      %2979 = vst.msk [vmem:[#allocation3 + $0x18] sm:$0xff] %vm699, %v2887
      %2980 = vst.msk [vmem:[#allocation3 + $0x20] sm:$0xff] %vm699, %v2889
      %2981 = vst.msk [vmem:[#allocation3 + $0x28] sm:$0xff] %vm699, %v2891
      %2982 = vst.msk [vmem:[#allocation3 + $0x30] sm:$0xff] %vm699, %v2893
      %2983 = vst.msk [vmem:[#allocation3 + $0x38] sm:$0xff] %vm699, %v2895
      %2984 = vst.msk [vmem:[#allocation3 + $0x40] sm:$0xff] %vm699, %v2897
      %2985 = vst.msk [vmem:[#allocation3 + $0x48] sm:$0xff] %vm699, %v2899
      %2986 = vst.msk [vmem:[#allocation3 + $0x50] sm:$0xff] %vm699, %v2901
      %2987 = vst.msk [vmem:[#allocation3 + $0x58] sm:$0xff] %vm699, %v2903
      %2988 = vst.msk [vmem:[#allocation3 + $0x60] sm:$0xff] %vm699, %v2905
      %2989 = vst.msk [vmem:[#allocation3 + $0x68] sm:$0xff] %vm699, %v2907
      %2990 = vst.msk [vmem:[#allocation3 + $0x70] sm:$0xff] %vm699, %v2909
      %2991 = vst.msk [vmem:[#allocation3 + $0x78] sm:$0xff] %vm699, %v2911
      %2992 = vst.msk [vmem:[#allocation3 + $0x80] sm:$0xff] %vm699, %v2913
      %2993 = vst.msk [vmem:[#allocation3 + $0x88] sm:$0xff] %vm699, %v2915
      %2994 = vst.msk [vmem:[#allocation3 + $0x90] sm:$0xff] %vm699, %v2917
      %2995 = vst.msk [vmem:[#allocation3 + $0x98] sm:$0xff] %vm699, %v2919
      %2996 = vst.msk [vmem:[#allocation3 + $0xa0] sm:$0xff] %vm699, %v2921
      %2997 = vst.msk [vmem:[#allocation3 + $0xa8] sm:$0xff] %vm699, %v2923
      %2998 = vst.msk [vmem:[#allocation3 + $0xb0] sm:$0xff] %vm699, %v2925
      %2999 = vst.msk [vmem:[#allocation3 + $0xb8] sm:$0xff] %vm699, %v2927
      %3000 = vst.msk [vmem:[#allocation3 + $0xc0] sm:$0xff] %vm699, %v2929
      %3001 = vst.msk [vmem:[#allocation3 + $0xc8] sm:$0xff] %vm699, %v2931
      %3002 = vst.msk [vmem:[#allocation3 + $0xd0] sm:$0xff] %vm699, %v2933
      %3003 = vst.msk [vmem:[#allocation3 + $0xd8] sm:$0xff] %vm699, %v2935
      %3004 = vst.msk [vmem:[#allocation3 + $0xe0] sm:$0xff] %vm699, %v2937
      %3005 = vst.msk [vmem:[#allocation3 + $0xe8] sm:$0xff] %vm699, %v2939
      %3006 = vst.msk [vmem:[#allocation3 + $0xf0] sm:$0xff] %vm699, %v2941
      %3007 = vst.msk [vmem:[#allocation3 + $0xf8] sm:$0xff] %vm699, %v2943
      %v3008 = vld [vmem:[%s249] sm:$0xff]
      %v3009 = vld [vmem:[%s249 + $0x8] sm:$0xff]
      %v3010 = vld [vmem:[%s249 + $0x18] sm:$0xff]
      %v3011 = vld [vmem:[%s249 + $0x20] sm:$0xff]
      %v3012 = vld [vmem:[%s249 + $0x30] sm:$0xff]
      %v3013 = vld [vmem:[%s249 + $0x38] sm:$0xff]
      %v3014 = vld [vmem:[%s249 + $0x48] sm:$0xff]
      %v3015 = vld [vmem:[%s249 + $0x50] sm:$0xff]
      %v3016 = vld [vmem:[%s249 + $0x60] sm:$0xff]
      %v3017 = vld [vmem:[%s249 + $0x68] sm:$0xff]
      %v3018 = vld [vmem:[%s249 + $0x78] sm:$0xff]
      %v3019 = vld [vmem:[%s249 + $0x80] sm:$0xff]
      %v3020 = vld [vmem:[%s249 + $0x90] sm:$0xff]
      %v3021 = vld [vmem:[%s249 + $0x98] sm:$0xff]
      %v3022 = vld [vmem:[%s249 + $0xa8] sm:$0xff]
      %v3023 = vld [vmem:[%s249 + $0xb0] sm:$0xff]
      %v3024 = vld [vmem:[%s249 + $0xc0] sm:$0xff]
      %v3025 = vld [vmem:[%s249 + $0xc8] sm:$0xff]
      %v3026 = vld [vmem:[%s249 + $0xd8] sm:$0xff]
      %v3027 = vld [vmem:[%s249 + $0xe0] sm:$0xff]
      %v3028 = vld [vmem:[%s249 + $0xf0] sm:$0xff]
      %v3029 = vld [vmem:[%s249 + $0xf8] sm:$0xff]
      %v3030 = vld [vmem:[%s249 + $0x108] sm:$0xff]
      %v3031 = vld [vmem:[%s249 + $0x110] sm:$0xff]
      %v3032 = vld [vmem:[%s249 + $0x120] sm:$0xff]
      %v3033 = vld [vmem:[%s249 + $0x128] sm:$0xff]
      %v3034 = vld [vmem:[%s249 + $0x138] sm:$0xff]
      %v3035 = vld [vmem:[%s249 + $0x140] sm:$0xff]
      %v3036 = vld [vmem:[%s249 + $0x150] sm:$0xff]
      %v3037 = vld [vmem:[%s249 + $0x158] sm:$0xff]
      %v3038 = vld [vmem:[%s249 + $0x168] sm:$0xff]
      %v3039 = vld [vmem:[%s249 + $0x170] sm:$0xff]
      %3072 = vrot.lane.b32.xlu0 %v3008, 12
      %v3073 = vpop.permute.xlu0 %3072
      %3074 = vrot.lane.b32.xlu0 %v3009, 12
      %v3075 = vpop.permute.xlu0 %3074
      %3076 = vrot.lane.b32.xlu0 %v3010, 12
      %v3077 = vpop.permute.xlu0 %3076
      %3078 = vrot.lane.b32.xlu0 %v3011, 12
      %v3079 = vpop.permute.xlu0 %3078
      %3080 = vrot.lane.b32.xlu0 %v3012, 12
      %v3081 = vpop.permute.xlu0 %3080
      %3082 = vrot.lane.b32.xlu0 %v3013, 12
      %v3083 = vpop.permute.xlu0 %3082
      %3084 = vrot.lane.b32.xlu0 %v3014, 12
      %v3085 = vpop.permute.xlu0 %3084
      %3086 = vrot.lane.b32.xlu0 %v3015, 12
      %v3087 = vpop.permute.xlu0 %3086
      %3088 = vrot.lane.b32.xlu0 %v3016, 12
      %v3089 = vpop.permute.xlu0 %3088
      %3090 = vrot.lane.b32.xlu0 %v3017, 12
      %v3091 = vpop.permute.xlu0 %3090
      %3092 = vrot.lane.b32.xlu0 %v3018, 12
      %v3093 = vpop.permute.xlu0 %3092
      %3094 = vrot.lane.b32.xlu0 %v3019, 12
      %v3095 = vpop.permute.xlu0 %3094
      %3096 = vrot.lane.b32.xlu0 %v3020, 12
      %v3097 = vpop.permute.xlu0 %3096
      %3098 = vrot.lane.b32.xlu0 %v3021, 12
      %v3099 = vpop.permute.xlu0 %3098
      %3100 = vrot.lane.b32.xlu0 %v3022, 12
      %v3101 = vpop.permute.xlu0 %3100
      %3102 = vrot.lane.b32.xlu0 %v3023, 12
      %v3103 = vpop.permute.xlu0 %3102
      %3104 = vrot.lane.b32.xlu0 %v3024, 12
      %v3105 = vpop.permute.xlu0 %3104
      %3106 = vrot.lane.b32.xlu0 %v3025, 12
      %v3107 = vpop.permute.xlu0 %3106
      %3108 = vrot.lane.b32.xlu0 %v3026, 12
      %v3109 = vpop.permute.xlu0 %3108
      %3110 = vrot.lane.b32.xlu0 %v3027, 12
      %v3111 = vpop.permute.xlu0 %3110
      %3112 = vrot.lane.b32.xlu0 %v3028, 12
      %v3113 = vpop.permute.xlu0 %3112
      %3114 = vrot.lane.b32.xlu0 %v3029, 12
      %v3115 = vpop.permute.xlu0 %3114
      %3116 = vrot.lane.b32.xlu0 %v3030, 12
      %v3117 = vpop.permute.xlu0 %3116
      %3118 = vrot.lane.b32.xlu0 %v3031, 12
      %v3119 = vpop.permute.xlu0 %3118
      %3120 = vrot.lane.b32.xlu0 %v3032, 12
      %v3121 = vpop.permute.xlu0 %3120
      %3122 = vrot.lane.b32.xlu0 %v3033, 12
      %v3123 = vpop.permute.xlu0 %3122
      %3124 = vrot.lane.b32.xlu0 %v3034, 12
      %v3125 = vpop.permute.xlu0 %3124
      %3126 = vrot.lane.b32.xlu0 %v3035, 12
      %v3127 = vpop.permute.xlu0 %3126
      %3128 = vrot.lane.b32.xlu0 %v3036, 12
      %v3129 = vpop.permute.xlu0 %3128
      %3130 = vrot.lane.b32.xlu0 %v3037, 12
      %v3131 = vpop.permute.xlu0 %3130
      %3132 = vrot.lane.b32.xlu0 %v3038, 12
      %v3133 = vpop.permute.xlu0 %3132
      %3134 = vrot.lane.b32.xlu0 %v3039, 12
      %v3135 = vpop.permute.xlu0 %3134
      %3168 = vst.msk [vmem:[#allocation3] sm:$0xff] %vm892, %v3073
      %3169 = vst.msk [vmem:[#allocation3 + $0x8] sm:$0xff] %vm892, %v3075
      %3170 = vst.msk [vmem:[#allocation3 + $0x10] sm:$0xff] %vm892, %v3077
      %3171 = vst.msk [vmem:[#allocation3 + $0x18] sm:$0xff] %vm892, %v3079
      %3172 = vst.msk [vmem:[#allocation3 + $0x20] sm:$0xff] %vm892, %v3081
      %3173 = vst.msk [vmem:[#allocation3 + $0x28] sm:$0xff] %vm892, %v3083
      %3174 = vst.msk [vmem:[#allocation3 + $0x30] sm:$0xff] %vm892, %v3085
      %3175 = vst.msk [vmem:[#allocation3 + $0x38] sm:$0xff] %vm892, %v3087
      %3176 = vst.msk [vmem:[#allocation3 + $0x40] sm:$0xff] %vm892, %v3089
      %3177 = vst.msk [vmem:[#allocation3 + $0x48] sm:$0xff] %vm892, %v3091
      %3178 = vst.msk [vmem:[#allocation3 + $0x50] sm:$0xff] %vm892, %v3093
      %3179 = vst.msk [vmem:[#allocation3 + $0x58] sm:$0xff] %vm892, %v3095
      %3180 = vst.msk [vmem:[#allocation3 + $0x60] sm:$0xff] %vm892, %v3097
      %3181 = vst.msk [vmem:[#allocation3 + $0x68] sm:$0xff] %vm892, %v3099
      %3182 = vst.msk [vmem:[#allocation3 + $0x70] sm:$0xff] %vm892, %v3101
      %3183 = vst.msk [vmem:[#allocation3 + $0x78] sm:$0xff] %vm892, %v3103
      %3184 = vst.msk [vmem:[#allocation3 + $0x80] sm:$0xff] %vm892, %v3105
      %3185 = vst.msk [vmem:[#allocation3 + $0x88] sm:$0xff] %vm892, %v3107
      %3186 = vst.msk [vmem:[#allocation3 + $0x90] sm:$0xff] %vm892, %v3109
      %3187 = vst.msk [vmem:[#allocation3 + $0x98] sm:$0xff] %vm892, %v3111
      %3188 = vst.msk [vmem:[#allocation3 + $0xa0] sm:$0xff] %vm892, %v3113
      %3189 = vst.msk [vmem:[#allocation3 + $0xa8] sm:$0xff] %vm892, %v3115
      %3190 = vst.msk [vmem:[#allocation3 + $0xb0] sm:$0xff] %vm892, %v3117
      %3191 = vst.msk [vmem:[#allocation3 + $0xb8] sm:$0xff] %vm892, %v3119
      %3192 = vst.msk [vmem:[#allocation3 + $0xc0] sm:$0xff] %vm892, %v3121
      %3193 = vst.msk [vmem:[#allocation3 + $0xc8] sm:$0xff] %vm892, %v3123
      %3194 = vst.msk [vmem:[#allocation3 + $0xd0] sm:$0xff] %vm892, %v3125
      %3195 = vst.msk [vmem:[#allocation3 + $0xd8] sm:$0xff] %vm892, %v3127
      %3196 = vst.msk [vmem:[#allocation3 + $0xe0] sm:$0xff] %vm892, %v3129
      %3197 = vst.msk [vmem:[#allocation3 + $0xe8] sm:$0xff] %vm892, %v3131
      %3198 = vst.msk [vmem:[#allocation3 + $0xf0] sm:$0xff] %vm892, %v3133
      %3199 = vst.msk [vmem:[#allocation3 + $0xf8] sm:$0xff] %vm892, %v3135
      %v3200 = vld [vmem:[%s249 + $0x1] sm:$0xff]
      %v3201 = vld [vmem:[%s249 + $0x9] sm:$0xff]
      %v3202 = vld [vmem:[%s249 + $0x19] sm:$0xff]
      %v3203 = vld [vmem:[%s249 + $0x21] sm:$0xff]
      %v3204 = vld [vmem:[%s249 + $0x31] sm:$0xff]
      %v3205 = vld [vmem:[%s249 + $0x39] sm:$0xff]
      %v3206 = vld [vmem:[%s249 + $0x49] sm:$0xff]
      %v3207 = vld [vmem:[%s249 + $0x51] sm:$0xff]
      %v3208 = vld [vmem:[%s249 + $0x61] sm:$0xff]
      %v3209 = vld [vmem:[%s249 + $0x69] sm:$0xff]
      %v3210 = vld [vmem:[%s249 + $0x79] sm:$0xff]
      %v3211 = vld [vmem:[%s249 + $0x81] sm:$0xff]
      %v3212 = vld [vmem:[%s249 + $0x91] sm:$0xff]
      %v3213 = vld [vmem:[%s249 + $0x99] sm:$0xff]
      %v3214 = vld [vmem:[%s249 + $0xa9] sm:$0xff]
      %v3215 = vld [vmem:[%s249 + $0xb1] sm:$0xff]
      %v3216 = vld [vmem:[%s249 + $0xc1] sm:$0xff]
      %v3217 = vld [vmem:[%s249 + $0xc9] sm:$0xff]
      %v3218 = vld [vmem:[%s249 + $0xd9] sm:$0xff]
      %v3219 = vld [vmem:[%s249 + $0xe1] sm:$0xff]
      %v3220 = vld [vmem:[%s249 + $0xf1] sm:$0xff]
      %v3221 = vld [vmem:[%s249 + $0xf9] sm:$0xff]
      %v3222 = vld [vmem:[%s249 + $0x109] sm:$0xff]
      %v3223 = vld [vmem:[%s249 + $0x111] sm:$0xff]
      %v3224 = vld [vmem:[%s249 + $0x121] sm:$0xff]
      %v3225 = vld [vmem:[%s249 + $0x129] sm:$0xff]
      %v3226 = vld [vmem:[%s249 + $0x139] sm:$0xff]
      %v3227 = vld [vmem:[%s249 + $0x141] sm:$0xff]
      %v3228 = vld [vmem:[%s249 + $0x151] sm:$0xff]
      %v3229 = vld [vmem:[%s249 + $0x159] sm:$0xff]
      %v3230 = vld [vmem:[%s249 + $0x169] sm:$0xff]
      %v3231 = vld [vmem:[%s249 + $0x171] sm:$0xff]
      %3264 = vrot.lane.b32.xlu0 %v3200, 16
      %v3265 = vpop.permute.xlu0 %3264
      %3266 = vrot.lane.b32.xlu0 %v3201, 16
      %v3267 = vpop.permute.xlu0 %3266
      %3268 = vrot.lane.b32.xlu0 %v3202, 16
      %v3269 = vpop.permute.xlu0 %3268
      %3270 = vrot.lane.b32.xlu0 %v3203, 16
      %v3271 = vpop.permute.xlu0 %3270
      %3272 = vrot.lane.b32.xlu0 %v3204, 16
      %v3273 = vpop.permute.xlu0 %3272
      %3274 = vrot.lane.b32.xlu0 %v3205, 16
      %v3275 = vpop.permute.xlu0 %3274
      %3276 = vrot.lane.b32.xlu0 %v3206, 16
      %v3277 = vpop.permute.xlu0 %3276
      %3278 = vrot.lane.b32.xlu0 %v3207, 16
      %v3279 = vpop.permute.xlu0 %3278
      %3280 = vrot.lane.b32.xlu0 %v3208, 16
      %v3281 = vpop.permute.xlu0 %3280
      %3282 = vrot.lane.b32.xlu0 %v3209, 16
      %v3283 = vpop.permute.xlu0 %3282
      %3284 = vrot.lane.b32.xlu0 %v3210, 16
      %v3285 = vpop.permute.xlu0 %3284
      %3286 = vrot.lane.b32.xlu0 %v3211, 16
      %v3287 = vpop.permute.xlu0 %3286
      %3288 = vrot.lane.b32.xlu0 %v3212, 16
      %v3289 = vpop.permute.xlu0 %3288
      %3290 = vrot.lane.b32.xlu0 %v3213, 16
      %v3291 = vpop.permute.xlu0 %3290
      %3292 = vrot.lane.b32.xlu0 %v3214, 16
      %v3293 = vpop.permute.xlu0 %3292
      %3294 = vrot.lane.b32.xlu0 %v3215, 16
      %v3295 = vpop.permute.xlu0 %3294
      %3296 = vrot.lane.b32.xlu0 %v3216, 16
      %v3297 = vpop.permute.xlu0 %3296
      %3298 = vrot.lane.b32.xlu0 %v3217, 16
      %v3299 = vpop.permute.xlu0 %3298
      %3300 = vrot.lane.b32.xlu0 %v3218, 16
      %v3301 = vpop.permute.xlu0 %3300
      %3302 = vrot.lane.b32.xlu0 %v3219, 16
      %v3303 = vpop.permute.xlu0 %3302
      %3304 = vrot.lane.b32.xlu0 %v3220, 16
      %v3305 = vpop.permute.xlu0 %3304
      %3306 = vrot.lane.b32.xlu0 %v3221, 16
      %v3307 = vpop.permute.xlu0 %3306
      %3308 = vrot.lane.b32.xlu0 %v3222, 16
      %v3309 = vpop.permute.xlu0 %3308
      %3310 = vrot.lane.b32.xlu0 %v3223, 16
      %v3311 = vpop.permute.xlu0 %3310
      %3312 = vrot.lane.b32.xlu0 %v3224, 16
      %v3313 = vpop.permute.xlu0 %3312
      %3314 = vrot.lane.b32.xlu0 %v3225, 16
      %v3315 = vpop.permute.xlu0 %3314
      %3316 = vrot.lane.b32.xlu0 %v3226, 16
      %v3317 = vpop.permute.xlu0 %3316
      %3318 = vrot.lane.b32.xlu0 %v3227, 16
      %v3319 = vpop.permute.xlu0 %3318
      %3320 = vrot.lane.b32.xlu0 %v3228, 16
      %v3321 = vpop.permute.xlu0 %3320
      %3322 = vrot.lane.b32.xlu0 %v3229, 16
      %v3323 = vpop.permute.xlu0 %3322
      %3324 = vrot.lane.b32.xlu0 %v3230, 16
      %v3325 = vpop.permute.xlu0 %3324
      %3326 = vrot.lane.b32.xlu0 %v3231, 16
      %v3327 = vpop.permute.xlu0 %3326
      %3360 = vst.msk [vmem:[#allocation3] sm:$0xff] %vm1085, %v3265
      %3361 = vst.msk [vmem:[#allocation3 + $0x8] sm:$0xff] %vm1085, %v3267
      %3362 = vst.msk [vmem:[#allocation3 + $0x10] sm:$0xff] %vm1085, %v3269
      %3363 = vst.msk [vmem:[#allocation3 + $0x18] sm:$0xff] %vm1085, %v3271
      %3364 = vst.msk [vmem:[#allocation3 + $0x20] sm:$0xff] %vm1085, %v3273
      %3365 = vst.msk [vmem:[#allocation3 + $0x28] sm:$0xff] %vm1085, %v3275
      %3366 = vst.msk [vmem:[#allocation3 + $0x30] sm:$0xff] %vm1085, %v3277
      %3367 = vst.msk [vmem:[#allocation3 + $0x38] sm:$0xff] %vm1085, %v3279
      %3368 = vst.msk [vmem:[#allocation3 + $0x40] sm:$0xff] %vm1085, %v3281
      %3369 = vst.msk [vmem:[#allocation3 + $0x48] sm:$0xff] %vm1085, %v3283
      %3370 = vst.msk [vmem:[#allocation3 + $0x50] sm:$0xff] %vm1085, %v3285
      %3371 = vst.msk [vmem:[#allocation3 + $0x58] sm:$0xff] %vm1085, %v3287
      %3372 = vst.msk [vmem:[#allocation3 + $0x60] sm:$0xff] %vm1085, %v3289
      %3373 = vst.msk [vmem:[#allocation3 + $0x68] sm:$0xff] %vm1085, %v3291
      %3374 = vst.msk [vmem:[#allocation3 + $0x70] sm:$0xff] %vm1085, %v3293
      %3375 = vst.msk [vmem:[#allocation3 + $0x78] sm:$0xff] %vm1085, %v3295
      %3376 = vst.msk [vmem:[#allocation3 + $0x80] sm:$0xff] %vm1085, %v3297
      %3377 = vst.msk [vmem:[#allocation3 + $0x88] sm:$0xff] %vm1085, %v3299
      %3378 = vst.msk [vmem:[#allocation3 + $0x90] sm:$0xff] %vm1085, %v3301
      %3379 = vst.msk [vmem:[#allocation3 + $0x98] sm:$0xff] %vm1085, %v3303
      %3380 = vst.msk [vmem:[#allocation3 + $0xa0] sm:$0xff] %vm1085, %v3305
      %3381 = vst.msk [vmem:[#allocation3 + $0xa8] sm:$0xff] %vm1085, %v3307
      %3382 = vst.msk [vmem:[#allocation3 + $0xb0] sm:$0xff] %vm1085, %v3309
      %3383 = vst.msk [vmem:[#allocation3 + $0xb8] sm:$0xff] %vm1085, %v3311
      %3384 = vst.msk [vmem:[#allocation3 + $0xc0] sm:$0xff] %vm1085, %v3313
      %3385 = vst.msk [vmem:[#allocation3 + $0xc8] sm:$0xff] %vm1085, %v3315
      %3386 = vst.msk [vmem:[#allocation3 + $0xd0] sm:$0xff] %vm1085, %v3317
      %3387 = vst.msk [vmem:[#allocation3 + $0xd8] sm:$0xff] %vm1085, %v3319
      %3388 = vst.msk [vmem:[#allocation3 + $0xe0] sm:$0xff] %vm1085, %v3321
      %3389 = vst.msk [vmem:[#allocation3 + $0xe8] sm:$0xff] %vm1085, %v3323
      %3390 = vst.msk [vmem:[#allocation3 + $0xf0] sm:$0xff] %vm1085, %v3325
      %3391 = vst.msk [vmem:[#allocation3 + $0xf8] sm:$0xff] %vm1085, %v3327
      %v3392 = vld [vmem:[%s249 + $0x2] sm:$0xff]
      %v3393 = vld [vmem:[%s249 + $0xa] sm:$0xff]
      %v3394 = vld [vmem:[%s249 + $0x1a] sm:$0xff]
      %v3395 = vld [vmem:[%s249 + $0x22] sm:$0xff]
      %v3396 = vld [vmem:[%s249 + $0x32] sm:$0xff]
      %v3397 = vld [vmem:[%s249 + $0x3a] sm:$0xff]
      %v3398 = vld [vmem:[%s249 + $0x4a] sm:$0xff]
      %v3399 = vld [vmem:[%s249 + $0x52] sm:$0xff]
      %v3400 = vld [vmem:[%s249 + $0x62] sm:$0xff]
      %v3401 = vld [vmem:[%s249 + $0x6a] sm:$0xff]
      %v3402 = vld [vmem:[%s249 + $0x7a] sm:$0xff]
      %v3403 = vld [vmem:[%s249 + $0x82] sm:$0xff]
      %v3404 = vld [vmem:[%s249 + $0x92] sm:$0xff]
      %v3405 = vld [vmem:[%s249 + $0x9a] sm:$0xff]
      %v3406 = vld [vmem:[%s249 + $0xaa] sm:$0xff]
      %v3407 = vld [vmem:[%s249 + $0xb2] sm:$0xff]
      %v3408 = vld [vmem:[%s249 + $0xc2] sm:$0xff]
      %v3409 = vld [vmem:[%s249 + $0xca] sm:$0xff]
      %v3410 = vld [vmem:[%s249 + $0xda] sm:$0xff]
      %v3411 = vld [vmem:[%s249 + $0xe2] sm:$0xff]
      %v3412 = vld [vmem:[%s249 + $0xf2] sm:$0xff]
      %v3413 = vld [vmem:[%s249 + $0xfa] sm:$0xff]
      %v3414 = vld [vmem:[%s249 + $0x10a] sm:$0xff]
      %v3415 = vld [vmem:[%s249 + $0x112] sm:$0xff]
      %v3416 = vld [vmem:[%s249 + $0x122] sm:$0xff]
      %v3417 = vld [vmem:[%s249 + $0x12a] sm:$0xff]
      %v3418 = vld [vmem:[%s249 + $0x13a] sm:$0xff]
      %v3419 = vld [vmem:[%s249 + $0x142] sm:$0xff]
      %v3420 = vld [vmem:[%s249 + $0x152] sm:$0xff]
      %v3421 = vld [vmem:[%s249 + $0x15a] sm:$0xff]
      %v3422 = vld [vmem:[%s249 + $0x16a] sm:$0xff]
      %v3423 = vld [vmem:[%s249 + $0x172] sm:$0xff]
      %3456 = vrot.lane.b32.xlu0 %v3392, 20
      %v3457 = vpop.permute.xlu0 %3456
      %3458 = vrot.lane.b32.xlu0 %v3393, 20
      %v3459 = vpop.permute.xlu0 %3458
      %3460 = vrot.lane.b32.xlu0 %v3394, 20
      %v3461 = vpop.permute.xlu0 %3460
      %3462 = vrot.lane.b32.xlu0 %v3395, 20
      %v3463 = vpop.permute.xlu0 %3462
      %3464 = vrot.lane.b32.xlu0 %v3396, 20
      %v3465 = vpop.permute.xlu0 %3464
      %3466 = vrot.lane.b32.xlu0 %v3397, 20
      %v3467 = vpop.permute.xlu0 %3466
      %3468 = vrot.lane.b32.xlu0 %v3398, 20
      %v3469 = vpop.permute.xlu0 %3468
      %3470 = vrot.lane.b32.xlu0 %v3399, 20
      %v3471 = vpop.permute.xlu0 %3470
      %3472 = vrot.lane.b32.xlu0 %v3400, 20
      %v3473 = vpop.permute.xlu0 %3472
      %3474 = vrot.lane.b32.xlu0 %v3401, 20
      %v3475 = vpop.permute.xlu0 %3474
      %3476 = vrot.lane.b32.xlu0 %v3402, 20
      %v3477 = vpop.permute.xlu0 %3476
      %3478 = vrot.lane.b32.xlu0 %v3403, 20
      %v3479 = vpop.permute.xlu0 %3478
      %3480 = vrot.lane.b32.xlu0 %v3404, 20
      %v3481 = vpop.permute.xlu0 %3480
      %3482 = vrot.lane.b32.xlu0 %v3405, 20
      %v3483 = vpop.permute.xlu0 %3482
      %3484 = vrot.lane.b32.xlu0 %v3406, 20
      %v3485 = vpop.permute.xlu0 %3484
      %3486 = vrot.lane.b32.xlu0 %v3407, 20
      %v3487 = vpop.permute.xlu0 %3486
      %3488 = vrot.lane.b32.xlu0 %v3408, 20
      %v3489 = vpop.permute.xlu0 %3488
      %3490 = vrot.lane.b32.xlu0 %v3409, 20
      %v3491 = vpop.permute.xlu0 %3490
      %3492 = vrot.lane.b32.xlu0 %v3410, 20
      %v3493 = vpop.permute.xlu0 %3492
      %3494 = vrot.lane.b32.xlu0 %v3411, 20
      %v3495 = vpop.permute.xlu0 %3494
      %3496 = vrot.lane.b32.xlu0 %v3412, 20
      %v3497 = vpop.permute.xlu0 %3496
      %3498 = vrot.lane.b32.xlu0 %v3413, 20
      %v3499 = vpop.permute.xlu0 %3498
      %3500 = vrot.lane.b32.xlu0 %v3414, 20
      %v3501 = vpop.permute.xlu0 %3500
      %3502 = vrot.lane.b32.xlu0 %v3415, 20
      %v3503 = vpop.permute.xlu0 %3502
      %3504 = vrot.lane.b32.xlu0 %v3416, 20
      %v3505 = vpop.permute.xlu0 %3504
      %3506 = vrot.lane.b32.xlu0 %v3417, 20
      %v3507 = vpop.permute.xlu0 %3506
      %3508 = vrot.lane.b32.xlu0 %v3418, 20
      %v3509 = vpop.permute.xlu0 %3508
      %3510 = vrot.lane.b32.xlu0 %v3419, 20
      %v3511 = vpop.permute.xlu0 %3510
      %3512 = vrot.lane.b32.xlu0 %v3420, 20
      %v3513 = vpop.permute.xlu0 %3512
      %3514 = vrot.lane.b32.xlu0 %v3421, 20
      %v3515 = vpop.permute.xlu0 %3514
      %3516 = vrot.lane.b32.xlu0 %v3422, 20
      %v3517 = vpop.permute.xlu0 %3516
      %3518 = vrot.lane.b32.xlu0 %v3423, 20
      %v3519 = vpop.permute.xlu0 %3518
      %3552 = vst.msk [vmem:[#allocation3] sm:$0xff] %vm1278, %v3457
      %3553 = vst.msk [vmem:[#allocation3 + $0x8] sm:$0xff] %vm1278, %v3459
      %3554 = vst.msk [vmem:[#allocation3 + $0x10] sm:$0xff] %vm1278, %v3461
      %3555 = vst.msk [vmem:[#allocation3 + $0x18] sm:$0xff] %vm1278, %v3463
      %3556 = vst.msk [vmem:[#allocation3 + $0x20] sm:$0xff] %vm1278, %v3465
      %3557 = vst.msk [vmem:[#allocation3 + $0x28] sm:$0xff] %vm1278, %v3467
      %3558 = vst.msk [vmem:[#allocation3 + $0x30] sm:$0xff] %vm1278, %v3469
      %3559 = vst.msk [vmem:[#allocation3 + $0x38] sm:$0xff] %vm1278, %v3471
      %3560 = vst.msk [vmem:[#allocation3 + $0x40] sm:$0xff] %vm1278, %v3473
      %3561 = vst.msk [vmem:[#allocation3 + $0x48] sm:$0xff] %vm1278, %v3475
      %3562 = vst.msk [vmem:[#allocation3 + $0x50] sm:$0xff] %vm1278, %v3477
      %3563 = vst.msk [vmem:[#allocation3 + $0x58] sm:$0xff] %vm1278, %v3479
      %3564 = vst.msk [vmem:[#allocation3 + $0x60] sm:$0xff] %vm1278, %v3481
      %3565 = vst.msk [vmem:[#allocation3 + $0x68] sm:$0xff] %vm1278, %v3483
      %3566 = vst.msk [vmem:[#allocation3 + $0x70] sm:$0xff] %vm1278, %v3485
      %3567 = vst.msk [vmem:[#allocation3 + $0x78] sm:$0xff] %vm1278, %v3487
      %3568 = vst.msk [vmem:[#allocation3 + $0x80] sm:$0xff] %vm1278, %v3489
      %3569 = vst.msk [vmem:[#allocation3 + $0x88] sm:$0xff] %vm1278, %v3491
      %3570 = vst.msk [vmem:[#allocation3 + $0x90] sm:$0xff] %vm1278, %v3493
      %3571 = vst.msk [vmem:[#allocation3 + $0x98] sm:$0xff] %vm1278, %v3495
      %3572 = vst.msk [vmem:[#allocation3 + $0xa0] sm:$0xff] %vm1278, %v3497
      %3573 = vst.msk [vmem:[#allocation3 + $0xa8] sm:$0xff] %vm1278, %v3499
      %3574 = vst.msk [vmem:[#allocation3 + $0xb0] sm:$0xff] %vm1278, %v3501
      %3575 = vst.msk [vmem:[#allocation3 + $0xb8] sm:$0xff] %vm1278, %v3503
      %3576 = vst.msk [vmem:[#allocation3 + $0xc0] sm:$0xff] %vm1278, %v3505
      %3577 = vst.msk [vmem:[#allocation3 + $0xc8] sm:$0xff] %vm1278, %v3507
      %3578 = vst.msk [vmem:[#allocation3 + $0xd0] sm:$0xff] %vm1278, %v3509
      %3579 = vst.msk [vmem:[#allocation3 + $0xd8] sm:$0xff] %vm1278, %v3511
      %3580 = vst.msk [vmem:[#allocation3 + $0xe0] sm:$0xff] %vm1278, %v3513
      %3581 = vst.msk [vmem:[#allocation3 + $0xe8] sm:$0xff] %vm1278, %v3515
      %3582 = vst.msk [vmem:[#allocation3 + $0xf0] sm:$0xff] %vm1278, %v3517
      %3583 = vst.msk [vmem:[#allocation3 + $0xf8] sm:$0xff] %vm1278, %v3519
      %v3584 = vld [vmem:[%s1311] sm:$0xff]
      %v3585 = vld [vmem:[%s1311 + $0x8] sm:$0xff]
      %v3586 = vld [vmem:[%s1311 + $0x18] sm:$0xff]
      %v3587 = vld [vmem:[%s1311 + $0x20] sm:$0xff]
      %v3588 = vld [vmem:[%s1311 + $0x30] sm:$0xff]
      %v3589 = vld [vmem:[%s1311 + $0x38] sm:$0xff]
      %v3590 = vld [vmem:[%s1311 + $0x48] sm:$0xff]
      %v3591 = vld [vmem:[%s1311 + $0x50] sm:$0xff]
      %v3592 = vld [vmem:[%s1311 + $0x60] sm:$0xff]
      %v3593 = vld [vmem:[%s1311 + $0x68] sm:$0xff]
      %v3594 = vld [vmem:[%s1311 + $0x78] sm:$0xff]
      %v3595 = vld [vmem:[%s1311 + $0x80] sm:$0xff]
      %v3596 = vld [vmem:[%s1311 + $0x90] sm:$0xff]
      %v3597 = vld [vmem:[%s1311 + $0x98] sm:$0xff]
      %v3598 = vld [vmem:[%s1311 + $0xa8] sm:$0xff]
      %v3599 = vld [vmem:[%s1311 + $0xb0] sm:$0xff]
      %v3600 = vld [vmem:[%s1311 + $0xc0] sm:$0xff]
      %v3601 = vld [vmem:[%s1311 + $0xc8] sm:$0xff]
      %v3602 = vld [vmem:[%s1311 + $0xd8] sm:$0xff]
      %v3603 = vld [vmem:[%s1311 + $0xe0] sm:$0xff]
      %v3604 = vld [vmem:[%s1311 + $0xf0] sm:$0xff]
      %v3605 = vld [vmem:[%s1311 + $0xf8] sm:$0xff]
      %v3606 = vld [vmem:[%s1311 + $0x108] sm:$0xff]
      %v3607 = vld [vmem:[%s1311 + $0x110] sm:$0xff]
      %v3608 = vld [vmem:[%s1311 + $0x120] sm:$0xff]
      %v3609 = vld [vmem:[%s1311 + $0x128] sm:$0xff]
      %v3610 = vld [vmem:[%s1311 + $0x138] sm:$0xff]
      %v3611 = vld [vmem:[%s1311 + $0x140] sm:$0xff]
      %v3612 = vld [vmem:[%s1311 + $0x150] sm:$0xff]
      %v3613 = vld [vmem:[%s1311 + $0x158] sm:$0xff]
      %v3614 = vld [vmem:[%s1311 + $0x168] sm:$0xff]
      %v3615 = vld [vmem:[%s1311 + $0x170] sm:$0xff]
      %3648 = vrot.lane.b32.xlu0 %v3584, 24
      %v3649 = vpop.permute.xlu0 %3648
      %3650 = vrot.lane.b32.xlu0 %v3585, 24
      %v3651 = vpop.permute.xlu0 %3650
      %3652 = vrot.lane.b32.xlu0 %v3586, 24
      %v3653 = vpop.permute.xlu0 %3652
      %3654 = vrot.lane.b32.xlu0 %v3587, 24
      %v3655 = vpop.permute.xlu0 %3654
      %3656 = vrot.lane.b32.xlu0 %v3588, 24
      %v3657 = vpop.permute.xlu0 %3656
      %3658 = vrot.lane.b32.xlu0 %v3589, 24
      %v3659 = vpop.permute.xlu0 %3658
      %3660 = vrot.lane.b32.xlu0 %v3590, 24
      %v3661 = vpop.permute.xlu0 %3660
      %3662 = vrot.lane.b32.xlu0 %v3591, 24
      %v3663 = vpop.permute.xlu0 %3662
      %3664 = vrot.lane.b32.xlu0 %v3592, 24
      %v3665 = vpop.permute.xlu0 %3664
      %3666 = vrot.lane.b32.xlu0 %v3593, 24
      %v3667 = vpop.permute.xlu0 %3666
      %3668 = vrot.lane.b32.xlu0 %v3594, 24
      %v3669 = vpop.permute.xlu0 %3668
      %3670 = vrot.lane.b32.xlu0 %v3595, 24
      %v3671 = vpop.permute.xlu0 %3670
      %3672 = vrot.lane.b32.xlu0 %v3596, 24
      %v3673 = vpop.permute.xlu0 %3672
      %3674 = vrot.lane.b32.xlu0 %v3597, 24
      %v3675 = vpop.permute.xlu0 %3674
      %3676 = vrot.lane.b32.xlu0 %v3598, 24
      %v3677 = vpop.permute.xlu0 %3676
      %3678 = vrot.lane.b32.xlu0 %v3599, 24
      %v3679 = vpop.permute.xlu0 %3678
      %3680 = vrot.lane.b32.xlu0 %v3600, 24
      %v3681 = vpop.permute.xlu0 %3680
      %3682 = vrot.lane.b32.xlu0 %v3601, 24
      %v3683 = vpop.permute.xlu0 %3682
      %3684 = vrot.lane.b32.xlu0 %v3602, 24
      %v3685 = vpop.permute.xlu0 %3684
      %3686 = vrot.lane.b32.xlu0 %v3603, 24
      %v3687 = vpop.permute.xlu0 %3686
      %3688 = vrot.lane.b32.xlu0 %v3604, 24
      %v3689 = vpop.permute.xlu0 %3688
      %3690 = vrot.lane.b32.xlu0 %v3605, 24
      %v3691 = vpop.permute.xlu0 %3690
      %3692 = vrot.lane.b32.xlu0 %v3606, 24
      %v3693 = vpop.permute.xlu0 %3692
      %3694 = vrot.lane.b32.xlu0 %v3607, 24
      %v3695 = vpop.permute.xlu0 %3694
      %3696 = vrot.lane.b32.xlu0 %v3608, 24
      %v3697 = vpop.permute.xlu0 %3696
      %3698 = vrot.lane.b32.xlu0 %v3609, 24
      %v3699 = vpop.permute.xlu0 %3698
      %3700 = vrot.lane.b32.xlu0 %v3610, 24
      %v3701 = vpop.permute.xlu0 %3700
      %3702 = vrot.lane.b32.xlu0 %v3611, 24
      %v3703 = vpop.permute.xlu0 %3702
      %3704 = vrot.lane.b32.xlu0 %v3612, 24
      %v3705 = vpop.permute.xlu0 %3704
      %3706 = vrot.lane.b32.xlu0 %v3613, 24
      %v3707 = vpop.permute.xlu0 %3706
      %3708 = vrot.lane.b32.xlu0 %v3614, 24
      %v3709 = vpop.permute.xlu0 %3708
      %3710 = vrot.lane.b32.xlu0 %v3615, 24
      %v3711 = vpop.permute.xlu0 %3710
      %3744 = vst.msk [vmem:[#allocation3] sm:$0xff] %vm1472, %v3649
      %3745 = vst.msk [vmem:[#allocation3 + $0x8] sm:$0xff] %vm1472, %v3651
      %3746 = vst.msk [vmem:[#allocation3 + $0x10] sm:$0xff] %vm1472, %v3653
      %3747 = vst.msk [vmem:[#allocation3 + $0x18] sm:$0xff] %vm1472, %v3655
      %3748 = vst.msk [vmem:[#allocation3 + $0x20] sm:$0xff] %vm1472, %v3657
      %3749 = vst.msk [vmem:[#allocation3 + $0x28] sm:$0xff] %vm1472, %v3659
      %3750 = vst.msk [vmem:[#allocation3 + $0x30] sm:$0xff] %vm1472, %v3661
      %3751 = vst.msk [vmem:[#allocation3 + $0x38] sm:$0xff] %vm1472, %v3663
      %3752 = vst.msk [vmem:[#allocation3 + $0x40] sm:$0xff] %vm1472, %v3665
      %3753 = vst.msk [vmem:[#allocation3 + $0x48] sm:$0xff] %vm1472, %v3667
      %3754 = vst.msk [vmem:[#allocation3 + $0x50] sm:$0xff] %vm1472, %v3669
      %3755 = vst.msk [vmem:[#allocation3 + $0x58] sm:$0xff] %vm1472, %v3671
      %3756 = vst.msk [vmem:[#allocation3 + $0x60] sm:$0xff] %vm1472, %v3673
      %3757 = vst.msk [vmem:[#allocation3 + $0x68] sm:$0xff] %vm1472, %v3675
      %3758 = vst.msk [vmem:[#allocation3 + $0x70] sm:$0xff] %vm1472, %v3677
      %3759 = vst.msk [vmem:[#allocation3 + $0x78] sm:$0xff] %vm1472, %v3679
      %3760 = vst.msk [vmem:[#allocation3 + $0x80] sm:$0xff] %vm1472, %v3681
      %3761 = vst.msk [vmem:[#allocation3 + $0x88] sm:$0xff] %vm1472, %v3683
      %3762 = vst.msk [vmem:[#allocation3 + $0x90] sm:$0xff] %vm1472, %v3685
      %3763 = vst.msk [vmem:[#allocation3 + $0x98] sm:$0xff] %vm1472, %v3687
      %3764 = vst.msk [vmem:[#allocation3 + $0xa0] sm:$0xff] %vm1472, %v3689
      %3765 = vst.msk [vmem:[#allocation3 + $0xa8] sm:$0xff] %vm1472, %v3691
      %3766 = vst.msk [vmem:[#allocation3 + $0xb0] sm:$0xff] %vm1472, %v3693
      %3767 = vst.msk [vmem:[#allocation3 + $0xb8] sm:$0xff] %vm1472, %v3695
      %3768 = vst.msk [vmem:[#allocation3 + $0xc0] sm:$0xff] %vm1472, %v3697
      %3769 = vst.msk [vmem:[#allocation3 + $0xc8] sm:$0xff] %vm1472, %v3699
      %3770 = vst.msk [vmem:[#allocation3 + $0xd0] sm:$0xff] %vm1472, %v3701
      %3771 = vst.msk [vmem:[#allocation3 + $0xd8] sm:$0xff] %vm1472, %v3703
      %3772 = vst.msk [vmem:[#allocation3 + $0xe0] sm:$0xff] %vm1472, %v3705
      %3773 = vst.msk [vmem:[#allocation3 + $0xe8] sm:$0xff] %vm1472, %v3707
      %3774 = vst.msk [vmem:[#allocation3 + $0xf0] sm:$0xff] %vm1472, %v3709
      %3775 = vst.msk [vmem:[#allocation3 + $0xf8] sm:$0xff] %vm1472, %v3711
      %v3776 = vld [vmem:[%s1311 + $0x1] sm:$0xff]
      %v3777 = vld [vmem:[%s1311 + $0x9] sm:$0xff]
      %v3778 = vld [vmem:[%s1311 + $0x19] sm:$0xff]
      %v3779 = vld [vmem:[%s1311 + $0x21] sm:$0xff]
      %v3780 = vld [vmem:[%s1311 + $0x31] sm:$0xff]
      %v3781 = vld [vmem:[%s1311 + $0x39] sm:$0xff]
      %v3782 = vld [vmem:[%s1311 + $0x49] sm:$0xff]
      %v3783 = vld [vmem:[%s1311 + $0x51] sm:$0xff]
      %v3784 = vld [vmem:[%s1311 + $0x61] sm:$0xff]
      %v3785 = vld [vmem:[%s1311 + $0x69] sm:$0xff]
      %v3786 = vld [vmem:[%s1311 + $0x79] sm:$0xff]
      %v3787 = vld [vmem:[%s1311 + $0x81] sm:$0xff]
      %v3788 = vld [vmem:[%s1311 + $0x91] sm:$0xff]
      %v3789 = vld [vmem:[%s1311 + $0x99] sm:$0xff]
      %v3790 = vld [vmem:[%s1311 + $0xa9] sm:$0xff]
      %v3791 = vld [vmem:[%s1311 + $0xb1] sm:$0xff]
      %v3792 = vld [vmem:[%s1311 + $0xc1] sm:$0xff]
      %v3793 = vld [vmem:[%s1311 + $0xc9] sm:$0xff]
      %v3794 = vld [vmem:[%s1311 + $0xd9] sm:$0xff]
      %v3795 = vld [vmem:[%s1311 + $0xe1] sm:$0xff]
      %v3796 = vld [vmem:[%s1311 + $0xf1] sm:$0xff]
      %v3797 = vld [vmem:[%s1311 + $0xf9] sm:$0xff]
      %v3798 = vld [vmem:[%s1311 + $0x109] sm:$0xff]
      %v3799 = vld [vmem:[%s1311 + $0x111] sm:$0xff]
      %v3800 = vld [vmem:[%s1311 + $0x121] sm:$0xff]
      %v3801 = vld [vmem:[%s1311 + $0x129] sm:$0xff]
      %v3802 = vld [vmem:[%s1311 + $0x139] sm:$0xff]
      %v3803 = vld [vmem:[%s1311 + $0x141] sm:$0xff]
      %v3804 = vld [vmem:[%s1311 + $0x151] sm:$0xff]
      %v3805 = vld [vmem:[%s1311 + $0x159] sm:$0xff]
      %v3806 = vld [vmem:[%s1311 + $0x169] sm:$0xff]
      %v3807 = vld [vmem:[%s1311 + $0x171] sm:$0xff]
      %3840 = vrot.lane.b32.xlu0 %v3776, 28
      %v3841 = vpop.permute.xlu0 %3840
      %3842 = vrot.lane.b32.xlu0 %v3777, 28
      %v3843 = vpop.permute.xlu0 %3842
      %3844 = vrot.lane.b32.xlu0 %v3778, 28
      %v3845 = vpop.permute.xlu0 %3844
      %3846 = vrot.lane.b32.xlu0 %v3779, 28
      %v3847 = vpop.permute.xlu0 %3846
      %3848 = vrot.lane.b32.xlu0 %v3780, 28
      %v3849 = vpop.permute.xlu0 %3848
      %3850 = vrot.lane.b32.xlu0 %v3781, 28
      %v3851 = vpop.permute.xlu0 %3850
      %3852 = vrot.lane.b32.xlu0 %v3782, 28
      %v3853 = vpop.permute.xlu0 %3852
      %3854 = vrot.lane.b32.xlu0 %v3783, 28
      %v3855 = vpop.permute.xlu0 %3854
      %3856 = vrot.lane.b32.xlu0 %v3784, 28
      %v3857 = vpop.permute.xlu0 %3856
      %3858 = vrot.lane.b32.xlu0 %v3785, 28
      %v3859 = vpop.permute.xlu0 %3858
      %3860 = vrot.lane.b32.xlu0 %v3786, 28
      %v3861 = vpop.permute.xlu0 %3860
      %3862 = vrot.lane.b32.xlu0 %v3787, 28
      %v3863 = vpop.permute.xlu0 %3862
      %3864 = vrot.lane.b32.xlu0 %v3788, 28
      %v3865 = vpop.permute.xlu0 %3864
      %3866 = vrot.lane.b32.xlu0 %v3789, 28
      %v3867 = vpop.permute.xlu0 %3866
      %3868 = vrot.lane.b32.xlu0 %v3790, 28
      %v3869 = vpop.permute.xlu0 %3868
      %3870 = vrot.lane.b32.xlu0 %v3791, 28
      %v3871 = vpop.permute.xlu0 %3870
      %3872 = vrot.lane.b32.xlu0 %v3792, 28
      %v3873 = vpop.permute.xlu0 %3872
      %3874 = vrot.lane.b32.xlu0 %v3793, 28
      %v3875 = vpop.permute.xlu0 %3874
      %3876 = vrot.lane.b32.xlu0 %v3794, 28
      %v3877 = vpop.permute.xlu0 %3876
      %3878 = vrot.lane.b32.xlu0 %v3795, 28
      %v3879 = vpop.permute.xlu0 %3878
      %3880 = vrot.lane.b32.xlu0 %v3796, 28
      %v3881 = vpop.permute.xlu0 %3880
      %3882 = vrot.lane.b32.xlu0 %v3797, 28
      %v3883 = vpop.permute.xlu0 %3882
      %3884 = vrot.lane.b32.xlu0 %v3798, 28
      %v3885 = vpop.permute.xlu0 %3884
      %3886 = vrot.lane.b32.xlu0 %v3799, 28
      %v3887 = vpop.permute.xlu0 %3886
      %3888 = vrot.lane.b32.xlu0 %v3800, 28
      %v3889 = vpop.permute.xlu0 %3888
      %3890 = vrot.lane.b32.xlu0 %v3801, 28
      %v3891 = vpop.permute.xlu0 %3890
      %3892 = vrot.lane.b32.xlu0 %v3802, 28
      %v3893 = vpop.permute.xlu0 %3892
      %3894 = vrot.lane.b32.xlu0 %v3803, 28
      %v3895 = vpop.permute.xlu0 %3894
      %3896 = vrot.lane.b32.xlu0 %v3804, 28
      %v3897 = vpop.permute.xlu0 %3896
      %3898 = vrot.lane.b32.xlu0 %v3805, 28
      %v3899 = vpop.permute.xlu0 %3898
      %3900 = vrot.lane.b32.xlu0 %v3806, 28
      %v3901 = vpop.permute.xlu0 %3900
      %3902 = vrot.lane.b32.xlu0 %v3807, 28
      %v3903 = vpop.permute.xlu0 %3902
      %3936 = vst.msk [vmem:[#allocation3] sm:$0xff] %vm1665, %v3841
      %3937 = vst.msk [vmem:[#allocation3 + $0x8] sm:$0xff] %vm1665, %v3843
      %3938 = vst.msk [vmem:[#allocation3 + $0x10] sm:$0xff] %vm1665, %v3845
      %3939 = vst.msk [vmem:[#allocation3 + $0x18] sm:$0xff] %vm1665, %v3847
      %3940 = vst.msk [vmem:[#allocation3 + $0x20] sm:$0xff] %vm1665, %v3849
      %3941 = vst.msk [vmem:[#allocation3 + $0x28] sm:$0xff] %vm1665, %v3851
      %3942 = vst.msk [vmem:[#allocation3 + $0x30] sm:$0xff] %vm1665, %v3853
      %3943 = vst.msk [vmem:[#allocation3 + $0x38] sm:$0xff] %vm1665, %v3855
      %3944 = vst.msk [vmem:[#allocation3 + $0x40] sm:$0xff] %vm1665, %v3857
      %3945 = vst.msk [vmem:[#allocation3 + $0x48] sm:$0xff] %vm1665, %v3859
      %3946 = vst.msk [vmem:[#allocation3 + $0x50] sm:$0xff] %vm1665, %v3861
      %3947 = vst.msk [vmem:[#allocation3 + $0x58] sm:$0xff] %vm1665, %v3863
      %3948 = vst.msk [vmem:[#allocation3 + $0x60] sm:$0xff] %vm1665, %v3865
      %3949 = vst.msk [vmem:[#allocation3 + $0x68] sm:$0xff] %vm1665, %v3867
      %3950 = vst.msk [vmem:[#allocation3 + $0x70] sm:$0xff] %vm1665, %v3869
      %3951 = vst.msk [vmem:[#allocation3 + $0x78] sm:$0xff] %vm1665, %v3871
      %3952 = vst.msk [vmem:[#allocation3 + $0x80] sm:$0xff] %vm1665, %v3873
      %3953 = vst.msk [vmem:[#allocation3 + $0x88] sm:$0xff] %vm1665, %v3875
      %3954 = vst.msk [vmem:[#allocation3 + $0x90] sm:$0xff] %vm1665, %v3877
      %3955 = vst.msk [vmem:[#allocation3 + $0x98] sm:$0xff] %vm1665, %v3879
      %3956 = vst.msk [vmem:[#allocation3 + $0xa0] sm:$0xff] %vm1665, %v3881
      %3957 = vst.msk [vmem:[#allocation3 + $0xa8] sm:$0xff] %vm1665, %v3883
      %3958 = vst.msk [vmem:[#allocation3 + $0xb0] sm:$0xff] %vm1665, %v3885
      %3959 = vst.msk [vmem:[#allocation3 + $0xb8] sm:$0xff] %vm1665, %v3887
      %3960 = vst.msk [vmem:[#allocation3 + $0xc0] sm:$0xff] %vm1665, %v3889
      %3961 = vst.msk [vmem:[#allocation3 + $0xc8] sm:$0xff] %vm1665, %v3891
      %3962 = vst.msk [vmem:[#allocation3 + $0xd0] sm:$0xff] %vm1665, %v3893
      %3963 = vst.msk [vmem:[#allocation3 + $0xd8] sm:$0xff] %vm1665, %v3895
      %3964 = vst.msk [vmem:[#allocation3 + $0xe0] sm:$0xff] %vm1665, %v3897
      %3965 = vst.msk [vmem:[#allocation3 + $0xe8] sm:$0xff] %vm1665, %v3899
      %3966 = vst.msk [vmem:[#allocation3 + $0xf0] sm:$0xff] %vm1665, %v3901
      %3967 = vst.msk [vmem:[#allocation3 + $0xf8] sm:$0xff] %vm1665, %v3903
      %v3968 = vld [vmem:[%s1311 + $0x2] sm:$0xff]
      %v3969 = vld [vmem:[%s1311 + $0xa] sm:$0xff]
      %v3970 = vld [vmem:[%s1311 + $0x1a] sm:$0xff]
      %v3971 = vld [vmem:[%s1311 + $0x22] sm:$0xff]
      %v3972 = vld [vmem:[%s1311 + $0x32] sm:$0xff]
      %v3973 = vld [vmem:[%s1311 + $0x3a] sm:$0xff]
      %v3974 = vld [vmem:[%s1311 + $0x4a] sm:$0xff]
      %v3975 = vld [vmem:[%s1311 + $0x52] sm:$0xff]
      %v3976 = vld [vmem:[%s1311 + $0x62] sm:$0xff]
      %v3977 = vld [vmem:[%s1311 + $0x6a] sm:$0xff]
      %v3978 = vld [vmem:[%s1311 + $0x7a] sm:$0xff]
      %v3979 = vld [vmem:[%s1311 + $0x82] sm:$0xff]
      %v3980 = vld [vmem:[%s1311 + $0x92] sm:$0xff]
      %v3981 = vld [vmem:[%s1311 + $0x9a] sm:$0xff]
      %v3982 = vld [vmem:[%s1311 + $0xaa] sm:$0xff]
      %v3983 = vld [vmem:[%s1311 + $0xb2] sm:$0xff]
      %v3984 = vld [vmem:[%s1311 + $0xc2] sm:$0xff]
      %v3985 = vld [vmem:[%s1311 + $0xca] sm:$0xff]
      %v3986 = vld [vmem:[%s1311 + $0xda] sm:$0xff]
      %v3987 = vld [vmem:[%s1311 + $0xe2] sm:$0xff]
      %v3988 = vld [vmem:[%s1311 + $0xf2] sm:$0xff]
      %v3989 = vld [vmem:[%s1311 + $0xfa] sm:$0xff]
      %v3990 = vld [vmem:[%s1311 + $0x10a] sm:$0xff]
      %v3991 = vld [vmem:[%s1311 + $0x112] sm:$0xff]
      %v3992 = vld [vmem:[%s1311 + $0x122] sm:$0xff]
      %v3993 = vld [vmem:[%s1311 + $0x12a] sm:$0xff]
      %v3994 = vld [vmem:[%s1311 + $0x13a] sm:$0xff]
      %v3995 = vld [vmem:[%s1311 + $0x142] sm:$0xff]
      %v3996 = vld [vmem:[%s1311 + $0x152] sm:$0xff]
      %v3997 = vld [vmem:[%s1311 + $0x15a] sm:$0xff]
      %v3998 = vld [vmem:[%s1311 + $0x16a] sm:$0xff]
      %v3999 = vld [vmem:[%s1311 + $0x172] sm:$0xff]
      %4032 = vrot.lane.b32.xlu0 %v3968, 32
      %v4033 = vpop.permute.xlu0 %4032
      %4034 = vrot.lane.b32.xlu0 %v3969, 32
      %v4035 = vpop.permute.xlu0 %4034
      %4036 = vrot.lane.b32.xlu0 %v3970, 32
      %v4037 = vpop.permute.xlu0 %4036
      %4038 = vrot.lane.b32.xlu0 %v3971, 32
      %v4039 = vpop.permute.xlu0 %4038
      %4040 = vrot.lane.b32.xlu0 %v3972, 32
      %v4041 = vpop.permute.xlu0 %4040
      %4042 = vrot.lane.b32.xlu0 %v3973, 32
      %v4043 = vpop.permute.xlu0 %4042
      %4044 = vrot.lane.b32.xlu0 %v3974, 32
      %v4045 = vpop.permute.xlu0 %4044
      %4046 = vrot.lane.b32.xlu0 %v3975, 32
      %v4047 = vpop.permute.xlu0 %4046
      %4048 = vrot.lane.b32.xlu0 %v3976, 32
      %v4049 = vpop.permute.xlu0 %4048
      %4050 = vrot.lane.b32.xlu0 %v3977, 32
      %v4051 = vpop.permute.xlu0 %4050
      %4052 = vrot.lane.b32.xlu0 %v3978, 32
      %v4053 = vpop.permute.xlu0 %4052
      %4054 = vrot.lane.b32.xlu0 %v3979, 32
      %v4055 = vpop.permute.xlu0 %4054
      %4056 = vrot.lane.b32.xlu0 %v3980, 32
      %v4057 = vpop.permute.xlu0 %4056
      %4058 = vrot.lane.b32.xlu0 %v3981, 32
      %v4059 = vpop.permute.xlu0 %4058
      %4060 = vrot.lane.b32.xlu0 %v3982, 32
      %v4061 = vpop.permute.xlu0 %4060
      %4062 = vrot.lane.b32.xlu0 %v3983, 32
      %v4063 = vpop.permute.xlu0 %4062
      %4064 = vrot.lane.b32.xlu0 %v3984, 32
      %v4065 = vpop.permute.xlu0 %4064
      %4066 = vrot.lane.b32.xlu0 %v3985, 32
      %v4067 = vpop.permute.xlu0 %4066
      %4068 = vrot.lane.b32.xlu0 %v3986, 32
      %v4069 = vpop.permute.xlu0 %4068
      %4070 = vrot.lane.b32.xlu0 %v3987, 32
      %v4071 = vpop.permute.xlu0 %4070
      %4072 = vrot.lane.b32.xlu0 %v3988, 32
      %v4073 = vpop.permute.xlu0 %4072
      %4074 = vrot.lane.b32.xlu0 %v3989, 32
      %v4075 = vpop.permute.xlu0 %4074
      %4076 = vrot.lane.b32.xlu0 %v3990, 32
      %v4077 = vpop.permute.xlu0 %4076
      %4078 = vrot.lane.b32.xlu0 %v3991, 32
      %v4079 = vpop.permute.xlu0 %4078
      %4080 = vrot.lane.b32.xlu0 %v3992, 32
      %v4081 = vpop.permute.xlu0 %4080
      %4082 = vrot.lane.b32.xlu0 %v3993, 32
      %v4083 = vpop.permute.xlu0 %4082
      %4084 = vrot.lane.b32.xlu0 %v3994, 32
      %v4085 = vpop.permute.xlu0 %4084
      %4086 = vrot.lane.b32.xlu0 %v3995, 32
      %v4087 = vpop.permute.xlu0 %4086
      %4088 = vrot.lane.b32.xlu0 %v3996, 32
      %v4089 = vpop.permute.xlu0 %4088
      %4090 = vrot.lane.b32.xlu0 %v3997, 32
      %v4091 = vpop.permute.xlu0 %4090
      %4092 = vrot.lane.b32.xlu0 %v3998, 32
      %v4093 = vpop.permute.xlu0 %4092
      %4094 = vrot.lane.b32.xlu0 %v3999, 32
      %v4095 = vpop.permute.xlu0 %4094
      %4128 = vst.msk [vmem:[#allocation3] sm:$0xff] %vm1858, %v4033
      %4129 = vst.msk [vmem:[#allocation3 + $0x8] sm:$0xff] %vm1858, %v4035
      %4130 = vst.msk [vmem:[#allocation3 + $0x10] sm:$0xff] %vm1858, %v4037
      %4131 = vst.msk [vmem:[#allocation3 + $0x18] sm:$0xff] %vm1858, %v4039
      %4132 = vst.msk [vmem:[#allocation3 + $0x20] sm:$0xff] %vm1858, %v4041
      %4133 = vst.msk [vmem:[#allocation3 + $0x28] sm:$0xff] %vm1858, %v4043
      %4134 = vst.msk [vmem:[#allocation3 + $0x30] sm:$0xff] %vm1858, %v4045
      %4135 = vst.msk [vmem:[#allocation3 + $0x38] sm:$0xff] %vm1858, %v4047
      %4136 = vst.msk [vmem:[#allocation3 + $0x40] sm:$0xff] %vm1858, %v4049
      %4137 = vst.msk [vmem:[#allocation3 + $0x48] sm:$0xff] %vm1858, %v4051
      %4138 = vst.msk [vmem:[#allocation3 + $0x50] sm:$0xff] %vm1858, %v4053
      %4139 = vst.msk [vmem:[#allocation3 + $0x58] sm:$0xff] %vm1858, %v4055
      %4140 = vst.msk [vmem:[#allocation3 + $0x60] sm:$0xff] %vm1858, %v4057
      %4141 = vst.msk [vmem:[#allocation3 + $0x68] sm:$0xff] %vm1858, %v4059
      %4142 = vst.msk [vmem:[#allocation3 + $0x70] sm:$0xff] %vm1858, %v4061
      %4143 = vst.msk [vmem:[#allocation3 + $0x78] sm:$0xff] %vm1858, %v4063
      %4144 = vst.msk [vmem:[#allocation3 + $0x80] sm:$0xff] %vm1858, %v4065
      %4145 = vst.msk [vmem:[#allocation3 + $0x88] sm:$0xff] %vm1858, %v4067
      %4146 = vst.msk [vmem:[#allocation3 + $0x90] sm:$0xff] %vm1858, %v4069
      %4147 = vst.msk [vmem:[#allocation3 + $0x98] sm:$0xff] %vm1858, %v4071
      %4148 = vst.msk [vmem:[#allocation3 + $0xa0] sm:$0xff] %vm1858, %v4073
      %4149 = vst.msk [vmem:[#allocation3 + $0xa8] sm:$0xff] %vm1858, %v4075
      %4150 = vst.msk [vmem:[#allocation3 + $0xb0] sm:$0xff] %vm1858, %v4077
      %4151 = vst.msk [vmem:[#allocation3 + $0xb8] sm:$0xff] %vm1858, %v4079
      %4152 = vst.msk [vmem:[#allocation3 + $0xc0] sm:$0xff] %vm1858, %v4081
      %4153 = vst.msk [vmem:[#allocation3 + $0xc8] sm:$0xff] %vm1858, %v4083
      %4154 = vst.msk [vmem:[#allocation3 + $0xd0] sm:$0xff] %vm1858, %v4085
      %4155 = vst.msk [vmem:[#allocation3 + $0xd8] sm:$0xff] %vm1858, %v4087
      %4156 = vst.msk [vmem:[#allocation3 + $0xe0] sm:$0xff] %vm1858, %v4089
      %4157 = vst.msk [vmem:[#allocation3 + $0xe8] sm:$0xff] %vm1858, %v4091
      %4158 = vst.msk [vmem:[#allocation3 + $0xf0] sm:$0xff] %vm1858, %v4093
      %4159 = vst.msk [vmem:[#allocation3 + $0xf8] sm:$0xff] %vm1858, %v4095
      %v4160 = vld [vmem:[#allocation3] sm:$0xff]
      %v4161 = vld [vmem:[#allocation3 + $0x8] sm:$0xff]
      %v4162 = vld [vmem:[#allocation3 + $0x10] sm:$0xff]
      %v4163 = vld [vmem:[#allocation3 + $0x18] sm:$0xff]
      %v4164 = vld [vmem:[#allocation3 + $0x20] sm:$0xff]
      %v4165 = vld [vmem:[#allocation3 + $0x28] sm:$0xff]
      %v4166 = vld [vmem:[#allocation3 + $0x30] sm:$0xff]
      %v4167 = vld [vmem:[#allocation3 + $0x38] sm:$0xff]
      %v4168 = vld [vmem:[#allocation3 + $0x40] sm:$0xff]
      %v4169 = vld [vmem:[#allocation3 + $0x48] sm:$0xff]
      %v4170 = vld [vmem:[#allocation3 + $0x50] sm:$0xff]
      %v4171 = vld [vmem:[#allocation3 + $0x58] sm:$0xff]
      %v4172 = vld [vmem:[#allocation3 + $0x60] sm:$0xff]
      %v4173 = vld [vmem:[#allocation3 + $0x68] sm:$0xff]
      %v4174 = vld [vmem:[#allocation3 + $0x70] sm:$0xff]
      %v4175 = vld [vmem:[#allocation3 + $0x78] sm:$0xff]
      %v4176 = vld [vmem:[#allocation3 + $0x80] sm:$0xff]
      %v4177 = vld [vmem:[#allocation3 + $0x88] sm:$0xff]
      %v4178 = vld [vmem:[#allocation3 + $0x90] sm:$0xff]
      %v4179 = vld [vmem:[#allocation3 + $0x98] sm:$0xff]
      %v4180 = vld [vmem:[#allocation3 + $0xa0] sm:$0xff]
      %v4181 = vld [vmem:[#allocation3 + $0xa8] sm:$0xff]
      %v4182 = vld [vmem:[#allocation3 + $0xb0] sm:$0xff]
      %v4183 = vld [vmem:[#allocation3 + $0xb8] sm:$0xff]
      %v4184 = vld [vmem:[#allocation3 + $0xc0] sm:$0xff]
      %v4185 = vld [vmem:[#allocation3 + $0xc8] sm:$0xff]
      %v4186 = vld [vmem:[#allocation3 + $0xd0] sm:$0xff]
      %v4187 = vld [vmem:[#allocation3 + $0xd8] sm:$0xff]
      %v4188 = vld [vmem:[#allocation3 + $0xe0] sm:$0xff]
      %v4189 = vld [vmem:[#allocation3 + $0xe8] sm:$0xff]
      %v4190 = vld [vmem:[#allocation3 + $0xf0] sm:$0xff]
      %v4191 = vld [vmem:[#allocation3 + $0xf8] sm:$0xff]
      %v4192 = vld [vmem:[%s2] sm:$0xff]
      %v4193 = vld [vmem:[%s2 + $0x8] sm:$0xff]
      %v4194 = vld [vmem:[%s2 + $0x10] sm:$0xff]
      %v4195 = vld [vmem:[%s2 + $0x18] sm:$0xff]
      %v4196 = vld [vmem:[%s2 + $0x20] sm:$0xf]
      %v4198 = vsel %vm1928, %v4160, 0
      %v4201 = vsel %vm1928, %v4161, 0
      %v4204 = vsel %vm1928, %v4162, 0
      %v4207 = vsel %vm1928, %v4163, 0
      %v4210 = vsel %vm1928, %v4164, 0
      %v4213 = vsel %vm1928, %v4165, 0
      %v4216 = vsel %vm1928, %v4166, 0
      %v4219 = vsel %vm1928, %v4167, 0
      %v4222 = vsel %vm1928, %v4168, 0
      %v4225 = vsel %vm1928, %v4169, 0
      %v4228 = vsel %vm1928, %v4170, 0
      %v4231 = vsel %vm1928, %v4171, 0
      %v4234 = vsel %vm1928, %v4172, 0
      %v4237 = vsel %vm1928, %v4173, 0
      %v4240 = vsel %vm1928, %v4174, 0
      %v4243 = vsel %vm1928, %v4175, 0
      %v4246 = vsel %vm1928, %v4176, 0
      %v4249 = vsel %vm1928, %v4177, 0
      %v4252 = vsel %vm1928, %v4178, 0
      %v4255 = vsel %vm1928, %v4179, 0
      %v4258 = vsel %vm1928, %v4180, 0
      %v4261 = vsel %vm1928, %v4181, 0
      %v4264 = vsel %vm1928, %v4182, 0
      %v4267 = vsel %vm1928, %v4183, 0
      %v4270 = vsel %vm1928, %v4184, 0
      %v4273 = vsel %vm1928, %v4185, 0
      %v4276 = vsel %vm1928, %v4186, 0
      %v4279 = vsel %vm1928, %v4187, 0
      %v4282 = vsel %vm1928, %v4188, 0
      %v4285 = vsel %vm1928, %v4189, 0
      %v4288 = vsel %vm1928, %v4190, 0
      %v4291 = vsel %vm1928, %v4191, 0
      %v4294 = vsel %vm2025, %v4196, 0
      %4296 = vmatprep.subr.mxu0 0.0
      %4297 = vmatpush1.msra.mxu0 %v4192
      %4298 = vmatprep.subr.mxu0 0.0
      %4299 = vmatpush1.msra.mxu0 %v4193
      %4300 = vmatprep.subr.mxu0 0.0
      %4301 = vmatpush1.msra.mxu0 %v4194
      %4302 = vmatprep.subr.mxu0 0.0
      %4303 = vmatpush1.msra.mxu0 %v4195
      %4304 = vmatprep.subr.mxu0 0.0
      %4305 = vmatpush1.msra.mxu0 %v4294
      %4306 = vmatprep.subr.mxu0 0.0
      %4307 = vmatpush1.msra.mxu0 0.0
      %4308 = vmatprep.subr.mxu0 0.0
      %4309 = vmatpush1.msra.mxu0 0.0
      %4310 = vmatprep.subr.mxu0 0.0
      %4311 = vmatpush1.msra.mxu0 0.0
      %4312 = vmatprep.subr.mxu0 0.0
      %4313 = vmatpush1.msra.mxu0 0.0
      %4314 = vmatprep.subr.mxu0 0.0
      %4315 = vmatpush1.msra.mxu0 0.0
      %4316 = vmatprep.subr.mxu0 0.0
      %4317 = vmatpush1.msra.mxu0 0.0
      %4318 = vmatprep.subr.mxu0 0.0
      %4319 = vmatpush1.msra.mxu0 0.0
      %4320 = vmatprep.subr.mxu0 0.0
      %4321 = vmatpush1.msra.mxu0 0.0
      %4322 = vmatprep.subr.mxu0 0.0
      %4323 = vmatpush1.msra.mxu0 0.0
      %4324 = vmatprep.subr.mxu0 0.0
      %4325 = vmatpush1.msra.mxu0 0.0
      %4326 = vmatprep.subr.mxu0 0.0
      %4327 = vmatpush1.msra.mxu0 0.0
      %4328 = vmatprep.subr.mxu0 0.0
      %4329 = vmatpush1.msra.mxu0 0.0
      %4330 = vmatprep.subr.mxu0 0.0
      %4331 = vmatpush1.msra.mxu0 0.0
      %4332 = vmatprep.subr.mxu0 0.0
      %4333 = vmatpush1.msra.mxu0 0.0
      %4334 = vmatprep.subr.mxu0 0.0
      %4335 = vmatpush1.msra.mxu0 0.0
      %4336 = vmatprep.subr.mxu0 0.0
      %4337 = vmatpush1.msra.mxu0 0.0
      %4338 = vmatprep.subr.mxu0 0.0
      %4339 = vmatpush1.msra.mxu0 0.0
      %4340 = vmatprep.subr.mxu0 0.0
      %4341 = vmatpush1.msra.mxu0 0.0
      %4342 = vmatprep.subr.mxu0 0.0
      %4343 = vmatpush1.msra.mxu0 0.0
      %4344 = vmatprep.subr.mxu0 0.0
      %4345 = vmatpush1.msra.mxu0 0.0
      %4346 = vmatprep.subr.mxu0 0.0
      %4347 = vmatpush1.msra.mxu0 0.0
      %4348 = vmatprep.subr.mxu0 0.0
      %4349 = vmatpush1.msra.mxu0 0.0
      %4350 = vmatprep.subr.mxu0 0.0
      %4351 = vmatpush1.msra.mxu0 0.0
      %4352 = vmatprep.subr.mxu0 0.0
      %4353 = vmatpush1.msra.mxu0 0.0
      %4354 = vmatprep.subr.mxu0 0.0
      %4355 = vmatpush1.msra.mxu0 0.0
      %4356 = vmatprep.subr.mxu0 0.0
      %4357 = vmatpush1.msra.mxu0 0.0
      %4358 = vmatprep.subr.mxu0 0.0
      %4359 = vmatpush1.msra.mxu0 0.0
      %4360 = vmatprep.mubr.f32.mxu0 0.0
      %4361 = vmatmul.mubr.f32.gmra.mrb[0].mxu0 %v4198
      %v4362 = vpop.f32.mrb[0].mxu0
      %v4363 = vadd.f32 0.0, %v4362
      %v4364 = vpop.f32.mrb[0].mxu0
      %4365 = vmatprep.mubr.f32.mxu0 0.0
      %4366 = vmatmul.mubr.f32.gmra.mrb[0].mxu0 %v4201
      %v4367 = vpop.f32.mrb[0].mxu0
      %v4368 = vadd.f32 0.0, %v4367
      %v4369 = vpop.f32.mrb[0].mxu0
      %4370 = vmatprep.mubr.f32.mxu0 0.0
      %4371 = vmatmul.mubr.f32.gmra.mrb[0].mxu0 %v4204
      %v4372 = vpop.f32.mrb[0].mxu0
      %v4373 = vadd.f32 0.0, %v4372
      %v4374 = vpop.f32.mrb[0].mxu0
      %4375 = vmatprep.mubr.f32.mxu0 0.0
      %4376 = vmatmul.mubr.f32.gmra.mrb[0].mxu0 %v4207
      %v4377 = vpop.f32.mrb[0].mxu0
      %v4378 = vadd.f32 0.0, %v4377
      %v4379 = vpop.f32.mrb[0].mxu0
      %4380 = vmatprep.mubr.f32.mxu0 0.0
      %4381 = vmatmul.mubr.f32.gmra.mrb[0].mxu0 %v4210
      %v4382 = vpop.f32.mrb[0].mxu0
      %v4383 = vadd.f32 0.0, %v4382
      %v4384 = vpop.f32.mrb[0].mxu0
      %4385 = vmatprep.mubr.f32.mxu0 0.0
      %4386 = vmatmul.mubr.f32.gmra.mrb[0].mxu0 %v4213
      %v4387 = vpop.f32.mrb[0].mxu0
      %v4388 = vadd.f32 0.0, %v4387
      %v4389 = vpop.f32.mrb[0].mxu0
      %4390 = vmatprep.mubr.f32.mxu0 0.0
      %4391 = vmatmul.mubr.f32.gmra.mrb[0].mxu0 %v4216
      %v4392 = vpop.f32.mrb[0].mxu0
      %v4393 = vadd.f32 0.0, %v4392
      %v4394 = vpop.f32.mrb[0].mxu0
      %4395 = vmatprep.mubr.f32.mxu0 0.0
      %4396 = vmatmul.mubr.f32.gmra.mrb[0].mxu0 %v4219
      %v4397 = vpop.f32.mrb[0].mxu0
      %v4398 = vadd.f32 0.0, %v4397
      %v4399 = vpop.f32.mrb[0].mxu0
      %4400 = vmatprep.mubr.f32.mxu0 0.0
      %4401 = vmatmul.mubr.f32.gmra.mrb[0].mxu0 %v4222
      %v4402 = vpop.f32.mrb[0].mxu0
      %v4403 = vadd.f32 0.0, %v4402
      %v4404 = vpop.f32.mrb[0].mxu0
      %4405 = vmatprep.mubr.f32.mxu0 0.0
      %4406 = vmatmul.mubr.f32.gmra.mrb[0].mxu0 %v4225
      %v4407 = vpop.f32.mrb[0].mxu0
      %v4408 = vadd.f32 0.0, %v4407
      %v4409 = vpop.f32.mrb[0].mxu0
      %4410 = vmatprep.mubr.f32.mxu0 0.0
      %4411 = vmatmul.mubr.f32.gmra.mrb[0].mxu0 %v4228
      %v4412 = vpop.f32.mrb[0].mxu0
      %v4413 = vadd.f32 0.0, %v4412
      %v4414 = vpop.f32.mrb[0].mxu0
      %4415 = vmatprep.mubr.f32.mxu0 0.0
      %4416 = vmatmul.mubr.f32.gmra.mrb[0].mxu0 %v4231
      %v4417 = vpop.f32.mrb[0].mxu0
      %v4418 = vadd.f32 0.0, %v4417
      %v4419 = vpop.f32.mrb[0].mxu0
      %4420 = vmatprep.mubr.f32.mxu0 0.0
      %4421 = vmatmul.mubr.f32.gmra.mrb[0].mxu0 %v4234
      %v4422 = vpop.f32.mrb[0].mxu0
      %v4423 = vadd.f32 0.0, %v4422
      %v4424 = vpop.f32.mrb[0].mxu0
      %4425 = vmatprep.mubr.f32.mxu0 0.0
      %4426 = vmatmul.mubr.f32.gmra.mrb[0].mxu0 %v4237
      %v4427 = vpop.f32.mrb[0].mxu0
      %v4428 = vadd.f32 0.0, %v4427
      %v4429 = vpop.f32.mrb[0].mxu0
      %4430 = vmatprep.mubr.f32.mxu0 0.0
      %4431 = vmatmul.mubr.f32.gmra.mrb[0].mxu0 %v4240
      %v4432 = vpop.f32.mrb[0].mxu0
      %v4433 = vadd.f32 0.0, %v4432
      %v4434 = vpop.f32.mrb[0].mxu0
      %4435 = vmatprep.mubr.f32.mxu0 0.0
      %4436 = vmatmul.mubr.f32.gmra.mrb[0].mxu0 %v4243
      %v4437 = vpop.f32.mrb[0].mxu0
      %v4438 = vadd.f32 0.0, %v4437
      %v4439 = vpop.f32.mrb[0].mxu0
      %4440 = vmatprep.mubr.f32.mxu0 0.0
      %4441 = vmatmul.mubr.f32.gmra.mrb[0].mxu0 %v4246
      %v4442 = vpop.f32.mrb[0].mxu0
      %v4443 = vadd.f32 0.0, %v4442
      %v4444 = vpop.f32.mrb[0].mxu0
      %4445 = vmatprep.mubr.f32.mxu0 0.0
      %4446 = vmatmul.mubr.f32.gmra.mrb[0].mxu0 %v4249
      %v4447 = vpop.f32.mrb[0].mxu0
      %v4448 = vadd.f32 0.0, %v4447
      %v4449 = vpop.f32.mrb[0].mxu0
      %4450 = vmatprep.mubr.f32.mxu0 0.0
      %4451 = vmatmul.mubr.f32.gmra.mrb[0].mxu0 %v4252
      %v4452 = vpop.f32.mrb[0].mxu0
      %v4453 = vadd.f32 0.0, %v4452
      %v4454 = vpop.f32.mrb[0].mxu0
      %4455 = vmatprep.mubr.f32.mxu0 0.0
      %4456 = vmatmul.mubr.f32.gmra.mrb[0].mxu0 %v4255
      %v4457 = vpop.f32.mrb[0].mxu0
      %v4458 = vadd.f32 0.0, %v4457
      %v4459 = vpop.f32.mrb[0].mxu0
      %4460 = vmatprep.mubr.f32.mxu0 0.0
      %4461 = vmatmul.mubr.f32.gmra.mrb[0].mxu0 %v4258
      %v4462 = vpop.f32.mrb[0].mxu0
      %v4463 = vadd.f32 0.0, %v4462
      %v4464 = vpop.f32.mrb[0].mxu0
      %4465 = vmatprep.mubr.f32.mxu0 0.0
      %4466 = vmatmul.mubr.f32.gmra.mrb[0].mxu0 %v4261
      %v4467 = vpop.f32.mrb[0].mxu0
      %v4468 = vadd.f32 0.0, %v4467
      %v4469 = vpop.f32.mrb[0].mxu0
      %4470 = vmatprep.mubr.f32.mxu0 0.0
      %4471 = vmatmul.mubr.f32.gmra.mrb[0].mxu0 %v4264
      %v4472 = vpop.f32.mrb[0].mxu0
      %v4473 = vadd.f32 0.0, %v4472
      %v4474 = vpop.f32.mrb[0].mxu0
      %4475 = vmatprep.mubr.f32.mxu0 0.0
      %4476 = vmatmul.mubr.f32.gmra.mrb[0].mxu0 %v4267
      %v4477 = vpop.f32.mrb[0].mxu0
      %v4478 = vadd.f32 0.0, %v4477
      %v4479 = vpop.f32.mrb[0].mxu0
      %4480 = vmatprep.mubr.f32.mxu0 0.0
      %4481 = vmatmul.mubr.f32.gmra.mrb[0].mxu0 %v4270
      %v4482 = vpop.f32.mrb[0].mxu0
      %v4483 = vadd.f32 0.0, %v4482
      %v4484 = vpop.f32.mrb[0].mxu0
      %4485 = vmatprep.mubr.f32.mxu0 0.0
      %4486 = vmatmul.mubr.f32.gmra.mrb[0].mxu0 %v4273
      %v4487 = vpop.f32.mrb[0].mxu0
      %v4488 = vadd.f32 0.0, %v4487
      %v4489 = vpop.f32.mrb[0].mxu0
      %4490 = vmatprep.mubr.f32.mxu0 0.0
      %4491 = vmatmul.mubr.f32.gmra.mrb[0].mxu0 %v4276
      %v4492 = vpop.f32.mrb[0].mxu0
      %v4493 = vadd.f32 0.0, %v4492
      %v4494 = vpop.f32.mrb[0].mxu0
      %4495 = vmatprep.mubr.f32.mxu0 0.0
      %4496 = vmatmul.mubr.f32.gmra.mrb[0].mxu0 %v4279
      %v4497 = vpop.f32.mrb[0].mxu0
      %v4498 = vadd.f32 0.0, %v4497
      %v4499 = vpop.f32.mrb[0].mxu0
      %4500 = vmatprep.mubr.f32.mxu0 0.0
      %4501 = vmatmul.mubr.f32.gmra.mrb[0].mxu0 %v4282
      %v4502 = vpop.f32.mrb[0].mxu0
      %v4503 = vadd.f32 0.0, %v4502
      %v4504 = vpop.f32.mrb[0].mxu0
      %4505 = vmatprep.mubr.f32.mxu0 0.0
      %4506 = vmatmul.mubr.f32.gmra.mrb[0].mxu0 %v4285
      %v4507 = vpop.f32.mrb[0].mxu0
      %v4508 = vadd.f32 0.0, %v4507
      %v4509 = vpop.f32.mrb[0].mxu0
      %4510 = vmatprep.mubr.f32.mxu0 0.0
      %4511 = vmatmul.mubr.f32.gmra.mrb[0].mxu0 %v4288
      %v4512 = vpop.f32.mrb[0].mxu0
      %v4513 = vadd.f32 0.0, %v4512
      %v4514 = vpop.f32.mrb[0].mxu0
      %4515 = vmatprep.mubr.f32.mxu0 0.0
      %4516 = vmatmul.mubr.f32.gmra.mrb[0].mxu0 %v4291
      %v4517 = vpop.f32.mrb[0].mxu0
      %v4518 = vadd.f32 0.0, %v4517
      %v4519 = vpop.f32.mrb[0].mxu0
      %4520 = vdwg.mxu0
      %v4521 = vsel %vm171, %v4363, 0.0
      %v4522 = vsel %vm171, %v4368, 0.0
      %v4523 = vadd.f32 %v4521, %v4522
      %v4524 = vsel %vm171, %v4373, 0.0
      %v4525 = vadd.f32 %v4523, %v4524
      %v4526 = vsel %vm171, %v4378, 0.0
      %v4527 = vadd.f32 %v4525, %v4526
      %v4528 = vsel %vm171, %v4383, 0.0
      %v4529 = vadd.f32 %v4527, %v4528
      %v4530 = vsel %vm171, %v4388, 0.0
      %v4531 = vadd.f32 %v4529, %v4530
      %v4532 = vsel %vm171, %v4393, 0.0
      %v4533 = vadd.f32 %v4531, %v4532
      %v4534 = vsel %vm171, %v4398, 0.0
      %v4535 = vadd.f32 %v4533, %v4534
      %v4536 = vsel %vm171, %v4403, 0.0
      %v4537 = vadd.f32 %v4535, %v4536
      %v4538 = vsel %vm171, %v4408, 0.0
      %v4539 = vadd.f32 %v4537, %v4538
      %v4540 = vsel %vm171, %v4413, 0.0
      %v4541 = vadd.f32 %v4539, %v4540
      %v4542 = vsel %vm171, %v4418, 0.0
      %v4543 = vadd.f32 %v4541, %v4542
      %v4544 = vsel %vm171, %v4423, 0.0
      %v4545 = vadd.f32 %v4543, %v4544
      %v4546 = vsel %vm171, %v4428, 0.0
      %v4547 = vadd.f32 %v4545, %v4546
      %v4548 = vsel %vm171, %v4433, 0.0
      %v4549 = vadd.f32 %v4547, %v4548
      %v4550 = vsel %vm171, %v4438, 0.0
      %v4551 = vadd.f32 %v4549, %v4550
      %v4552 = vsel %vm171, %v4443, 0.0
      %v4553 = vadd.f32 %v4551, %v4552
      %v4554 = vsel %vm171, %v4448, 0.0
      %v4555 = vadd.f32 %v4553, %v4554
      %v4556 = vsel %vm171, %v4453, 0.0
      %v4557 = vadd.f32 %v4555, %v4556
      %v4558 = vsel %vm171, %v4458, 0.0
      %v4559 = vadd.f32 %v4557, %v4558
      %v4560 = vsel %vm171, %v4463, 0.0
      %v4561 = vadd.f32 %v4559, %v4560
      %v4562 = vsel %vm171, %v4468, 0.0
      %v4563 = vadd.f32 %v4561, %v4562
      %v4564 = vsel %vm171, %v4473, 0.0
      %v4565 = vadd.f32 %v4563, %v4564
      %v4566 = vsel %vm171, %v4478, 0.0
      %v4567 = vadd.f32 %v4565, %v4566
      %v4568 = vsel %vm171, %v4483, 0.0
      %v4569 = vadd.f32 %v4567, %v4568
      %v4570 = vsel %vm171, %v4488, 0.0
      %v4571 = vadd.f32 %v4569, %v4570
      %v4572 = vsel %vm171, %v4493, 0.0
      %v4573 = vadd.f32 %v4571, %v4572
      %v4574 = vsel %vm171, %v4498, 0.0
      %v4575 = vadd.f32 %v4573, %v4574
      %v4576 = vsel %vm171, %v4503, 0.0
      %v4577 = vadd.f32 %v4575, %v4576
      %v4578 = vsel %vm171, %v4508, 0.0
      %v4579 = vadd.f32 %v4577, %v4578
      %v4580 = vsel %vm171, %v4513, 0.0
      %v4581 = vadd.f32 %v4579, %v4580
      %v4582 = vsel %vm171, %v4518, 0.0
      %v4583 = vadd.f32 %v4581, %v4582
      %v4584 = vrot.slane %v4583, 4
      %v4585 = vadd.f32 %v4583, %v4584
      %v4586 = vrot.slane %v4585, 2
      %v4587 = vadd.f32 %v4585, %v4586
      %v4588 = vrot.slane %v4587, 1
      %v4589 = vadd.f32 %v4587, %v4588
      %v4590 = vmul.f32 %v4589, %v2323
      %v4591 = vmul.f32 %v4363, %v4363
      %v4592 = vmul.f32 %v4368, %v4368
      %v4593 = vmul.f32 %v4373, %v4373
      %v4594 = vmul.f32 %v4378, %v4378
      %v4595 = vmul.f32 %v4383, %v4383
      %v4596 = vmul.f32 %v4388, %v4388
      %v4597 = vmul.f32 %v4393, %v4393
      %v4598 = vmul.f32 %v4398, %v4398
      %v4599 = vmul.f32 %v4403, %v4403
      %v4600 = vmul.f32 %v4408, %v4408
      %v4601 = vmul.f32 %v4413, %v4413
      %v4602 = vmul.f32 %v4418, %v4418
      %v4603 = vmul.f32 %v4423, %v4423
      %v4604 = vmul.f32 %v4428, %v4428
      %v4605 = vmul.f32 %v4433, %v4433
      %v4606 = vmul.f32 %v4438, %v4438
      %v4607 = vmul.f32 %v4443, %v4443
      %v4608 = vmul.f32 %v4448, %v4448
      %v4609 = vmul.f32 %v4453, %v4453
      %v4610 = vmul.f32 %v4458, %v4458
      %v4611 = vmul.f32 %v4463, %v4463
      %v4612 = vmul.f32 %v4468, %v4468
      %v4613 = vmul.f32 %v4473, %v4473
      %v4614 = vmul.f32 %v4478, %v4478
      %v4615 = vmul.f32 %v4483, %v4483
      %v4616 = vmul.f32 %v4488, %v4488
      %v4617 = vmul.f32 %v4493, %v4493
      %v4618 = vmul.f32 %v4498, %v4498
      %v4619 = vmul.f32 %v4503, %v4503
      %v4620 = vmul.f32 %v4508, %v4508
      %v4621 = vmul.f32 %v4513, %v4513
      %v4622 = vmul.f32 %v4518, %v4518
      %v4623 = vsel %vm171, %v4591, 0.0
      %v4624 = vsel %vm171, %v4592, 0.0
      %v4625 = vadd.f32 %v4623, %v4624
      %v4626 = vsel %vm171, %v4593, 0.0
      %v4627 = vadd.f32 %v4625, %v4626
      %v4628 = vsel %vm171, %v4594, 0.0
      %v4629 = vadd.f32 %v4627, %v4628
      %v4630 = vsel %vm171, %v4595, 0.0
      %v4631 = vadd.f32 %v4629, %v4630
      %v4632 = vsel %vm171, %v4596, 0.0
      %v4633 = vadd.f32 %v4631, %v4632
      %v4634 = vsel %vm171, %v4597, 0.0
      %v4635 = vadd.f32 %v4633, %v4634
      %v4636 = vsel %vm171, %v4598, 0.0
      %v4637 = vadd.f32 %v4635, %v4636
      %v4638 = vsel %vm171, %v4599, 0.0
      %v4639 = vadd.f32 %v4637, %v4638
      %v4640 = vsel %vm171, %v4600, 0.0
      %v4641 = vadd.f32 %v4639, %v4640
      %v4642 = vsel %vm171, %v4601, 0.0
      %v4643 = vadd.f32 %v4641, %v4642
      %v4644 = vsel %vm171, %v4602, 0.0
      %v4645 = vadd.f32 %v4643, %v4644
      %v4646 = vsel %vm171, %v4603, 0.0
      %v4647 = vadd.f32 %v4645, %v4646
      %v4648 = vsel %vm171, %v4604, 0.0
      %v4649 = vadd.f32 %v4647, %v4648
      %v4650 = vsel %vm171, %v4605, 0.0
      %v4651 = vadd.f32 %v4649, %v4650
      %v4652 = vsel %vm171, %v4606, 0.0
      %v4653 = vadd.f32 %v4651, %v4652
      %v4654 = vsel %vm171, %v4607, 0.0
      %v4655 = vadd.f32 %v4653, %v4654
      %v4656 = vsel %vm171, %v4608, 0.0
      %v4657 = vadd.f32 %v4655, %v4656
      %v4658 = vsel %vm171, %v4609, 0.0
      %v4659 = vadd.f32 %v4657, %v4658
      %v4660 = vsel %vm171, %v4610, 0.0
      %v4661 = vadd.f32 %v4659, %v4660
      %v4662 = vsel %vm171, %v4611, 0.0
      %v4663 = vadd.f32 %v4661, %v4662
      %v4664 = vsel %vm171, %v4612, 0.0
      %v4665 = vadd.f32 %v4663, %v4664
      %v4666 = vsel %vm171, %v4613, 0.0
      %v4667 = vadd.f32 %v4665, %v4666
      %v4668 = vsel %vm171, %v4614, 0.0
      %v4669 = vadd.f32 %v4667, %v4668
      %v4670 = vsel %vm171, %v4615, 0.0
      %v4671 = vadd.f32 %v4669, %v4670
      %v4672 = vsel %vm171, %v4616, 0.0
      %v4673 = vadd.f32 %v4671, %v4672
      %v4674 = vsel %vm171, %v4617, 0.0
      %v4675 = vadd.f32 %v4673, %v4674
      %v4676 = vsel %vm171, %v4618, 0.0
      %v4677 = vadd.f32 %v4675, %v4676
      %v4678 = vsel %vm171, %v4619, 0.0
      %v4679 = vadd.f32 %v4677, %v4678
      %v4680 = vsel %vm171, %v4620, 0.0
      %v4681 = vadd.f32 %v4679, %v4680
      %v4682 = vsel %vm171, %v4621, 0.0
      %v4683 = vadd.f32 %v4681, %v4682
      %v4684 = vsel %vm171, %v4622, 0.0
      %v4685 = vadd.f32 %v4683, %v4684
      %v4686 = vrot.slane %v4685, 4
      %v4687 = vadd.f32 %v4685, %v4686
      %v4688 = vrot.slane %v4687, 2
      %v4689 = vadd.f32 %v4687, %v4688
      %v4690 = vrot.slane %v4689, 1
      %v4691 = vadd.f32 %v4689, %v4690
      %v4692 = vmul.f32 %v4691, %v2323
      %v4693 = vmul.f32 %v4590, %v4590
      %v4694 = vsub.f32 %v4692, %v4693
      %v4695 = vmax.f32 %v4694, 0.0
      %v4696 = vsub.f32 %v4363, %v4590
      %v4697 = vsub.f32 %v4368, %v4590
      %v4698 = vsub.f32 %v4373, %v4590
      %v4699 = vsub.f32 %v4378, %v4590
      %v4700 = vsub.f32 %v4383, %v4590
      %v4701 = vsub.f32 %v4388, %v4590
      %v4702 = vsub.f32 %v4393, %v4590
      %v4703 = vsub.f32 %v4398, %v4590
      %v4704 = vsub.f32 %v4403, %v4590
      %v4705 = vsub.f32 %v4408, %v4590
      %v4706 = vsub.f32 %v4413, %v4590
      %v4707 = vsub.f32 %v4418, %v4590
      %v4708 = vsub.f32 %v4423, %v4590
      %v4709 = vsub.f32 %v4428, %v4590
      %v4710 = vsub.f32 %v4433, %v4590
      %v4711 = vsub.f32 %v4438, %v4590
      %v4712 = vsub.f32 %v4443, %v4590
      %v4713 = vsub.f32 %v4448, %v4590
      %v4714 = vsub.f32 %v4453, %v4590
      %v4715 = vsub.f32 %v4458, %v4590
      %v4716 = vsub.f32 %v4463, %v4590
      %v4717 = vsub.f32 %v4468, %v4590
      %v4718 = vsub.f32 %v4473, %v4590
      %v4719 = vsub.f32 %v4478, %v4590
      %v4720 = vsub.f32 %v4483, %v4590
      %v4721 = vsub.f32 %v4488, %v4590
      %v4722 = vsub.f32 %v4493, %v4590
      %v4723 = vsub.f32 %v4498, %v4590
      %v4724 = vsub.f32 %v4503, %v4590
      %v4725 = vsub.f32 %v4508, %v4590
      %v4726 = vsub.f32 %v4513, %v4590
      %v4727 = vsub.f32 %v4518, %v4590
      %v4728 = vadd.f32 %v4695, 1e-05
      %v4729 = vrsqrt.pop %v4728
      %v4730 = vmul.f32 %v4696, %v4729
      %v4731 = vmul.f32 %v4697, %v4729
      %v4732 = vmul.f32 %v4698, %v4729
      %v4733 = vmul.f32 %v4699, %v4729
      %v4734 = vmul.f32 %v4700, %v4729
      %v4735 = vmul.f32 %v4701, %v4729
      %v4736 = vmul.f32 %v4702, %v4729
      %v4737 = vmul.f32 %v4703, %v4729
      %v4738 = vmul.f32 %v4704, %v4729
      %v4739 = vmul.f32 %v4705, %v4729
      %v4740 = vmul.f32 %v4706, %v4729
      %v4741 = vmul.f32 %v4707, %v4729
      %v4742 = vmul.f32 %v4708, %v4729
      %v4743 = vmul.f32 %v4709, %v4729
      %v4744 = vmul.f32 %v4710, %v4729
      %v4745 = vmul.f32 %v4711, %v4729
      %v4746 = vmul.f32 %v4712, %v4729
      %v4747 = vmul.f32 %v4713, %v4729
      %v4748 = vmul.f32 %v4714, %v4729
      %v4749 = vmul.f32 %v4715, %v4729
      %v4750 = vmul.f32 %v4716, %v4729
      %v4751 = vmul.f32 %v4717, %v4729
      %v4752 = vmul.f32 %v4718, %v4729
      %v4753 = vmul.f32 %v4719, %v4729
      %v4754 = vmul.f32 %v4720, %v4729
      %v4755 = vmul.f32 %v4721, %v4729
      %v4756 = vmul.f32 %v4722, %v4729
      %v4757 = vmul.f32 %v4723, %v4729
      %v4758 = vmul.f32 %v4724, %v4729
      %v4759 = vmul.f32 %v4725, %v4729
      %v4760 = vmul.f32 %v4726, %v4729
      %v4761 = vmul.f32 %v4727, %v4729
      %v4762 = vld [vmem:[%s165] sm:$0xff]
      %v4763 = vld [vmem:[%s165 + $0x8] sm:$0xff]
      %v4764 = vld [vmem:[%s165 + $0x10] sm:$0xff]
      %v4765 = vld [vmem:[%s165 + $0x18] sm:$0xff]
      %v4766 = vld [vmem:[%s165 + $0x20] sm:$0xff]
      %v4767 = vld [vmem:[%s165 + $0x28] sm:$0xff]
      %v4768 = vld [vmem:[%s165 + $0x30] sm:$0xff]
      %v4769 = vld [vmem:[%s165 + $0x38] sm:$0xff]
      %v4770 = vld [vmem:[%s165 + $0x40] sm:$0xff]
      %v4771 = vld [vmem:[%s165 + $0x48] sm:$0xff]
      %v4772 = vld [vmem:[%s165 + $0x50] sm:$0xff]
      %v4773 = vld [vmem:[%s165 + $0x58] sm:$0xff]
      %v4774 = vld [vmem:[%s165 + $0x60] sm:$0xff]
      %v4775 = vld [vmem:[%s165 + $0x68] sm:$0xff]
      %v4776 = vld [vmem:[%s165 + $0x70] sm:$0xff]
      %v4777 = vld [vmem:[%s165 + $0x78] sm:$0xff]
      %v4778 = vld [vmem:[%s165 + $0x80] sm:$0xff]
      %v4779 = vld [vmem:[%s165 + $0x88] sm:$0xff]
      %v4780 = vld [vmem:[%s165 + $0x90] sm:$0xff]
      %v4781 = vld [vmem:[%s165 + $0x98] sm:$0xff]
      %v4782 = vld [vmem:[%s165 + $0xa0] sm:$0xff]
      %v4783 = vld [vmem:[%s165 + $0xa8] sm:$0xff]
      %v4784 = vld [vmem:[%s165 + $0xb0] sm:$0xff]
      %v4785 = vld [vmem:[%s165 + $0xb8] sm:$0xff]
      %v4786 = vld [vmem:[%s165 + $0xc0] sm:$0xff]
      %v4787 = vld [vmem:[%s165 + $0xc8] sm:$0xff]
      %v4788 = vld [vmem:[%s165 + $0xd0] sm:$0xff]
      %v4789 = vld [vmem:[%s165 + $0xd8] sm:$0xff]
      %v4790 = vld [vmem:[%s165 + $0xe0] sm:$0xff]
      %v4791 = vld [vmem:[%s165 + $0xe8] sm:$0xff]
      %v4792 = vld [vmem:[%s165 + $0xf0] sm:$0xff]
      %v4793 = vld [vmem:[%s165 + $0xf8] sm:$0xff]
      %v4794 = vadd.f32 %v4730, %v4762
      %v4795 = vadd.f32 %v4731, %v4763
      %v4796 = vadd.f32 %v4732, %v4764
      %v4797 = vadd.f32 %v4733, %v4765
      %v4798 = vadd.f32 %v4734, %v4766
      %v4799 = vadd.f32 %v4735, %v4767
      %v4800 = vadd.f32 %v4736, %v4768
      %v4801 = vadd.f32 %v4737, %v4769
      %v4802 = vadd.f32 %v4738, %v4770
      %v4803 = vadd.f32 %v4739, %v4771
      %v4804 = vadd.f32 %v4740, %v4772
      %v4805 = vadd.f32 %v4741, %v4773
      %v4806 = vadd.f32 %v4742, %v4774
      %v4807 = vadd.f32 %v4743, %v4775
      %v4808 = vadd.f32 %v4744, %v4776
      %v4809 = vadd.f32 %v4745, %v4777
      %v4810 = vadd.f32 %v4746, %v4778
      %v4811 = vadd.f32 %v4747, %v4779
      %v4812 = vadd.f32 %v4748, %v4780
      %v4813 = vadd.f32 %v4749, %v4781
      %v4814 = vadd.f32 %v4750, %v4782
      %v4815 = vadd.f32 %v4751, %v4783
      %v4816 = vadd.f32 %v4752, %v4784
      %v4817 = vadd.f32 %v4753, %v4785
      %v4818 = vadd.f32 %v4754, %v4786
      %v4819 = vadd.f32 %v4755, %v4787
      %v4820 = vadd.f32 %v4756, %v4788
      %v4821 = vadd.f32 %v4757, %v4789
      %v4822 = vadd.f32 %v4758, %v4790
      %v4823 = vadd.f32 %v4759, %v4791
      %v4824 = vadd.f32 %v4760, %v4792
      %v4825 = vadd.f32 %v4761, %v4793
      %4826 = vst.msk [vmem:[%s170] sm:$0xff] %vm171, %v4794
      %4827 = vst.msk [vmem:[%s170 + $0x8] sm:$0xff] %vm171, %v4795
      %4828 = vst.msk [vmem:[%s170 + $0x10] sm:$0xff] %vm171, %v4796
      %4829 = vst.msk [vmem:[%s170 + $0x18] sm:$0xff] %vm171, %v4797
      %4830 = vst.msk [vmem:[%s170 + $0x20] sm:$0xff] %vm171, %v4798
      %4831 = vst.msk [vmem:[%s170 + $0x28] sm:$0xff] %vm171, %v4799
      %4832 = vst.msk [vmem:[%s170 + $0x30] sm:$0xff] %vm171, %v4800
      %4833 = vst.msk [vmem:[%s170 + $0x38] sm:$0xff] %vm171, %v4801
      %4834 = vst.msk [vmem:[%s170 + $0x40] sm:$0xff] %vm171, %v4802
      %4835 = vst.msk [vmem:[%s170 + $0x48] sm:$0xff] %vm171, %v4803
      %4836 = vst.msk [vmem:[%s170 + $0x50] sm:$0xff] %vm171, %v4804
      %4837 = vst.msk [vmem:[%s170 + $0x58] sm:$0xff] %vm171, %v4805
      %4838 = vst.msk [vmem:[%s170 + $0x60] sm:$0xff] %vm171, %v4806
      %4839 = vst.msk [vmem:[%s170 + $0x68] sm:$0xff] %vm171, %v4807
      %4840 = vst.msk [vmem:[%s170 + $0x70] sm:$0xff] %vm171, %v4808
      %4841 = vst.msk [vmem:[%s170 + $0x78] sm:$0xff] %vm171, %v4809
      %4842 = vst.msk [vmem:[%s170 + $0x80] sm:$0xff] %vm171, %v4810
      %4843 = vst.msk [vmem:[%s170 + $0x88] sm:$0xff] %vm171, %v4811
      %4844 = vst.msk [vmem:[%s170 + $0x90] sm:$0xff] %vm171, %v4812
      %4845 = vst.msk [vmem:[%s170 + $0x98] sm:$0xff] %vm171, %v4813
      %4846 = vst.msk [vmem:[%s170 + $0xa0] sm:$0xff] %vm171, %v4814
      %4847 = vst.msk [vmem:[%s170 + $0xa8] sm:$0xff] %vm171, %v4815
      %4848 = vst.msk [vmem:[%s170 + $0xb0] sm:$0xff] %vm171, %v4816
      %4849 = vst.msk [vmem:[%s170 + $0xb8] sm:$0xff] %vm171, %v4817
      %4850 = vst.msk [vmem:[%s170 + $0xc0] sm:$0xff] %vm171, %v4818
      %4851 = vst.msk [vmem:[%s170 + $0xc8] sm:$0xff] %vm171, %v4819
      %4852 = vst.msk [vmem:[%s170 + $0xd0] sm:$0xff] %vm171, %v4820
      %4853 = vst.msk [vmem:[%s170 + $0xd8] sm:$0xff] %vm171, %v4821
      %4854 = vst.msk [vmem:[%s170 + $0xe0] sm:$0xff] %vm171, %v4822
      %4855 = vst.msk [vmem:[%s170 + $0xe8] sm:$0xff] %vm171, %v4823
      %4856 = vst.msk [vmem:[%s170 + $0xf0] sm:$0xff] %vm171, %v4824
      %4857 = vst.msk [vmem:[%s170 + $0xf8] sm:$0xff] %vm171, %v4825
      %p4858 = scmp.lt.s32.totalorder %s14, 1
      %s4859 = scalar_select %p4858, %s14, 1
      %s4860 = smul.addr %s4859, 32
      %s4861 = smul.addr %s4860, 8
      %s4862 = scalar_lea.vmem %s3, %s4861
      // Predicated region
      $region33: #{tpu_custom_call.1} parent=31 // pred_check
        %p4863 = pneg %p100
      $region34: #{tpu_custom_call.1} parent=31 // pred_check_branch
        %4865 = sbr.rel (%p4863) target = $region36
      $region35: #{tpu_custom_call.1} parent=31 // pred_region
        _
      $region36: #{tpu_custom_call.1} parent=31 // pred_fallthru
        _
    $region32: #{tpu_custom_call.1} parent=5 // pred_fallthru
      _
    %p4866 = scmp.le.s32.totalorder 2, %s9
    // Predicated region
    $region37: #{tpu_custom_call.1} parent=5 // pred_check
      %p4867 = pneg %p4866
    $region38: #{tpu_custom_call.1} parent=5 // pred_check_branch
      %4869 = sbr.rel (%p4867) target = $region40
    $region39: #{tpu_custom_call.1} parent=5 // pred_region
      %s4870 = ssub.s32 %s9, 2
      // Predicated region
      $region41: #{tpu_custom_call.1} parent=39 // pred_check
        %p4871 = pneg %p106
      $region42: #{tpu_custom_call.1} parent=39 // pred_check_branch
        %4873 = sbr.rel (%p4871) target = $region44
      $region43: #{tpu_custom_call.1} parent=39 // pred_region
        %p4874 = scmp.lt.s32.totalorder %s15, 1
        %s4875 = scalar_select %p4874, %s15, 1
        %s4876 = smul.addr %s4875, 32
        %s4877 = smul.addr %s4876, 8
        %s4878 = scalar_lea.vmem %s3, %s4877
      $region44: #{tpu_custom_call.1} parent=39 // pred_fallthru
        _
    $region40: #{tpu_custom_call.1} parent=5 // pred_fallthru
      _
  $region6: #{tpu_custom_call.1} parent=0 // loop_footer
    %s13 = sadd.s32 1, %s9
  $region7: #{tpu_custom_call.1} parent=0 // loop_footer_branch
    %8 = sbr.rel target = $region3
  $region8: #{tpu_custom_call.1} parent=0 // loop_exit
    _

</llo_original>
